<compile_context>
chip_gen: v7x
topology: tpu7x:2x2x1
jax: 0.10.0
libtpu: 0.0.40
codegen_flags: <defaults>
</compile_context>

<pallas_src>
import functools

import jax
import jax.numpy as jnp
from jax.experimental import pallas as pl
from jax.experimental.pallas import tpu as pltpu


# --------------------------------------------------------------------------
# Fused kernel: all GRU layers (wavefront) + final FC in one invocation.
# PyTorch GRU cell semantics (input biases pre-folded into gx by the wrapper):
#   r = sigmoid(gx_r + Whr h)
#   z = sigmoid(gx_z + Whz h)
#   n = tanh(gx_n + r * (Whn h + b_hn))
#   h' = (1 - z) * n + z * h
# Ref layout:
#   refs = [x_tm,                                   (S*Bp, I)   time-major rows
#           (wih_l, whh_l, bih_fold_l, bhn_l) * L,  (in,3GP),(H,3GP),(1,3GP),(1,GP)
#           fc_w, fc_b,                             (H, C), (1, C)
#           out]                                    (Bp, C)
# --------------------------------------------------------------------------
def fused_gru_fc_kernel(*refs, seq_len, batch_pad, hidden, gate_pad, num_layers):
    S, Bp, H, GP, L = seq_len, batch_pad, hidden, gate_pad, num_layers
    f32 = jnp.float32

    x_ref = refs[0]
    layer_refs = [refs[1 + 4 * l: 1 + 4 * (l + 1)] for l in range(L)]
    fcw_ref = refs[1 + 4 * L]
    fcb_ref = refs[2 + 4 * L]
    out_ref = refs[3 + 4 * L]

    # Hoist every weight/bias load out of the recurrence (loaded once per layer).
    wih = [layer_refs[l][0][...] for l in range(L)]           # (in_l, 3*GP)
    whh = [layer_refs[l][1][...] for l in range(L)]           # (H, 3*GP)
    bih = [layer_refs[l][2][...] for l in range(L)]           # (1, 3*GP) folded
    # Per-step biases pre-broadcast ONCE (JAX does not CSE broadcast_in_dim).
    bih_b = [None] + [jnp.broadcast_to(bih[l], (Bp, 3 * GP)) for l in range(1, L)]
    bhn_b = [jnp.broadcast_to(layer_refs[l][3][...], (Bp, GP)) for l in range(L)]

    # Layer-0 input projections for ALL timesteps as one MXU matmul
    # (recurrence-independent, so off the critical path).      (S*Bp, 3*GP)
    gx0 = jnp.dot(x_ref[...], wih[0], preferred_element_type=f32) + bih[0]

    def gru_cell(gx_t, h_prev, whh_l, bhn_bl):
        gh = jnp.dot(h_prev, whh_l, preferred_element_type=f32)     # (Bp, 3*GP)
        # Gate slices are 128-lane aligned -> whole-vreg selects, no rotation.
        r = jax.nn.sigmoid(gx_t[:, 0:GP] + gh[:, 0:GP])
        z = jax.nn.sigmoid(gx_t[:, GP:2 * GP] + gh[:, GP:2 * GP])
        n = jnp.tanh(gx_t[:, 2 * GP:3 * GP] + r * (gh[:, 2 * GP:3 * GP] + bhn_bl))
        # Only the first H lanes are live; offset-0 truncation needs no rotation.
        return (1.0 - z[:, :H]) * n[:, :H] + z[:, :H] * h_prev

    # ---- Software wavefront over (layer, time) ------------------------------
    # Walk S+L-1 anti-diagonals; cells within one diagonal are independent, so
    # the (up to L) recurrent matmuls per step can overlap in the MXU pipeline.
    h = [jnp.zeros((Bp, H), f32) for _ in range(L)]   # per-layer hidden, in vregs
    staged = [None] * L                               # staged[l]: input to layer l
    for w in range(S + L - 1):                        # static unroll (S, L small)
        h_prev = list(h)
        for l in range(L):
            t = w - l
            if 0 <= t < S:
                if l == 0:
                    gx_t = gx0[t * Bp:(t + 1) * Bp, :]
                else:
                    # Per-timestep input projection for deeper layers (wavefront
                    # keeps it off the same-step dependency chain).
                    gx_t = jnp.dot(staged[l], wih[l],
                                   preferred_element_type=f32) + bih_b[l]
                h[l] = gru_cell(gx_t, h_prev[l], whh[l], bhn_b[l])
        for l in range(1, L):                         # hand outputs down one layer
            if 0 <= w - (l - 1) < S:
                staged[l] = h[l - 1]

    # Final Linear on the last layer's last-timestep hidden state.
    out_ref[...] = (jnp.dot(h[L - 1], fcw_ref[...], preferred_element_type=f32)
                    + fcb_ref[...])


# --------------------------------------------------------------------------
# Wrapper: packs weights (transposed, gate-fused, 128-lane-aligned gates,
# input biases folded), pads batch to a sublane group, calls the kernel.
# --------------------------------------------------------------------------
def _pack_gate_cols(w_t, H, GP):
    """(in, 3H) with columns [r|z|n] -> (in, 3*GP), each gate 128-lane aligned."""
    out = jnp.zeros((w_t.shape[0], 3 * GP), w_t.dtype)
    for g in range(3):
        out = out.at[:, g * GP: g * GP + H].set(w_t[:, g * H:(g + 1) * H])
    return out


@functools.partial(jax.jit, static_argnames=("hidden_size", "num_layers"))
def gru_model_forward(x, params, hidden_size, num_layers):
    B, S, I = x.shape
    H = hidden_size
    C = params["fc_w"].shape[0]
    GP = max(128, -(-H // 128) * 128)     # per-gate lane width (128-aligned)
    Bp = max(8, -(-B // 8) * 8)           # batch padded to one sublane group

    # batch_first (B,S,I) -> time-major (S,Bp,I), zero-padded batch rows,
    # flattened to (S*Bp, I) so each timestep is a full 8-sublane row block.
    x_tm = jnp.transpose(x, (1, 0, 2))
    x_tm = jnp.pad(x_tm, ((0, 0), (0, Bp - B), (0, 0)))
    x_tm = x_tm.reshape(S * Bp, I)

    inputs = [x_tm]
    for l in range(num_layers):
        w_ih, w_hh, b_ih, b_hh = params[f"l{l}"]
        # Fold (b_ir+b_hr), (b_iz+b_hz), b_in into the gx-side bias; b_hn stays
        # separate because it sits inside r * (Whn h + b_hn).
        bias_fold = b_ih + jnp.concatenate(
            [b_hh[:2 * H], jnp.zeros((H,), b_hh.dtype)])
        inputs += [
            _pack_gate_cols(w_ih.T, H, GP),                           # (in_l, 3GP)
            _pack_gate_cols(w_hh.T, H, GP),                           # (H, 3GP)
            _pack_gate_cols(bias_fold.reshape(1, 3 * H), H, GP),      # (1, 3GP)
            jnp.zeros((1, GP), jnp.float32).at[0, :H].set(b_hh[2 * H:]),  # (1, GP)
        ]
    inputs += [params["fc_w"].T, params["fc_b"].reshape(1, C)]

    kernel = functools.partial(
        fused_gru_fc_kernel, seq_len=S, batch_pad=Bp, hidden=H,
        gate_pad=GP, num_layers=num_layers)

    vmem = pl.BlockSpec(memory_space=pltpu.MemorySpace.VMEM)
    out = pl.pallas_call(
        kernel,
        out_shape=jax.ShapeDtypeStruct((Bp, C), jnp.float32),
        in_specs=[vmem] * len(inputs),
        out_specs=vmem,
    )(*inputs)
    return out[:B]                         # drop padded batch rows


# --------------------------------------------------------------------------
# Pure-JAX reference for validation (PyTorch GRU semantics)
# --------------------------------------------------------------------------
def gru_model_ref(x, params, hidden_size, num_layers):
    B, S, _ = x.shape
    H = hidden_size
    inp = x
    for l in range(num_layers):
        w_ih, w_hh, b_ih, b_hh = params[f"l{l}"]
        h = jnp.zeros((B, H), jnp.float32)
        outs = []
        for t in range(S):
            xt = inp[:, t, :]
            gi = xt @ w_ih.T + b_ih
            gh = h @ w_hh.T + b_hh
            i_r, i_z, i_n = gi[:, :H], gi[:, H:2 * H], gi[:, 2 * H:]
            h_r, h_z, h_n = gh[:, :H], gh[:, H:2 * H], gh[:, 2 * H:]
            r = jax.nn.sigmoid(i_r + h_r)
            z = jax.nn.sigmoid(i_z + h_z)
            n = jnp.tanh(i_n + r * h_n)
            h = (1.0 - z) * n + z * h
            outs.append(h)
        inp = jnp.stack(outs, axis=1)
    return inp[:, -1, :] @ params["fc_w"].T + params["fc_b"]


def init_params(key, input_size, hidden_size, num_layers, num_classes):
    """Deterministic init mimicking PyTorch's uniform(-1/sqrt(H), 1/sqrt(H))."""
    params = {}
    k = 1.0 / jnp.sqrt(jnp.float32(hidden_size))
    for l in range(num_layers):
        in_feat = input_size if l == 0 else hidden_size
        key, k1, k2, k3, k4 = jax.random.split(key, 5)
        params[f"l{l}"] = (
            jax.random.uniform(k1, (3 * hidden_size, in_feat), jnp.float32, -k, k),
            jax.random.uniform(k2, (3 * hidden_size, hidden_size), jnp.float32, -k, k),
            jax.random.uniform(k3, (3 * hidden_size,), jnp.float32, -k, k),
            jax.random.uniform(k4, (3 * hidden_size,), jnp.float32, -k, k),
        )
    key, k5, k6 = jax.random.split(key, 3)
    kf = 1.0 / jnp.sqrt(jnp.float32(hidden_size))
    params["fc_w"] = jax.random.uniform(k5, (num_classes, hidden_size), jnp.float32, -kf, kf)
    params["fc_b"] = jax.random.uniform(k6, (num_classes,), jnp.float32, -kf, kf)
    return params


if __name__ == "__main__":
    input_size = 16
    hidden_size = 32
    num_layers = 2
    num_classes = 10
    batch = 2
    seq = 8

    key = jax.random.PRNGKey(0)
    key, pkey, xkey = jax.random.split(key, 3)
    params = init_params(pkey, input_size, hidden_size, num_layers, num_classes)
    x = jax.random.normal(xkey, (batch, seq, input_size), jnp.float32)

    out = gru_model_forward(x, params, hidden_size, num_layers)
    out = jax.block_until_ready(out)

    ref = gru_model_ref(x, params, hidden_size, num_layers)
    assert out.shape == (batch, num_classes)
    assert jnp.allclose(out, ref, rtol=1e-4, atol=1e-5), "Pallas GRU mismatch vs reference"

    print("KERNEL_OK")
</pallas_src>

<mosaic_0001>
module attributes {stable_mosaic.version = 11 : i64} {
  func.func @fused_gru_fc_kernel(%arg0: memref<64x16xf32, #tpu.memory_space<vmem>>, %arg1: memref<16x384xf32, #tpu.memory_space<vmem>>, %arg2: memref<32x384xf32, #tpu.memory_space<vmem>>, %arg3: memref<1x384xf32, #tpu.memory_space<vmem>>, %arg4: memref<1x128xf32, #tpu.memory_space<vmem>>, %arg5: memref<32x384xf32, #tpu.memory_space<vmem>>, %arg6: memref<32x384xf32, #tpu.memory_space<vmem>>, %arg7: memref<1x384xf32, #tpu.memory_space<vmem>>, %arg8: memref<1x128xf32, #tpu.memory_space<vmem>>, %arg9: memref<32x10xf32, #tpu.memory_space<vmem>>, %arg10: memref<1x10xf32, #tpu.memory_space<vmem>>, %arg11: memref<8x10xf32, #tpu.memory_space<vmem>>) attributes {dimension_semantics = [], scalar_prefetch = 0 : i64, scratch_operands = 0 : i64, tpu.core_type = #tpu.core_type<tc>} {
    %c0 = arith.constant 0 : index
    %c0_0 = arith.constant 0 : index
    %0 = vector.load %arg1[%c0, %c0_0] : memref<16x384xf32, #tpu.memory_space<vmem>>, vector<16x384xf32>
    %c0_1 = arith.constant 0 : index
    %c0_2 = arith.constant 0 : index
    %1 = vector.load %arg5[%c0_1, %c0_2] : memref<32x384xf32, #tpu.memory_space<vmem>>, vector<32x384xf32>
    %c0_3 = arith.constant 0 : index
    %c0_4 = arith.constant 0 : index
    %2 = vector.load %arg2[%c0_3, %c0_4] : memref<32x384xf32, #tpu.memory_space<vmem>>, vector<32x384xf32>
    %c0_5 = arith.constant 0 : index
    %c0_6 = arith.constant 0 : index
    %3 = vector.load %arg6[%c0_5, %c0_6] : memref<32x384xf32, #tpu.memory_space<vmem>>, vector<32x384xf32>
    %c0_7 = arith.constant 0 : index
    %c0_8 = arith.constant 0 : index
    %4 = vector.load %arg3[%c0_7, %c0_8] : memref<1x384xf32, #tpu.memory_space<vmem>>, vector<1x384xf32>
    %c0_9 = arith.constant 0 : index
    %c0_10 = arith.constant 0 : index
    %5 = vector.load %arg7[%c0_9, %c0_10] : memref<1x384xf32, #tpu.memory_space<vmem>>, vector<1x384xf32>
    %6 = vector.shape_cast %5 : vector<1x384xf32> to vector<1x384xf32>
    %7 = vector.broadcast %6 : vector<1x384xf32> to vector<8x384xf32>
    %c0_11 = arith.constant 0 : index
    %c0_12 = arith.constant 0 : index
    %8 = vector.load %arg4[%c0_11, %c0_12] : memref<1x128xf32, #tpu.memory_space<vmem>>, vector<1x128xf32>
    %9 = vector.shape_cast %8 : vector<1x128xf32> to vector<1x128xf32>
    %10 = vector.broadcast %9 : vector<1x128xf32> to vector<8x128xf32>
    %c0_13 = arith.constant 0 : index
    %c0_14 = arith.constant 0 : index
    %11 = vector.load %arg8[%c0_13, %c0_14] : memref<1x128xf32, #tpu.memory_space<vmem>>, vector<1x128xf32>
    %12 = vector.shape_cast %11 : vector<1x128xf32> to vector<1x128xf32>
    %13 = vector.broadcast %12 : vector<1x128xf32> to vector<8x128xf32>
    %c0_15 = arith.constant 0 : index
    %c0_16 = arith.constant 0 : index
    %14 = vector.load %arg0[%c0_15, %c0_16] : memref<64x16xf32, #tpu.memory_space<vmem>>, vector<64x16xf32>
    %cst = arith.constant dense<0.000000e+00> : vector<64x384xf32>
    %15 = tpu.matmul %14, %0, %cst {dimension_numbers = #tpu.dot_dimension_numbers<[1], [0], [0], [1], [0, 0, 1, 1], [], []>} : vector<64x16xf32>, vector<16x384xf32>, vector<64x384xf32> -> vector<64x384xf32>
    %16 = vector.broadcast %4 : vector<1x384xf32> to vector<64x384xf32>
    %17 = arith.addf %15, %16 : vector<64x384xf32>
    %cst_17 = arith.constant 0.000000e+00 : f32
    %18 = vector.broadcast %cst_17 : f32 to vector<8x32xf32>
    %cst_18 = arith.constant 0.000000e+00 : f32
    %19 = vector.broadcast %cst_18 : f32 to vector<8x32xf32>
    %20 = vector.extract_strided_slice %17 {offsets = [0, 0], sizes = [8, 384], strides = [1, 1]} : vector<64x384xf32> to vector<8x384xf32>
    %cst_19 = arith.constant dense<0.000000e+00> : vector<8x384xf32>
    %21 = tpu.matmul %18, %2, %cst_19 {dimension_numbers = #tpu.dot_dimension_numbers<[1], [0], [0], [1], [0, 0, 1, 1], [], []>} : vector<8x32xf32>, vector<32x384xf32>, vector<8x384xf32> -> vector<8x384xf32>
    %22 = vector.extract_strided_slice %20 {offsets = [0, 0], sizes = [8, 128], strides = [1, 1]} : vector<8x384xf32> to vector<8x128xf32>
    %23 = vector.extract_strided_slice %21 {offsets = [0, 0], sizes = [8, 128], strides = [1, 1]} : vector<8x384xf32> to vector<8x128xf32>
    %24 = arith.addf %22, %23 : vector<8x128xf32>
    %25 = arith.negf %24 : vector<8x128xf32>
    %26 = math.exp %25 : vector<8x128xf32>
    %cst_20 = arith.constant 1.000000e+00 : f32
    %27 = vector.broadcast %cst_20 : f32 to vector<8x128xf32>
    %28 = arith.addf %27, %26 : vector<8x128xf32>
    %29 = arith.divf %27, %28 : vector<8x128xf32>
    %30 = vector.extract_strided_slice %20 {offsets = [0, 128], sizes = [8, 128], strides = [1, 1]} : vector<8x384xf32> to vector<8x128xf32>
    %31 = vector.extract_strided_slice %21 {offsets = [0, 128], sizes = [8, 128], strides = [1, 1]} : vector<8x384xf32> to vector<8x128xf32>
    %32 = arith.addf %30, %31 : vector<8x128xf32>
    %33 = arith.negf %32 : vector<8x128xf32>
    %34 = math.exp %33 : vector<8x128xf32>
    %cst_21 = arith.constant 1.000000e+00 : f32
    %35 = vector.broadcast %cst_21 : f32 to vector<8x128xf32>
    %36 = arith.addf %35, %34 : vector<8x128xf32>
    %37 = arith.divf %35, %36 : vector<8x128xf32>
    %38 = vector.extract_strided_slice %20 {offsets = [0, 256], sizes = [8, 128], strides = [1, 1]} : vector<8x384xf32> to vector<8x128xf32>
    %39 = vector.extract_strided_slice %21 {offsets = [0, 256], sizes = [8, 128], strides = [1, 1]} : vector<8x384xf32> to vector<8x128xf32>
    %40 = arith.addf %39, %10 : vector<8x128xf32>
    %41 = arith.mulf %29, %40 : vector<8x128xf32>
    %42 = arith.addf %38, %41 : vector<8x128xf32>
    %43 = math.tanh %42 : vector<8x128xf32>
    %44 = vector.extract_strided_slice %37 {offsets = [0, 0], sizes = [8, 32], strides = [1, 1]} : vector<8x128xf32> to vector<8x32xf32>
    %cst_22 = arith.constant 1.000000e+00 : f32
    %45 = vector.broadcast %cst_22 : f32 to vector<8x32xf32>
    %46 = arith.subf %45, %44 : vector<8x32xf32>
    %47 = vector.extract_strided_slice %43 {offsets = [0, 0], sizes = [8, 32], strides = [1, 1]} : vector<8x128xf32> to vector<8x32xf32>
    %48 = arith.mulf %46, %47 : vector<8x32xf32>
    %49 = vector.extract_strided_slice %37 {offsets = [0, 0], sizes = [8, 32], strides = [1, 1]} : vector<8x128xf32> to vector<8x32xf32>
    %50 = arith.mulf %49, %18 : vector<8x32xf32>
    %51 = arith.addf %48, %50 : vector<8x32xf32>
    %52 = vector.extract_strided_slice %17 {offsets = [8, 0], sizes = [8, 384], strides = [1, 1]} : vector<64x384xf32> to vector<8x384xf32>
    %cst_23 = arith.constant dense<0.000000e+00> : vector<8x384xf32>
    %53 = tpu.matmul %51, %2, %cst_23 {dimension_numbers = #tpu.dot_dimension_numbers<[1], [0], [0], [1], [0, 0, 1, 1], [], []>} : vector<8x32xf32>, vector<32x384xf32>, vector<8x384xf32> -> vector<8x384xf32>
    %54 = vector.extract_strided_slice %52 {offsets = [0, 0], sizes = [8, 128], strides = [1, 1]} : vector<8x384xf32> to vector<8x128xf32>
    %55 = vector.extract_strided_slice %53 {offsets = [0, 0], sizes = [8, 128], strides = [1, 1]} : vector<8x384xf32> to vector<8x128xf32>
    %56 = arith.addf %54, %55 : vector<8x128xf32>
    %57 = arith.negf %56 : vector<8x128xf32>
    %58 = math.exp %57 : vector<8x128xf32>
    %cst_24 = arith.constant 1.000000e+00 : f32
    %59 = vector.broadcast %cst_24 : f32 to vector<8x128xf32>
    %60 = arith.addf %59, %58 : vector<8x128xf32>
    %61 = arith.divf %59, %60 : vector<8x128xf32>
    %62 = vector.extract_strided_slice %52 {offsets = [0, 128], sizes = [8, 128], strides = [1, 1]} : vector<8x384xf32> to vector<8x128xf32>
    %63 = vector.extract_strided_slice %53 {offsets = [0, 128], sizes = [8, 128], strides = [1, 1]} : vector<8x384xf32> to vector<8x128xf32>
    %64 = arith.addf %62, %63 : vector<8x128xf32>
    %65 = arith.negf %64 : vector<8x128xf32>
    %66 = math.exp %65 : vector<8x128xf32>
    %cst_25 = arith.constant 1.000000e+00 : f32
    %67 = vector.broadcast %cst_25 : f32 to vector<8x128xf32>
    %68 = arith.addf %67, %66 : vector<8x128xf32>
    %69 = arith.divf %67, %68 : vector<8x128xf32>
    %70 = vector.extract_strided_slice %52 {offsets = [0, 256], sizes = [8, 128], strides = [1, 1]} : vector<8x384xf32> to vector<8x128xf32>
    %71 = vector.extract_strided_slice %53 {offsets = [0, 256], sizes = [8, 128], strides = [1, 1]} : vector<8x384xf32> to vector<8x128xf32>
    %72 = arith.addf %71, %10 : vector<8x128xf32>
    %73 = arith.mulf %61, %72 : vector<8x128xf32>
    %74 = arith.addf %70, %73 : vector<8x128xf32>
    %75 = math.tanh %74 : vector<8x128xf32>
    %76 = vector.extract_strided_slice %69 {offsets = [0, 0], sizes = [8, 32], strides = [1, 1]} : vector<8x128xf32> to vector<8x32xf32>
    %cst_26 = arith.constant 1.000000e+00 : f32
    %77 = vector.broadcast %cst_26 : f32 to vector<8x32xf32>
    %78 = arith.subf %77, %76 : vector<8x32xf32>
    %79 = vector.extract_strided_slice %75 {offsets = [0, 0], sizes = [8, 32], strides = [1, 1]} : vector<8x128xf32> to vector<8x32xf32>
    %80 = arith.mulf %78, %79 : vector<8x32xf32>
    %81 = vector.extract_strided_slice %69 {offsets = [0, 0], sizes = [8, 32], strides = [1, 1]} : vector<8x128xf32> to vector<8x32xf32>
    %82 = arith.mulf %81, %51 : vector<8x32xf32>
    %83 = arith.addf %80, %82 : vector<8x32xf32>
    %cst_27 = arith.constant dense<0.000000e+00> : vector<8x384xf32>
    %84 = tpu.matmul %51, %1, %cst_27 {dimension_numbers = #tpu.dot_dimension_numbers<[1], [0], [0], [1], [0, 0, 1, 1], [], []>} : vector<8x32xf32>, vector<32x384xf32>, vector<8x384xf32> -> vector<8x384xf32>
    %85 = arith.addf %84, %7 : vector<8x384xf32>
    %cst_28 = arith.constant dense<0.000000e+00> : vector<8x384xf32>
    %86 = tpu.matmul %19, %3, %cst_28 {dimension_numbers = #tpu.dot_dimension_numbers<[1], [0], [0], [1], [0, 0, 1, 1], [], []>} : vector<8x32xf32>, vector<32x384xf32>, vector<8x384xf32> -> vector<8x384xf32>
    %87 = vector.extract_strided_slice %85 {offsets = [0, 0], sizes = [8, 128], strides = [1, 1]} : vector<8x384xf32> to vector<8x128xf32>
    %88 = vector.extract_strided_slice %86 {offsets = [0, 0], sizes = [8, 128], strides = [1, 1]} : vector<8x384xf32> to vector<8x128xf32>
    %89 = arith.addf %87, %88 : vector<8x128xf32>
    %90 = arith.negf %89 : vector<8x128xf32>
    %91 = math.exp %90 : vector<8x128xf32>
    %cst_29 = arith.constant 1.000000e+00 : f32
    %92 = vector.broadcast %cst_29 : f32 to vector<8x128xf32>
    %93 = arith.addf %92, %91 : vector<8x128xf32>
    %94 = arith.divf %92, %93 : vector<8x128xf32>
    %95 = vector.extract_strided_slice %85 {offsets = [0, 128], sizes = [8, 128], strides = [1, 1]} : vector<8x384xf32> to vector<8x128xf32>
    %96 = vector.extract_strided_slice %86 {offsets = [0, 128], sizes = [8, 128], strides = [1, 1]} : vector<8x384xf32> to vector<8x128xf32>
    %97 = arith.addf %95, %96 : vector<8x128xf32>
    %98 = arith.negf %97 : vector<8x128xf32>
    %99 = math.exp %98 : vector<8x128xf32>
    %cst_30 = arith.constant 1.000000e+00 : f32
    %100 = vector.broadcast %cst_30 : f32 to vector<8x128xf32>
    %101 = arith.addf %100, %99 : vector<8x128xf32>
    %102 = arith.divf %100, %101 : vector<8x128xf32>
    %103 = vector.extract_strided_slice %85 {offsets = [0, 256], sizes = [8, 128], strides = [1, 1]} : vector<8x384xf32> to vector<8x128xf32>
    %104 = vector.extract_strided_slice %86 {offsets = [0, 256], sizes = [8, 128], strides = [1, 1]} : vector<8x384xf32> to vector<8x128xf32>
    %105 = arith.addf %104, %13 : vector<8x128xf32>
    %106 = arith.mulf %94, %105 : vector<8x128xf32>
    %107 = arith.addf %103, %106 : vector<8x128xf32>
    %108 = math.tanh %107 : vector<8x128xf32>
    %109 = vector.extract_strided_slice %102 {offsets = [0, 0], sizes = [8, 32], strides = [1, 1]} : vector<8x128xf32> to vector<8x32xf32>
    %cst_31 = arith.constant 1.000000e+00 : f32
    %110 = vector.broadcast %cst_31 : f32 to vector<8x32xf32>
    %111 = arith.subf %110, %109 : vector<8x32xf32>
    %112 = vector.extract_strided_slice %108 {offsets = [0, 0], sizes = [8, 32], strides = [1, 1]} : vector<8x128xf32> to vector<8x32xf32>
    %113 = arith.mulf %111, %112 : vector<8x32xf32>
    %114 = vector.extract_strided_slice %102 {offsets = [0, 0], sizes = [8, 32], strides = [1, 1]} : vector<8x128xf32> to vector<8x32xf32>
    %115 = arith.mulf %114, %19 : vector<8x32xf32>
    %116 = arith.addf %113, %115 : vector<8x32xf32>
    %117 = vector.extract_strided_slice %17 {offsets = [16, 0], sizes = [8, 384], strides = [1, 1]} : vector<64x384xf32> to vector<8x384xf32>
    %cst_32 = arith.constant dense<0.000000e+00> : vector<8x384xf32>
    %118 = tpu.matmul %83, %2, %cst_32 {dimension_numbers = #tpu.dot_dimension_numbers<[1], [0], [0], [1], [0, 0, 1, 1], [], []>} : vector<8x32xf32>, vector<32x384xf32>, vector<8x384xf32> -> vector<8x384xf32>
    %119 = vector.extract_strided_slice %117 {offsets = [0, 0], sizes = [8, 128], strides = [1, 1]} : vector<8x384xf32> to vector<8x128xf32>
    %120 = vector.extract_strided_slice %118 {offsets = [0, 0], sizes = [8, 128], strides = [1, 1]} : vector<8x384xf32> to vector<8x128xf32>
    %121 = arith.addf %119, %120 : vector<8x128xf32>
    %122 = arith.negf %121 : vector<8x128xf32>
    %123 = math.exp %122 : vector<8x128xf32>
    %cst_33 = arith.constant 1.000000e+00 : f32
    %124 = vector.broadcast %cst_33 : f32 to vector<8x128xf32>
    %125 = arith.addf %124, %123 : vector<8x128xf32>
    %126 = arith.divf %124, %125 : vector<8x128xf32>
    %127 = vector.extract_strided_slice %117 {offsets = [0, 128], sizes = [8, 128], strides = [1, 1]} : vector<8x384xf32> to vector<8x128xf32>
    %128 = vector.extract_strided_slice %118 {offsets = [0, 128], sizes = [8, 128], strides = [1, 1]} : vector<8x384xf32> to vector<8x128xf32>
    %129 = arith.addf %127, %128 : vector<8x128xf32>
    %130 = arith.negf %129 : vector<8x128xf32>
    %131 = math.exp %130 : vector<8x128xf32>
    %cst_34 = arith.constant 1.000000e+00 : f32
    %132 = vector.broadcast %cst_34 : f32 to vector<8x128xf32>
    %133 = arith.addf %132, %131 : vector<8x128xf32>
    %134 = arith.divf %132, %133 : vector<8x128xf32>
    %135 = vector.extract_strided_slice %117 {offsets = [0, 256], sizes = [8, 128], strides = [1, 1]} : vector<8x384xf32> to vector<8x128xf32>
    %136 = vector.extract_strided_slice %118 {offsets = [0, 256], sizes = [8, 128], strides = [1, 1]} : vector<8x384xf32> to vector<8x128xf32>
    %137 = arith.addf %136, %10 : vector<8x128xf32>
    %138 = arith.mulf %126, %137 : vector<8x128xf32>
    %139 = arith.addf %135, %138 : vector<8x128xf32>
    %140 = math.tanh %139 : vector<8x128xf32>
    %141 = vector.extract_strided_slice %134 {offsets = [0, 0], sizes = [8, 32], strides = [1, 1]} : vector<8x128xf32> to vector<8x32xf32>
    %cst_35 = arith.constant 1.000000e+00 : f32
    %142 = vector.broadcast %cst_35 : f32 to vector<8x32xf32>
    %143 = arith.subf %142, %141 : vector<8x32xf32>
    %144 = vector.extract_strided_slice %140 {offsets = [0, 0], sizes = [8, 32], strides = [1, 1]} : vector<8x128xf32> to vector<8x32xf32>
    %145 = arith.mulf %143, %144 : vector<8x32xf32>
    %146 = vector.extract_strided_slice %134 {offsets = [0, 0], sizes = [8, 32], strides = [1, 1]} : vector<8x128xf32> to vector<8x32xf32>
    %147 = arith.mulf %146, %83 : vector<8x32xf32>
    %148 = arith.addf %145, %147 : vector<8x32xf32>
    %cst_36 = arith.constant dense<0.000000e+00> : vector<8x384xf32>
    %149 = tpu.matmul %83, %1, %cst_36 {dimension_numbers = #tpu.dot_dimension_numbers<[1], [0], [0], [1], [0, 0, 1, 1], [], []>} : vector<8x32xf32>, vector<32x384xf32>, vector<8x384xf32> -> vector<8x384xf32>
    %150 = arith.addf %149, %7 : vector<8x384xf32>
    %cst_37 = arith.constant dense<0.000000e+00> : vector<8x384xf32>
    %151 = tpu.matmul %116, %3, %cst_37 {dimension_numbers = #tpu.dot_dimension_numbers<[1], [0], [0], [1], [0, 0, 1, 1], [], []>} : vector<8x32xf32>, vector<32x384xf32>, vector<8x384xf32> -> vector<8x384xf32>
    %152 = vector.extract_strided_slice %150 {offsets = [0, 0], sizes = [8, 128], strides = [1, 1]} : vector<8x384xf32> to vector<8x128xf32>
    %153 = vector.extract_strided_slice %151 {offsets = [0, 0], sizes = [8, 128], strides = [1, 1]} : vector<8x384xf32> to vector<8x128xf32>
    %154 = arith.addf %152, %153 : vector<8x128xf32>
    %155 = arith.negf %154 : vector<8x128xf32>
    %156 = math.exp %155 : vector<8x128xf32>
    %cst_38 = arith.constant 1.000000e+00 : f32
    %157 = vector.broadcast %cst_38 : f32 to vector<8x128xf32>
    %158 = arith.addf %157, %156 : vector<8x128xf32>
    %159 = arith.divf %157, %158 : vector<8x128xf32>
    %160 = vector.extract_strided_slice %150 {offsets = [0, 128], sizes = [8, 128], strides = [1, 1]} : vector<8x384xf32> to vector<8x128xf32>
    %161 = vector.extract_strided_slice %151 {offsets = [0, 128], sizes = [8, 128], strides = [1, 1]} : vector<8x384xf32> to vector<8x128xf32>
    %162 = arith.addf %160, %161 : vector<8x128xf32>
    %163 = arith.negf %162 : vector<8x128xf32>
    %164 = math.exp %163 : vector<8x128xf32>
    %cst_39 = arith.constant 1.000000e+00 : f32
    %165 = vector.broadcast %cst_39 : f32 to vector<8x128xf32>
    %166 = arith.addf %165, %164 : vector<8x128xf32>
    %167 = arith.divf %165, %166 : vector<8x128xf32>
    %168 = vector.extract_strided_slice %150 {offsets = [0, 256], sizes = [8, 128], strides = [1, 1]} : vector<8x384xf32> to vector<8x128xf32>
    %169 = vector.extract_strided_slice %151 {offsets = [0, 256], sizes = [8, 128], strides = [1, 1]} : vector<8x384xf32> to vector<8x128xf32>
    %170 = arith.addf %169, %13 : vector<8x128xf32>
    %171 = arith.mulf %159, %170 : vector<8x128xf32>
    %172 = arith.addf %168, %171 : vector<8x128xf32>
    %173 = math.tanh %172 : vector<8x128xf32>
    %174 = vector.extract_strided_slice %167 {offsets = [0, 0], sizes = [8, 32], strides = [1, 1]} : vector<8x128xf32> to vector<8x32xf32>
    %cst_40 = arith.constant 1.000000e+00 : f32
    %175 = vector.broadcast %cst_40 : f32 to vector<8x32xf32>
    %176 = arith.subf %175, %174 : vector<8x32xf32>
    %177 = vector.extract_strided_slice %173 {offsets = [0, 0], sizes = [8, 32], strides = [1, 1]} : vector<8x128xf32> to vector<8x32xf32>
    %178 = arith.mulf %176, %177 : vector<8x32xf32>
    %179 = vector.extract_strided_slice %167 {offsets = [0, 0], sizes = [8, 32], strides = [1, 1]} : vector<8x128xf32> to vector<8x32xf32>
    %180 = arith.mulf %179, %116 : vector<8x32xf32>
    %181 = arith.addf %178, %180 : vector<8x32xf32>
    %182 = vector.extract_strided_slice %17 {offsets = [24, 0], sizes = [8, 384], strides = [1, 1]} : vector<64x384xf32> to vector<8x384xf32>
    %cst_41 = arith.constant dense<0.000000e+00> : vector<8x384xf32>
    %183 = tpu.matmul %148, %2, %cst_41 {dimension_numbers = #tpu.dot_dimension_numbers<[1], [0], [0], [1], [0, 0, 1, 1], [], []>} : vector<8x32xf32>, vector<32x384xf32>, vector<8x384xf32> -> vector<8x384xf32>
    %184 = vector.extract_strided_slice %182 {offsets = [0, 0], sizes = [8, 128], strides = [1, 1]} : vector<8x384xf32> to vector<8x128xf32>
    %185 = vector.extract_strided_slice %183 {offsets = [0, 0], sizes = [8, 128], strides = [1, 1]} : vector<8x384xf32> to vector<8x128xf32>
    %186 = arith.addf %184, %185 : vector<8x128xf32>
    %187 = arith.negf %186 : vector<8x128xf32>
    %188 = math.exp %187 : vector<8x128xf32>
    %cst_42 = arith.constant 1.000000e+00 : f32
    %189 = vector.broadcast %cst_42 : f32 to vector<8x128xf32>
    %190 = arith.addf %189, %188 : vector<8x128xf32>
    %191 = arith.divf %189, %190 : vector<8x128xf32>
    %192 = vector.extract_strided_slice %182 {offsets = [0, 128], sizes = [8, 128], strides = [1, 1]} : vector<8x384xf32> to vector<8x128xf32>
    %193 = vector.extract_strided_slice %183 {offsets = [0, 128], sizes = [8, 128], strides = [1, 1]} : vector<8x384xf32> to vector<8x128xf32>
    %194 = arith.addf %192, %193 : vector<8x128xf32>
    %195 = arith.negf %194 : vector<8x128xf32>
    %196 = math.exp %195 : vector<8x128xf32>
    %cst_43 = arith.constant 1.000000e+00 : f32
    %197 = vector.broadcast %cst_43 : f32 to vector<8x128xf32>
    %198 = arith.addf %197, %196 : vector<8x128xf32>
    %199 = arith.divf %197, %198 : vector<8x128xf32>
    %200 = vector.extract_strided_slice %182 {offsets = [0, 256], sizes = [8, 128], strides = [1, 1]} : vector<8x384xf32> to vector<8x128xf32>
    %201 = vector.extract_strided_slice %183 {offsets = [0, 256], sizes = [8, 128], strides = [1, 1]} : vector<8x384xf32> to vector<8x128xf32>
    %202 = arith.addf %201, %10 : vector<8x128xf32>
    %203 = arith.mulf %191, %202 : vector<8x128xf32>
    %204 = arith.addf %200, %203 : vector<8x128xf32>
    %205 = math.tanh %204 : vector<8x128xf32>
    %206 = vector.extract_strided_slice %199 {offsets = [0, 0], sizes = [8, 32], strides = [1, 1]} : vector<8x128xf32> to vector<8x32xf32>
    %cst_44 = arith.constant 1.000000e+00 : f32
    %207 = vector.broadcast %cst_44 : f32 to vector<8x32xf32>
    %208 = arith.subf %207, %206 : vector<8x32xf32>
    %209 = vector.extract_strided_slice %205 {offsets = [0, 0], sizes = [8, 32], strides = [1, 1]} : vector<8x128xf32> to vector<8x32xf32>
    %210 = arith.mulf %208, %209 : vector<8x32xf32>
    %211 = vector.extract_strided_slice %199 {offsets = [0, 0], sizes = [8, 32], strides = [1, 1]} : vector<8x128xf32> to vector<8x32xf32>
    %212 = arith.mulf %211, %148 : vector<8x32xf32>
    %213 = arith.addf %210, %212 : vector<8x32xf32>
    %cst_45 = arith.constant dense<0.000000e+00> : vector<8x384xf32>
    %214 = tpu.matmul %148, %1, %cst_45 {dimension_numbers = #tpu.dot_dimension_numbers<[1], [0], [0], [1], [0, 0, 1, 1], [], []>} : vector<8x32xf32>, vector<32x384xf32>, vector<8x384xf32> -> vector<8x384xf32>
    %215 = arith.addf %214, %7 : vector<8x384xf32>
    %cst_46 = arith.constant dense<0.000000e+00> : vector<8x384xf32>
    %216 = tpu.matmul %181, %3, %cst_46 {dimension_numbers = #tpu.dot_dimension_numbers<[1], [0], [0], [1], [0, 0, 1, 1], [], []>} : vector<8x32xf32>, vector<32x384xf32>, vector<8x384xf32> -> vector<8x384xf32>
    %217 = vector.extract_strided_slice %215 {offsets = [0, 0], sizes = [8, 128], strides = [1, 1]} : vector<8x384xf32> to vector<8x128xf32>
    %218 = vector.extract_strided_slice %216 {offsets = [0, 0], sizes = [8, 128], strides = [1, 1]} : vector<8x384xf32> to vector<8x128xf32>
    %219 = arith.addf %217, %218 : vector<8x128xf32>
    %220 = arith.negf %219 : vector<8x128xf32>
    %221 = math.exp %220 : vector<8x128xf32>
    %cst_47 = arith.constant 1.000000e+00 : f32
    %222 = vector.broadcast %cst_47 : f32 to vector<8x128xf32>
    %223 = arith.addf %222, %221 : vector<8x128xf32>
    %224 = arith.divf %222, %223 : vector<8x128xf32>
    %225 = vector.extract_strided_slice %215 {offsets = [0, 128], sizes = [8, 128], strides = [1, 1]} : vector<8x384xf32> to vector<8x128xf32>
    %226 = vector.extract_strided_slice %216 {offsets = [0, 128], sizes = [8, 128], strides = [1, 1]} : vector<8x384xf32> to vector<8x128xf32>
    %227 = arith.addf %225, %226 : vector<8x128xf32>
    %228 = arith.negf %227 : vector<8x128xf32>
    %229 = math.exp %228 : vector<8x128xf32>
    %cst_48 = arith.constant 1.000000e+00 : f32
    %230 = vector.broadcast %cst_48 : f32 to vector<8x128xf32>
    %231 = arith.addf %230, %229 : vector<8x128xf32>
    %232 = arith.divf %230, %231 : vector<8x128xf32>
    %233 = vector.extract_strided_slice %215 {offsets = [0, 256], sizes = [8, 128], strides = [1, 1]} : vector<8x384xf32> to vector<8x128xf32>
    %234 = vector.extract_strided_slice %216 {offsets = [0, 256], sizes = [8, 128], strides = [1, 1]} : vector<8x384xf32> to vector<8x128xf32>
    %235 = arith.addf %234, %13 : vector<8x128xf32>
    %236 = arith.mulf %224, %235 : vector<8x128xf32>
    %237 = arith.addf %233, %236 : vector<8x128xf32>
    %238 = math.tanh %237 : vector<8x128xf32>
    %239 = vector.extract_strided_slice %232 {offsets = [0, 0], sizes = [8, 32], strides = [1, 1]} : vector<8x128xf32> to vector<8x32xf32>
    %cst_49 = arith.constant 1.000000e+00 : f32
    %240 = vector.broadcast %cst_49 : f32 to vector<8x32xf32>
    %241 = arith.subf %240, %239 : vector<8x32xf32>
    %242 = vector.extract_strided_slice %238 {offsets = [0, 0], sizes = [8, 32], strides = [1, 1]} : vector<8x128xf32> to vector<8x32xf32>
    %243 = arith.mulf %241, %242 : vector<8x32xf32>
    %244 = vector.extract_strided_slice %232 {offsets = [0, 0], sizes = [8, 32], strides = [1, 1]} : vector<8x128xf32> to vector<8x32xf32>
    %245 = arith.mulf %244, %181 : vector<8x32xf32>
    %246 = arith.addf %243, %245 : vector<8x32xf32>
    %247 = vector.extract_strided_slice %17 {offsets = [32, 0], sizes = [8, 384], strides = [1, 1]} : vector<64x384xf32> to vector<8x384xf32>
    %cst_50 = arith.constant dense<0.000000e+00> : vector<8x384xf32>
    %248 = tpu.matmul %213, %2, %cst_50 {dimension_numbers = #tpu.dot_dimension_numbers<[1], [0], [0], [1], [0, 0, 1, 1], [], []>} : vector<8x32xf32>, vector<32x384xf32>, vector<8x384xf32> -> vector<8x384xf32>
    %249 = vector.extract_strided_slice %247 {offsets = [0, 0], sizes = [8, 128], strides = [1, 1]} : vector<8x384xf32> to vector<8x128xf32>
    %250 = vector.extract_strided_slice %248 {offsets = [0, 0], sizes = [8, 128], strides = [1, 1]} : vector<8x384xf32> to vector<8x128xf32>
    %251 = arith.addf %249, %250 : vector<8x128xf32>
    %252 = arith.negf %251 : vector<8x128xf32>
    %253 = math.exp %252 : vector<8x128xf32>
    %cst_51 = arith.constant 1.000000e+00 : f32
    %254 = vector.broadcast %cst_51 : f32 to vector<8x128xf32>
    %255 = arith.addf %254, %253 : vector<8x128xf32>
    %256 = arith.divf %254, %255 : vector<8x128xf32>
    %257 = vector.extract_strided_slice %247 {offsets = [0, 128], sizes = [8, 128], strides = [1, 1]} : vector<8x384xf32> to vector<8x128xf32>
    %258 = vector.extract_strided_slice %248 {offsets = [0, 128], sizes = [8, 128], strides = [1, 1]} : vector<8x384xf32> to vector<8x128xf32>
    %259 = arith.addf %257, %258 : vector<8x128xf32>
    %260 = arith.negf %259 : vector<8x128xf32>
    %261 = math.exp %260 : vector<8x128xf32>
    %cst_52 = arith.constant 1.000000e+00 : f32
    %262 = vector.broadcast %cst_52 : f32 to vector<8x128xf32>
    %263 = arith.addf %262, %261 : vector<8x128xf32>
    %264 = arith.divf %262, %263 : vector<8x128xf32>
    %265 = vector.extract_strided_slice %247 {offsets = [0, 256], sizes = [8, 128], strides = [1, 1]} : vector<8x384xf32> to vector<8x128xf32>
    %266 = vector.extract_strided_slice %248 {offsets = [0, 256], sizes = [8, 128], strides = [1, 1]} : vector<8x384xf32> to vector<8x128xf32>
    %267 = arith.addf %266, %10 : vector<8x128xf32>
    %268 = arith.mulf %256, %267 : vector<8x128xf32>
    %269 = arith.addf %265, %268 : vector<8x128xf32>
    %270 = math.tanh %269 : vector<8x128xf32>
    %271 = vector.extract_strided_slice %264 {offsets = [0, 0], sizes = [8, 32], strides = [1, 1]} : vector<8x128xf32> to vector<8x32xf32>
    %cst_53 = arith.constant 1.000000e+00 : f32
    %272 = vector.broadcast %cst_53 : f32 to vector<8x32xf32>
    %273 = arith.subf %272, %271 : vector<8x32xf32>
    %274 = vector.extract_strided_slice %270 {offsets = [0, 0], sizes = [8, 32], strides = [1, 1]} : vector<8x128xf32> to vector<8x32xf32>
    %275 = arith.mulf %273, %274 : vector<8x32xf32>
    %276 = vector.extract_strided_slice %264 {offsets = [0, 0], sizes = [8, 32], strides = [1, 1]} : vector<8x128xf32> to vector<8x32xf32>
    %277 = arith.mulf %276, %213 : vector<8x32xf32>
    %278 = arith.addf %275, %277 : vector<8x32xf32>
    %cst_54 = arith.constant dense<0.000000e+00> : vector<8x384xf32>
    %279 = tpu.matmul %213, %1, %cst_54 {dimension_numbers = #tpu.dot_dimension_numbers<[1], [0], [0], [1], [0, 0, 1, 1], [], []>} : vector<8x32xf32>, vector<32x384xf32>, vector<8x384xf32> -> vector<8x384xf32>
    %280 = arith.addf %279, %7 : vector<8x384xf32>
    %cst_55 = arith.constant dense<0.000000e+00> : vector<8x384xf32>
    %281 = tpu.matmul %246, %3, %cst_55 {dimension_numbers = #tpu.dot_dimension_numbers<[1], [0], [0], [1], [0, 0, 1, 1], [], []>} : vector<8x32xf32>, vector<32x384xf32>, vector<8x384xf32> -> vector<8x384xf32>
    %282 = vector.extract_strided_slice %280 {offsets = [0, 0], sizes = [8, 128], strides = [1, 1]} : vector<8x384xf32> to vector<8x128xf32>
    %283 = vector.extract_strided_slice %281 {offsets = [0, 0], sizes = [8, 128], strides = [1, 1]} : vector<8x384xf32> to vector<8x128xf32>
    %284 = arith.addf %282, %283 : vector<8x128xf32>
    %285 = arith.negf %284 : vector<8x128xf32>
    %286 = math.exp %285 : vector<8x128xf32>
    %cst_56 = arith.constant 1.000000e+00 : f32
    %287 = vector.broadcast %cst_56 : f32 to vector<8x128xf32>
    %288 = arith.addf %287, %286 : vector<8x128xf32>
    %289 = arith.divf %287, %288 : vector<8x128xf32>
    %290 = vector.extract_strided_slice %280 {offsets = [0, 128], sizes = [8, 128], strides = [1, 1]} : vector<8x384xf32> to vector<8x128xf32>
    %291 = vector.extract_strided_slice %281 {offsets = [0, 128], sizes = [8, 128], strides = [1, 1]} : vector<8x384xf32> to vector<8x128xf32>
    %292 = arith.addf %290, %291 : vector<8x128xf32>
    %293 = arith.negf %292 : vector<8x128xf32>
    %294 = math.exp %293 : vector<8x128xf32>
    %cst_57 = arith.constant 1.000000e+00 : f32
    %295 = vector.broadcast %cst_57 : f32 to vector<8x128xf32>
    %296 = arith.addf %295, %294 : vector<8x128xf32>
    %297 = arith.divf %295, %296 : vector<8x128xf32>
    %298 = vector.extract_strided_slice %280 {offsets = [0, 256], sizes = [8, 128], strides = [1, 1]} : vector<8x384xf32> to vector<8x128xf32>
    %299 = vector.extract_strided_slice %281 {offsets = [0, 256], sizes = [8, 128], strides = [1, 1]} : vector<8x384xf32> to vector<8x128xf32>
    %300 = arith.addf %299, %13 : vector<8x128xf32>
    %301 = arith.mulf %289, %300 : vector<8x128xf32>
    %302 = arith.addf %298, %301 : vector<8x128xf32>
    %303 = math.tanh %302 : vector<8x128xf32>
    %304 = vector.extract_strided_slice %297 {offsets = [0, 0], sizes = [8, 32], strides = [1, 1]} : vector<8x128xf32> to vector<8x32xf32>
    %cst_58 = arith.constant 1.000000e+00 : f32
    %305 = vector.broadcast %cst_58 : f32 to vector<8x32xf32>
    %306 = arith.subf %305, %304 : vector<8x32xf32>
    %307 = vector.extract_strided_slice %303 {offsets = [0, 0], sizes = [8, 32], strides = [1, 1]} : vector<8x128xf32> to vector<8x32xf32>
    %308 = arith.mulf %306, %307 : vector<8x32xf32>
    %309 = vector.extract_strided_slice %297 {offsets = [0, 0], sizes = [8, 32], strides = [1, 1]} : vector<8x128xf32> to vector<8x32xf32>
    %310 = arith.mulf %309, %246 : vector<8x32xf32>
    %311 = arith.addf %308, %310 : vector<8x32xf32>
    %312 = vector.extract_strided_slice %17 {offsets = [40, 0], sizes = [8, 384], strides = [1, 1]} : vector<64x384xf32> to vector<8x384xf32>
    %cst_59 = arith.constant dense<0.000000e+00> : vector<8x384xf32>
    %313 = tpu.matmul %278, %2, %cst_59 {dimension_numbers = #tpu.dot_dimension_numbers<[1], [0], [0], [1], [0, 0, 1, 1], [], []>} : vector<8x32xf32>, vector<32x384xf32>, vector<8x384xf32> -> vector<8x384xf32>
    %314 = vector.extract_strided_slice %312 {offsets = [0, 0], sizes = [8, 128], strides = [1, 1]} : vector<8x384xf32> to vector<8x128xf32>
    %315 = vector.extract_strided_slice %313 {offsets = [0, 0], sizes = [8, 128], strides = [1, 1]} : vector<8x384xf32> to vector<8x128xf32>
    %316 = arith.addf %314, %315 : vector<8x128xf32>
    %317 = arith.negf %316 : vector<8x128xf32>
    %318 = math.exp %317 : vector<8x128xf32>
    %cst_60 = arith.constant 1.000000e+00 : f32
    %319 = vector.broadcast %cst_60 : f32 to vector<8x128xf32>
    %320 = arith.addf %319, %318 : vector<8x128xf32>
    %321 = arith.divf %319, %320 : vector<8x128xf32>
    %322 = vector.extract_strided_slice %312 {offsets = [0, 128], sizes = [8, 128], strides = [1, 1]} : vector<8x384xf32> to vector<8x128xf32>
    %323 = vector.extract_strided_slice %313 {offsets = [0, 128], sizes = [8, 128], strides = [1, 1]} : vector<8x384xf32> to vector<8x128xf32>
    %324 = arith.addf %322, %323 : vector<8x128xf32>
    %325 = arith.negf %324 : vector<8x128xf32>
    %326 = math.exp %325 : vector<8x128xf32>
    %cst_61 = arith.constant 1.000000e+00 : f32
    %327 = vector.broadcast %cst_61 : f32 to vector<8x128xf32>
    %328 = arith.addf %327, %326 : vector<8x128xf32>
    %329 = arith.divf %327, %328 : vector<8x128xf32>
    %330 = vector.extract_strided_slice %312 {offsets = [0, 256], sizes = [8, 128], strides = [1, 1]} : vector<8x384xf32> to vector<8x128xf32>
    %331 = vector.extract_strided_slice %313 {offsets = [0, 256], sizes = [8, 128], strides = [1, 1]} : vector<8x384xf32> to vector<8x128xf32>
    %332 = arith.addf %331, %10 : vector<8x128xf32>
    %333 = arith.mulf %321, %332 : vector<8x128xf32>
    %334 = arith.addf %330, %333 : vector<8x128xf32>
    %335 = math.tanh %334 : vector<8x128xf32>
    %336 = vector.extract_strided_slice %329 {offsets = [0, 0], sizes = [8, 32], strides = [1, 1]} : vector<8x128xf32> to vector<8x32xf32>
    %cst_62 = arith.constant 1.000000e+00 : f32
    %337 = vector.broadcast %cst_62 : f32 to vector<8x32xf32>
    %338 = arith.subf %337, %336 : vector<8x32xf32>
    %339 = vector.extract_strided_slice %335 {offsets = [0, 0], sizes = [8, 32], strides = [1, 1]} : vector<8x128xf32> to vector<8x32xf32>
    %340 = arith.mulf %338, %339 : vector<8x32xf32>
    %341 = vector.extract_strided_slice %329 {offsets = [0, 0], sizes = [8, 32], strides = [1, 1]} : vector<8x128xf32> to vector<8x32xf32>
    %342 = arith.mulf %341, %278 : vector<8x32xf32>
    %343 = arith.addf %340, %342 : vector<8x32xf32>
    %cst_63 = arith.constant dense<0.000000e+00> : vector<8x384xf32>
    %344 = tpu.matmul %278, %1, %cst_63 {dimension_numbers = #tpu.dot_dimension_numbers<[1], [0], [0], [1], [0, 0, 1, 1], [], []>} : vector<8x32xf32>, vector<32x384xf32>, vector<8x384xf32> -> vector<8x384xf32>
    %345 = arith.addf %344, %7 : vector<8x384xf32>
    %cst_64 = arith.constant dense<0.000000e+00> : vector<8x384xf32>
    %346 = tpu.matmul %311, %3, %cst_64 {dimension_numbers = #tpu.dot_dimension_numbers<[1], [0], [0], [1], [0, 0, 1, 1], [], []>} : vector<8x32xf32>, vector<32x384xf32>, vector<8x384xf32> -> vector<8x384xf32>
    %347 = vector.extract_strided_slice %345 {offsets = [0, 0], sizes = [8, 128], strides = [1, 1]} : vector<8x384xf32> to vector<8x128xf32>
    %348 = vector.extract_strided_slice %346 {offsets = [0, 0], sizes = [8, 128], strides = [1, 1]} : vector<8x384xf32> to vector<8x128xf32>
    %349 = arith.addf %347, %348 : vector<8x128xf32>
    %350 = arith.negf %349 : vector<8x128xf32>
    %351 = math.exp %350 : vector<8x128xf32>
    %cst_65 = arith.constant 1.000000e+00 : f32
    %352 = vector.broadcast %cst_65 : f32 to vector<8x128xf32>
    %353 = arith.addf %352, %351 : vector<8x128xf32>
    %354 = arith.divf %352, %353 : vector<8x128xf32>
    %355 = vector.extract_strided_slice %345 {offsets = [0, 128], sizes = [8, 128], strides = [1, 1]} : vector<8x384xf32> to vector<8x128xf32>
    %356 = vector.extract_strided_slice %346 {offsets = [0, 128], sizes = [8, 128], strides = [1, 1]} : vector<8x384xf32> to vector<8x128xf32>
    %357 = arith.addf %355, %356 : vector<8x128xf32>
    %358 = arith.negf %357 : vector<8x128xf32>
    %359 = math.exp %358 : vector<8x128xf32>
    %cst_66 = arith.constant 1.000000e+00 : f32
    %360 = vector.broadcast %cst_66 : f32 to vector<8x128xf32>
    %361 = arith.addf %360, %359 : vector<8x128xf32>
    %362 = arith.divf %360, %361 : vector<8x128xf32>
    %363 = vector.extract_strided_slice %345 {offsets = [0, 256], sizes = [8, 128], strides = [1, 1]} : vector<8x384xf32> to vector<8x128xf32>
    %364 = vector.extract_strided_slice %346 {offsets = [0, 256], sizes = [8, 128], strides = [1, 1]} : vector<8x384xf32> to vector<8x128xf32>
    %365 = arith.addf %364, %13 : vector<8x128xf32>
    %366 = arith.mulf %354, %365 : vector<8x128xf32>
    %367 = arith.addf %363, %366 : vector<8x128xf32>
    %368 = math.tanh %367 : vector<8x128xf32>
    %369 = vector.extract_strided_slice %362 {offsets = [0, 0], sizes = [8, 32], strides = [1, 1]} : vector<8x128xf32> to vector<8x32xf32>
    %cst_67 = arith.constant 1.000000e+00 : f32
    %370 = vector.broadcast %cst_67 : f32 to vector<8x32xf32>
    %371 = arith.subf %370, %369 : vector<8x32xf32>
    %372 = vector.extract_strided_slice %368 {offsets = [0, 0], sizes = [8, 32], strides = [1, 1]} : vector<8x128xf32> to vector<8x32xf32>
    %373 = arith.mulf %371, %372 : vector<8x32xf32>
    %374 = vector.extract_strided_slice %362 {offsets = [0, 0], sizes = [8, 32], strides = [1, 1]} : vector<8x128xf32> to vector<8x32xf32>
    %375 = arith.mulf %374, %311 : vector<8x32xf32>
    %376 = arith.addf %373, %375 : vector<8x32xf32>
    %377 = vector.extract_strided_slice %17 {offsets = [48, 0], sizes = [8, 384], strides = [1, 1]} : vector<64x384xf32> to vector<8x384xf32>
    %cst_68 = arith.constant dense<0.000000e+00> : vector<8x384xf32>
    %378 = tpu.matmul %343, %2, %cst_68 {dimension_numbers = #tpu.dot_dimension_numbers<[1], [0], [0], [1], [0, 0, 1, 1], [], []>} : vector<8x32xf32>, vector<32x384xf32>, vector<8x384xf32> -> vector<8x384xf32>
    %379 = vector.extract_strided_slice %377 {offsets = [0, 0], sizes = [8, 128], strides = [1, 1]} : vector<8x384xf32> to vector<8x128xf32>
    %380 = vector.extract_strided_slice %378 {offsets = [0, 0], sizes = [8, 128], strides = [1, 1]} : vector<8x384xf32> to vector<8x128xf32>
    %381 = arith.addf %379, %380 : vector<8x128xf32>
    %382 = arith.negf %381 : vector<8x128xf32>
    %383 = math.exp %382 : vector<8x128xf32>
    %cst_69 = arith.constant 1.000000e+00 : f32
    %384 = vector.broadcast %cst_69 : f32 to vector<8x128xf32>
    %385 = arith.addf %384, %383 : vector<8x128xf32>
    %386 = arith.divf %384, %385 : vector<8x128xf32>
    %387 = vector.extract_strided_slice %377 {offsets = [0, 128], sizes = [8, 128], strides = [1, 1]} : vector<8x384xf32> to vector<8x128xf32>
    %388 = vector.extract_strided_slice %378 {offsets = [0, 128], sizes = [8, 128], strides = [1, 1]} : vector<8x384xf32> to vector<8x128xf32>
    %389 = arith.addf %387, %388 : vector<8x128xf32>
    %390 = arith.negf %389 : vector<8x128xf32>
    %391 = math.exp %390 : vector<8x128xf32>
    %cst_70 = arith.constant 1.000000e+00 : f32
    %392 = vector.broadcast %cst_70 : f32 to vector<8x128xf32>
    %393 = arith.addf %392, %391 : vector<8x128xf32>
    %394 = arith.divf %392, %393 : vector<8x128xf32>
    %395 = vector.extract_strided_slice %377 {offsets = [0, 256], sizes = [8, 128], strides = [1, 1]} : vector<8x384xf32> to vector<8x128xf32>
    %396 = vector.extract_strided_slice %378 {offsets = [0, 256], sizes = [8, 128], strides = [1, 1]} : vector<8x384xf32> to vector<8x128xf32>
    %397 = arith.addf %396, %10 : vector<8x128xf32>
    %398 = arith.mulf %386, %397 : vector<8x128xf32>
    %399 = arith.addf %395, %398 : vector<8x128xf32>
    %400 = math.tanh %399 : vector<8x128xf32>
    %401 = vector.extract_strided_slice %394 {offsets = [0, 0], sizes = [8, 32], strides = [1, 1]} : vector<8x128xf32> to vector<8x32xf32>
    %cst_71 = arith.constant 1.000000e+00 : f32
    %402 = vector.broadcast %cst_71 : f32 to vector<8x32xf32>
    %403 = arith.subf %402, %401 : vector<8x32xf32>
    %404 = vector.extract_strided_slice %400 {offsets = [0, 0], sizes = [8, 32], strides = [1, 1]} : vector<8x128xf32> to vector<8x32xf32>
    %405 = arith.mulf %403, %404 : vector<8x32xf32>
    %406 = vector.extract_strided_slice %394 {offsets = [0, 0], sizes = [8, 32], strides = [1, 1]} : vector<8x128xf32> to vector<8x32xf32>
    %407 = arith.mulf %406, %343 : vector<8x32xf32>
    %408 = arith.addf %405, %407 : vector<8x32xf32>
    %cst_72 = arith.constant dense<0.000000e+00> : vector<8x384xf32>
    %409 = tpu.matmul %343, %1, %cst_72 {dimension_numbers = #tpu.dot_dimension_numbers<[1], [0], [0], [1], [0, 0, 1, 1], [], []>} : vector<8x32xf32>, vector<32x384xf32>, vector<8x384xf32> -> vector<8x384xf32>
    %410 = arith.addf %409, %7 : vector<8x384xf32>
    %cst_73 = arith.constant dense<0.000000e+00> : vector<8x384xf32>
    %411 = tpu.matmul %376, %3, %cst_73 {dimension_numbers = #tpu.dot_dimension_numbers<[1], [0], [0], [1], [0, 0, 1, 1], [], []>} : vector<8x32xf32>, vector<32x384xf32>, vector<8x384xf32> -> vector<8x384xf32>
    %412 = vector.extract_strided_slice %410 {offsets = [0, 0], sizes = [8, 128], strides = [1, 1]} : vector<8x384xf32> to vector<8x128xf32>
    %413 = vector.extract_strided_slice %411 {offsets = [0, 0], sizes = [8, 128], strides = [1, 1]} : vector<8x384xf32> to vector<8x128xf32>
    %414 = arith.addf %412, %413 : vector<8x128xf32>
    %415 = arith.negf %414 : vector<8x128xf32>
    %416 = math.exp %415 : vector<8x128xf32>
    %cst_74 = arith.constant 1.000000e+00 : f32
    %417 = vector.broadcast %cst_74 : f32 to vector<8x128xf32>
    %418 = arith.addf %417, %416 : vector<8x128xf32>
    %419 = arith.divf %417, %418 : vector<8x128xf32>
    %420 = vector.extract_strided_slice %410 {offsets = [0, 128], sizes = [8, 128], strides = [1, 1]} : vector<8x384xf32> to vector<8x128xf32>
    %421 = vector.extract_strided_slice %411 {offsets = [0, 128], sizes = [8, 128], strides = [1, 1]} : vector<8x384xf32> to vector<8x128xf32>
    %422 = arith.addf %420, %421 : vector<8x128xf32>
    %423 = arith.negf %422 : vector<8x128xf32>
    %424 = math.exp %423 : vector<8x128xf32>
    %cst_75 = arith.constant 1.000000e+00 : f32
    %425 = vector.broadcast %cst_75 : f32 to vector<8x128xf32>
    %426 = arith.addf %425, %424 : vector<8x128xf32>
    %427 = arith.divf %425, %426 : vector<8x128xf32>
    %428 = vector.extract_strided_slice %410 {offsets = [0, 256], sizes = [8, 128], strides = [1, 1]} : vector<8x384xf32> to vector<8x128xf32>
    %429 = vector.extract_strided_slice %411 {offsets = [0, 256], sizes = [8, 128], strides = [1, 1]} : vector<8x384xf32> to vector<8x128xf32>
    %430 = arith.addf %429, %13 : vector<8x128xf32>
    %431 = arith.mulf %419, %430 : vector<8x128xf32>
    %432 = arith.addf %428, %431 : vector<8x128xf32>
    %433 = math.tanh %432 : vector<8x128xf32>
    %434 = vector.extract_strided_slice %427 {offsets = [0, 0], sizes = [8, 32], strides = [1, 1]} : vector<8x128xf32> to vector<8x32xf32>
    %cst_76 = arith.constant 1.000000e+00 : f32
    %435 = vector.broadcast %cst_76 : f32 to vector<8x32xf32>
    %436 = arith.subf %435, %434 : vector<8x32xf32>
    %437 = vector.extract_strided_slice %433 {offsets = [0, 0], sizes = [8, 32], strides = [1, 1]} : vector<8x128xf32> to vector<8x32xf32>
    %438 = arith.mulf %436, %437 : vector<8x32xf32>
    %439 = vector.extract_strided_slice %427 {offsets = [0, 0], sizes = [8, 32], strides = [1, 1]} : vector<8x128xf32> to vector<8x32xf32>
    %440 = arith.mulf %439, %376 : vector<8x32xf32>
    %441 = arith.addf %438, %440 : vector<8x32xf32>
    %442 = vector.extract_strided_slice %17 {offsets = [56, 0], sizes = [8, 384], strides = [1, 1]} : vector<64x384xf32> to vector<8x384xf32>
    %cst_77 = arith.constant dense<0.000000e+00> : vector<8x384xf32>
    %443 = tpu.matmul %408, %2, %cst_77 {dimension_numbers = #tpu.dot_dimension_numbers<[1], [0], [0], [1], [0, 0, 1, 1], [], []>} : vector<8x32xf32>, vector<32x384xf32>, vector<8x384xf32> -> vector<8x384xf32>
    %444 = vector.extract_strided_slice %442 {offsets = [0, 0], sizes = [8, 128], strides = [1, 1]} : vector<8x384xf32> to vector<8x128xf32>
    %445 = vector.extract_strided_slice %443 {offsets = [0, 0], sizes = [8, 128], strides = [1, 1]} : vector<8x384xf32> to vector<8x128xf32>
    %446 = arith.addf %444, %445 : vector<8x128xf32>
    %447 = arith.negf %446 : vector<8x128xf32>
    %448 = math.exp %447 : vector<8x128xf32>
    %cst_78 = arith.constant 1.000000e+00 : f32
    %449 = vector.broadcast %cst_78 : f32 to vector<8x128xf32>
    %450 = arith.addf %449, %448 : vector<8x128xf32>
    %451 = arith.divf %449, %450 : vector<8x128xf32>
    %452 = vector.extract_strided_slice %442 {offsets = [0, 128], sizes = [8, 128], strides = [1, 1]} : vector<8x384xf32> to vector<8x128xf32>
    %453 = vector.extract_strided_slice %443 {offsets = [0, 128], sizes = [8, 128], strides = [1, 1]} : vector<8x384xf32> to vector<8x128xf32>
    %454 = arith.addf %452, %453 : vector<8x128xf32>
    %455 = arith.negf %454 : vector<8x128xf32>
    %456 = math.exp %455 : vector<8x128xf32>
    %cst_79 = arith.constant 1.000000e+00 : f32
    %457 = vector.broadcast %cst_79 : f32 to vector<8x128xf32>
    %458 = arith.addf %457, %456 : vector<8x128xf32>
    %459 = arith.divf %457, %458 : vector<8x128xf32>
    %460 = vector.extract_strided_slice %442 {offsets = [0, 256], sizes = [8, 128], strides = [1, 1]} : vector<8x384xf32> to vector<8x128xf32>
    %461 = vector.extract_strided_slice %443 {offsets = [0, 256], sizes = [8, 128], strides = [1, 1]} : vector<8x384xf32> to vector<8x128xf32>
    %462 = arith.addf %461, %10 : vector<8x128xf32>
    %463 = arith.mulf %451, %462 : vector<8x128xf32>
    %464 = arith.addf %460, %463 : vector<8x128xf32>
    %465 = math.tanh %464 : vector<8x128xf32>
    %466 = vector.extract_strided_slice %459 {offsets = [0, 0], sizes = [8, 32], strides = [1, 1]} : vector<8x128xf32> to vector<8x32xf32>
    %cst_80 = arith.constant 1.000000e+00 : f32
    %467 = vector.broadcast %cst_80 : f32 to vector<8x32xf32>
    %468 = arith.subf %467, %466 : vector<8x32xf32>
    %469 = vector.extract_strided_slice %465 {offsets = [0, 0], sizes = [8, 32], strides = [1, 1]} : vector<8x128xf32> to vector<8x32xf32>
    %470 = arith.mulf %468, %469 : vector<8x32xf32>
    %471 = vector.extract_strided_slice %459 {offsets = [0, 0], sizes = [8, 32], strides = [1, 1]} : vector<8x128xf32> to vector<8x32xf32>
    %472 = arith.mulf %471, %408 : vector<8x32xf32>
    %473 = arith.addf %470, %472 : vector<8x32xf32>
    %cst_81 = arith.constant dense<0.000000e+00> : vector<8x384xf32>
    %474 = tpu.matmul %408, %1, %cst_81 {dimension_numbers = #tpu.dot_dimension_numbers<[1], [0], [0], [1], [0, 0, 1, 1], [], []>} : vector<8x32xf32>, vector<32x384xf32>, vector<8x384xf32> -> vector<8x384xf32>
    %475 = arith.addf %474, %7 : vector<8x384xf32>
    %cst_82 = arith.constant dense<0.000000e+00> : vector<8x384xf32>
    %476 = tpu.matmul %441, %3, %cst_82 {dimension_numbers = #tpu.dot_dimension_numbers<[1], [0], [0], [1], [0, 0, 1, 1], [], []>} : vector<8x32xf32>, vector<32x384xf32>, vector<8x384xf32> -> vector<8x384xf32>
    %477 = vector.extract_strided_slice %475 {offsets = [0, 0], sizes = [8, 128], strides = [1, 1]} : vector<8x384xf32> to vector<8x128xf32>
    %478 = vector.extract_strided_slice %476 {offsets = [0, 0], sizes = [8, 128], strides = [1, 1]} : vector<8x384xf32> to vector<8x128xf32>
    %479 = arith.addf %477, %478 : vector<8x128xf32>
    %480 = arith.negf %479 : vector<8x128xf32>
    %481 = math.exp %480 : vector<8x128xf32>
    %cst_83 = arith.constant 1.000000e+00 : f32
    %482 = vector.broadcast %cst_83 : f32 to vector<8x128xf32>
    %483 = arith.addf %482, %481 : vector<8x128xf32>
    %484 = arith.divf %482, %483 : vector<8x128xf32>
    %485 = vector.extract_strided_slice %475 {offsets = [0, 128], sizes = [8, 128], strides = [1, 1]} : vector<8x384xf32> to vector<8x128xf32>
    %486 = vector.extract_strided_slice %476 {offsets = [0, 128], sizes = [8, 128], strides = [1, 1]} : vector<8x384xf32> to vector<8x128xf32>
    %487 = arith.addf %485, %486 : vector<8x128xf32>
    %488 = arith.negf %487 : vector<8x128xf32>
    %489 = math.exp %488 : vector<8x128xf32>
    %cst_84 = arith.constant 1.000000e+00 : f32
    %490 = vector.broadcast %cst_84 : f32 to vector<8x128xf32>
    %491 = arith.addf %490, %489 : vector<8x128xf32>
    %492 = arith.divf %490, %491 : vector<8x128xf32>
    %493 = vector.extract_strided_slice %475 {offsets = [0, 256], sizes = [8, 128], strides = [1, 1]} : vector<8x384xf32> to vector<8x128xf32>
    %494 = vector.extract_strided_slice %476 {offsets = [0, 256], sizes = [8, 128], strides = [1, 1]} : vector<8x384xf32> to vector<8x128xf32>
    %495 = arith.addf %494, %13 : vector<8x128xf32>
    %496 = arith.mulf %484, %495 : vector<8x128xf32>
    %497 = arith.addf %493, %496 : vector<8x128xf32>
    %498 = math.tanh %497 : vector<8x128xf32>
    %499 = vector.extract_strided_slice %492 {offsets = [0, 0], sizes = [8, 32], strides = [1, 1]} : vector<8x128xf32> to vector<8x32xf32>
    %cst_85 = arith.constant 1.000000e+00 : f32
    %500 = vector.broadcast %cst_85 : f32 to vector<8x32xf32>
    %501 = arith.subf %500, %499 : vector<8x32xf32>
    %502 = vector.extract_strided_slice %498 {offsets = [0, 0], sizes = [8, 32], strides = [1, 1]} : vector<8x128xf32> to vector<8x32xf32>
    %503 = arith.mulf %501, %502 : vector<8x32xf32>
    %504 = vector.extract_strided_slice %492 {offsets = [0, 0], sizes = [8, 32], strides = [1, 1]} : vector<8x128xf32> to vector<8x32xf32>
    %505 = arith.mulf %504, %441 : vector<8x32xf32>
    %506 = arith.addf %503, %505 : vector<8x32xf32>
    %cst_86 = arith.constant dense<0.000000e+00> : vector<8x384xf32>
    %507 = tpu.matmul %473, %1, %cst_86 {dimension_numbers = #tpu.dot_dimension_numbers<[1], [0], [0], [1], [0, 0, 1, 1], [], []>} : vector<8x32xf32>, vector<32x384xf32>, vector<8x384xf32> -> vector<8x384xf32>
    %508 = arith.addf %507, %7 : vector<8x384xf32>
    %cst_87 = arith.constant dense<0.000000e+00> : vector<8x384xf32>
    %509 = tpu.matmul %506, %3, %cst_87 {dimension_numbers = #tpu.dot_dimension_numbers<[1], [0], [0], [1], [0, 0, 1, 1], [], []>} : vector<8x32xf32>, vector<32x384xf32>, vector<8x384xf32> -> vector<8x384xf32>
    %510 = vector.extract_strided_slice %508 {offsets = [0, 0], sizes = [8, 128], strides = [1, 1]} : vector<8x384xf32> to vector<8x128xf32>
    %511 = vector.extract_strided_slice %509 {offsets = [0, 0], sizes = [8, 128], strides = [1, 1]} : vector<8x384xf32> to vector<8x128xf32>
    %512 = arith.addf %510, %511 : vector<8x128xf32>
    %513 = arith.negf %512 : vector<8x128xf32>
    %514 = math.exp %513 : vector<8x128xf32>
    %cst_88 = arith.constant 1.000000e+00 : f32
    %515 = vector.broadcast %cst_88 : f32 to vector<8x128xf32>
    %516 = arith.addf %515, %514 : vector<8x128xf32>
    %517 = arith.divf %515, %516 : vector<8x128xf32>
    %518 = vector.extract_strided_slice %508 {offsets = [0, 128], sizes = [8, 128], strides = [1, 1]} : vector<8x384xf32> to vector<8x128xf32>
    %519 = vector.extract_strided_slice %509 {offsets = [0, 128], sizes = [8, 128], strides = [1, 1]} : vector<8x384xf32> to vector<8x128xf32>
    %520 = arith.addf %518, %519 : vector<8x128xf32>
    %521 = arith.negf %520 : vector<8x128xf32>
    %522 = math.exp %521 : vector<8x128xf32>
    %cst_89 = arith.constant 1.000000e+00 : f32
    %523 = vector.broadcast %cst_89 : f32 to vector<8x128xf32>
    %524 = arith.addf %523, %522 : vector<8x128xf32>
    %525 = arith.divf %523, %524 : vector<8x128xf32>
    %526 = vector.extract_strided_slice %508 {offsets = [0, 256], sizes = [8, 128], strides = [1, 1]} : vector<8x384xf32> to vector<8x128xf32>
    %527 = vector.extract_strided_slice %509 {offsets = [0, 256], sizes = [8, 128], strides = [1, 1]} : vector<8x384xf32> to vector<8x128xf32>
    %528 = arith.addf %527, %13 : vector<8x128xf32>
    %529 = arith.mulf %517, %528 : vector<8x128xf32>
    %530 = arith.addf %526, %529 : vector<8x128xf32>
    %531 = math.tanh %530 : vector<8x128xf32>
    %532 = vector.extract_strided_slice %525 {offsets = [0, 0], sizes = [8, 32], strides = [1, 1]} : vector<8x128xf32> to vector<8x32xf32>
    %cst_90 = arith.constant 1.000000e+00 : f32
    %533 = vector.broadcast %cst_90 : f32 to vector<8x32xf32>
    %534 = arith.subf %533, %532 : vector<8x32xf32>
    %535 = vector.extract_strided_slice %531 {offsets = [0, 0], sizes = [8, 32], strides = [1, 1]} : vector<8x128xf32> to vector<8x32xf32>
    %536 = arith.mulf %534, %535 : vector<8x32xf32>
    %537 = vector.extract_strided_slice %525 {offsets = [0, 0], sizes = [8, 32], strides = [1, 1]} : vector<8x128xf32> to vector<8x32xf32>
    %538 = arith.mulf %537, %506 : vector<8x32xf32>
    %539 = arith.addf %536, %538 : vector<8x32xf32>
    %c0_91 = arith.constant 0 : index
    %c0_92 = arith.constant 0 : index
    %540 = vector.load %arg9[%c0_91, %c0_92] : memref<32x10xf32, #tpu.memory_space<vmem>>, vector<32x10xf32>
    %cst_93 = arith.constant dense<0.000000e+00> : vector<8x10xf32>
    %541 = tpu.matmul %539, %540, %cst_93 {dimension_numbers = #tpu.dot_dimension_numbers<[1], [0], [0], [1], [0, 0, 1, 1], [], []>} : vector<8x32xf32>, vector<32x10xf32>, vector<8x10xf32> -> vector<8x10xf32>
    %c0_94 = arith.constant 0 : index
    %c0_95 = arith.constant 0 : index
    %542 = vector.load %arg10[%c0_94, %c0_95] : memref<1x10xf32, #tpu.memory_space<vmem>>, vector<1x10xf32>
    %543 = vector.broadcast %542 : vector<1x10xf32> to vector<8x10xf32>
    %544 = arith.addf %541, %543 : vector<8x10xf32>
    %c0_96 = arith.constant 0 : index
    %c0_97 = arith.constant 0 : index
    %545 = vector.load %arg11[%c0_96, %c0_97] : memref<8x10xf32, #tpu.memory_space<vmem>>, vector<8x10xf32>
    tpu.vector_store %arg11[%c0_96, %c0_97], %544 {strides = array<i32>} : memref<8x10xf32, #tpu.memory_space<vmem>>, vector<8x10xf32>,
    return
  }
}

</mosaic_0001>

<llo_original>
// kernel: gru_model_forward.1
$region0: #{gru_model_forward.1}
  #allocation0 [shape = 'u32[]', space=smem, size = 0x4, offset = 0x4, fixed_abs, tag = 'smem constant byte address 0x4 - core index']
  #allocation1 [shape = 'u32[144,128]{1,0:T(1,128)}', space=vmem, size = 0x12000, scoped, tag = 'internal scratch']
  %s0 = inlined_call_operand.vmem [shape: f32[64,16], index: 0, kind: input, shape index: {}]
  %s1 = inlined_call_operand.vmem [shape: f32[16,384], index: 1, kind: input, shape index: {}]
  %s2 = inlined_call_operand.vmem [shape: f32[32,384], index: 2, kind: input, shape index: {}]
  %s3 = inlined_call_operand.vmem [shape: f32[1,384], index: 3, kind: input, shape index: {}]
  %s4 = inlined_call_operand.vmem [shape: f32[1,128], index: 4, kind: input, shape index: {}]
  %s5 = inlined_call_operand.vmem [shape: f32[32,384], index: 5, kind: input, shape index: {}]
  %s6 = inlined_call_operand.vmem [shape: f32[32,384], index: 6, kind: input, shape index: {}]
  %s7 = inlined_call_operand.vmem [shape: f32[1,384], index: 7, kind: input, shape index: {}]
  %s8 = inlined_call_operand.vmem [shape: f32[1,128], index: 8, kind: input, shape index: {}]
  %s9 = inlined_call_operand.vmem [shape: f32[32,10], index: 9, kind: input, shape index: {}]
  %s10 = inlined_call_operand.vmem [shape: f32[1,10], index: 10, kind: input, shape index: {}]
  %s11 = inlined_call_operand.vmem [shape: f32[8,10], index: 11, kind: output, shape index: {}]
  %s12 = sld [smem:[#allocation0]]
  $region54: #{gru_model_forward.1} parent=0
    _
  %s14 = ssub.s32 1, %s12
  %s15 = scalar_select 0, %s14, %s12
  // Predicated region
  $region2: #{gru_model_forward.1} parent=0 // pred_check
    _
  $region3: #{gru_model_forward.1} parent=0 // pred_check_branch
    %17 = sbr.rel (0) target = $region5
  $region4: #{gru_model_forward.1} parent=0 // pred_region
    _
  $region5: #{gru_model_forward.1} parent=0 // pred_fallthru
    _
  // Predicated region
  $region6: #{gru_model_forward.1} parent=0 // pred_check
    _
  $region7: #{gru_model_forward.1} parent=0 // pred_check_branch
    %19 = sbr.rel (0) target = $region9
  $region8: #{gru_model_forward.1} parent=0 // pred_region
    _
  $region9: #{gru_model_forward.1} parent=0 // pred_fallthru
    _
  // Predicated region
  $region10: #{gru_model_forward.1} parent=0 // pred_check
    _
  $region11: #{gru_model_forward.1} parent=0 // pred_check_branch
    %21 = sbr.rel (0) target = $region13
  $region12: #{gru_model_forward.1} parent=0 // pred_region
    _
  $region13: #{gru_model_forward.1} parent=0 // pred_fallthru
    _
  // Predicated region
  $region14: #{gru_model_forward.1} parent=0 // pred_check
    _
  $region15: #{gru_model_forward.1} parent=0 // pred_check_branch
    %23 = sbr.rel (0) target = $region17
  $region16: #{gru_model_forward.1} parent=0 // pred_region
    _
  $region17: #{gru_model_forward.1} parent=0 // pred_fallthru
    _
  // Predicated region
  $region18: #{gru_model_forward.1} parent=0 // pred_check
    _
  $region19: #{gru_model_forward.1} parent=0 // pred_check_branch
    %25 = sbr.rel (0) target = $region21
  $region20: #{gru_model_forward.1} parent=0 // pred_region
    _
  $region21: #{gru_model_forward.1} parent=0 // pred_fallthru
    _
  // Predicated region
  $region22: #{gru_model_forward.1} parent=0 // pred_check
    _
  $region23: #{gru_model_forward.1} parent=0 // pred_check_branch
    %27 = sbr.rel (0) target = $region25
  $region24: #{gru_model_forward.1} parent=0 // pred_region
    _
  $region25: #{gru_model_forward.1} parent=0 // pred_fallthru
    _
  // Predicated region
  $region26: #{gru_model_forward.1} parent=0 // pred_check
    _
  $region27: #{gru_model_forward.1} parent=0 // pred_check_branch
    %29 = sbr.rel (0) target = $region29
  $region28: #{gru_model_forward.1} parent=0 // pred_region
    _
  $region29: #{gru_model_forward.1} parent=0 // pred_fallthru
    _
  // Predicated region
  $region30: #{gru_model_forward.1} parent=0 // pred_check
    _
  $region31: #{gru_model_forward.1} parent=0 // pred_check_branch
    %31 = sbr.rel (0) target = $region33
  $region32: #{gru_model_forward.1} parent=0 // pred_region
    _
  $region33: #{gru_model_forward.1} parent=0 // pred_fallthru
    _
  // Predicated region
  $region34: #{gru_model_forward.1} parent=0 // pred_check
    _
  $region35: #{gru_model_forward.1} parent=0 // pred_check_branch
    %33 = sbr.rel (0) target = $region37
  $region36: #{gru_model_forward.1} parent=0 // pred_region
    _
  $region37: #{gru_model_forward.1} parent=0 // pred_fallthru
    _
  // Predicated region
  $region38: #{gru_model_forward.1} parent=0 // pred_check
    _
  $region39: #{gru_model_forward.1} parent=0 // pred_check_branch
    %35 = sbr.rel (0) target = $region41
  $region40: #{gru_model_forward.1} parent=0 // pred_region
    _
  $region41: #{gru_model_forward.1} parent=0 // pred_fallthru
    _
  // Predicated region
  $region42: #{gru_model_forward.1} parent=0 // pred_check
    _
  $region43: #{gru_model_forward.1} parent=0 // pred_check_branch
    %37 = sbr.rel (0) target = $region45
  $region44: #{gru_model_forward.1} parent=0 // pred_region
    _
  $region45: #{gru_model_forward.1} parent=0 // pred_fallthru
    _
  %v38 = vld [vmem:[%s1] sm:$0xff]
  %v39 = vld [vmem:[%s1 + $0x8] sm:$0xff]
  %v40 = vld [vmem:[%s1 + $0x10] sm:$0xff]
  %v41 = vld [vmem:[%s1 + $0x18] sm:$0xff]
  %v42 = vld [vmem:[%s1 + $0x20] sm:$0xff]
  %v43 = vld [vmem:[%s1 + $0x28] sm:$0xff]
  %v44 = vld [vmem:[%s5] sm:$0xff]
  %v45 = vld [vmem:[%s5 + $0x8] sm:$0xff]
  %v46 = vld [vmem:[%s5 + $0x10] sm:$0xff]
  %v47 = vld [vmem:[%s5 + $0x18] sm:$0xff]
  %v48 = vld [vmem:[%s5 + $0x20] sm:$0xff]
  %v49 = vld [vmem:[%s5 + $0x28] sm:$0xff]
  %v50 = vld [vmem:[%s5 + $0x30] sm:$0xff]
  %v51 = vld [vmem:[%s5 + $0x38] sm:$0xff]
  %v52 = vld [vmem:[%s5 + $0x40] sm:$0xff]
  %v53 = vld [vmem:[%s5 + $0x48] sm:$0xff]
  %v54 = vld [vmem:[%s5 + $0x50] sm:$0xff]
  %v55 = vld [vmem:[%s5 + $0x58] sm:$0xff]
  %v56 = vld [vmem:[%s2] sm:$0xff]
  %v57 = vld [vmem:[%s2 + $0x8] sm:$0xff]
  %v58 = vld [vmem:[%s2 + $0x10] sm:$0xff]
  %v59 = vld [vmem:[%s2 + $0x18] sm:$0xff]
  %v60 = vld [vmem:[%s2 + $0x20] sm:$0xff]
  %v61 = vld [vmem:[%s2 + $0x28] sm:$0xff]
  %v62 = vld [vmem:[%s2 + $0x30] sm:$0xff]
  %v63 = vld [vmem:[%s2 + $0x38] sm:$0xff]
  %v64 = vld [vmem:[%s2 + $0x40] sm:$0xff]
  %v65 = vld [vmem:[%s2 + $0x48] sm:$0xff]
  %v66 = vld [vmem:[%s2 + $0x50] sm:$0xff]
  %v67 = vld [vmem:[%s2 + $0x58] sm:$0xff]
  %v68 = vld [vmem:[%s6] sm:$0xff]
  %v69 = vld [vmem:[%s6 + $0x8] sm:$0xff]
  %v70 = vld [vmem:[%s6 + $0x10] sm:$0xff]
  %v71 = vld [vmem:[%s6 + $0x18] sm:$0xff]
  %v72 = vld [vmem:[%s6 + $0x20] sm:$0xff]
  %v73 = vld [vmem:[%s6 + $0x28] sm:$0xff]
  %v74 = vld [vmem:[%s6 + $0x30] sm:$0xff]
  %v75 = vld [vmem:[%s6 + $0x38] sm:$0xff]
  %v76 = vld [vmem:[%s6 + $0x40] sm:$0xff]
  %v77 = vld [vmem:[%s6 + $0x48] sm:$0xff]
  %v78 = vld [vmem:[%s6 + $0x50] sm:$0xff]
  %v79 = vld [vmem:[%s6 + $0x58] sm:$0xff]
  %v80 = vld [vmem:[%s3] sm:$0x7]
  %v81 = vld [vmem:[%s7] sm:$0x7]
  %v83 = vlaneseq
  %v84 = vshrl.u32 %v83, 7
  %v85 = vsub.s32 0, %v84
  %v86 = vrot.slane %v81, %v85
  %v87 = vlaneseq
  %v88 = vshrl.u32 %v87, 7
  %v89 = vsub.s32 1, %v88
  %v90 = vrot.slane %v81, %v89
  %v91 = vlaneseq
  %v92 = vshrl.u32 %v91, 7
  %v93 = vsub.s32 2, %v92
  %v94 = vrot.slane %v81, %v93
  %v98 = vld [vmem:[%s4] sm:$0x1]
  %v100 = vlaneseq
  %v101 = vshrl.u32 %v100, 7
  %v102 = vsub.s32 0, %v101
  %v103 = vrot.slane %v98, %v102
  %v105 = vld [vmem:[%s8] sm:$0x1]
  %v107 = vlaneseq
  %v108 = vshrl.u32 %v107, 7
  %v109 = vsub.s32 0, %v108
  %v110 = vrot.slane %v105, %v109
  %v112 = vld [vmem:[%s0] sm:$0xff]
  %v113 = vld [vmem:[%s0 + $0x8] sm:$0xff]
  %v114 = vld [vmem:[%s0 + $0x10] sm:$0xff]
  %v115 = vld [vmem:[%s0 + $0x18] sm:$0xff]
  %v116 = vld [vmem:[%s0 + $0x20] sm:$0xff]
  %v117 = vld [vmem:[%s0 + $0x28] sm:$0xff]
  %v118 = vld [vmem:[%s0 + $0x30] sm:$0xff]
  %v119 = vld [vmem:[%s0 + $0x38] sm:$0xff]
  %v121 = vlaneseq
  %v122 = vshrl.u32 %v121, 7
  %v123 = vsub.s32 0, %v122
  %v124 = vrot.slane %v80, %v123
  %v125 = vlaneseq
  %v126 = vshrl.u32 %v125, 7
  %v127 = vsub.s32 1, %v126
  %v128 = vrot.slane %v80, %v127
  %v129 = vlaneseq
  %v130 = vshrl.u32 %v129, 7
  %v131 = vsub.s32 2, %v130
  %v132 = vrot.slane %v80, %v131
  %vm136 = vcmask 130048
  %v138 = vsel %vm136, %v112, 0
  %v141 = vsel %vm136, %v113, 0
  %v144 = vsel %vm136, %v114, 0
  %v147 = vsel %vm136, %v115, 0
  %v150 = vsel %vm136, %v116, 0
  %v153 = vsel %vm136, %v117, 0
  %v156 = vsel %vm136, %v118, 0
  %v159 = vsel %vm136, %v119, 0
  %161 = vmatprep.subr.mxu0 %v39
  %162 = vmatpush1.msra.mxu0 %v38
  %163 = vmatprep.subr.mxu0 %v42
  %164 = vmatpush1.msra.mxu0 %v41
  %165 = vmatprep.subr.mxu0 0.0
  %166 = vmatpush1.msra.mxu0 0.0
  %167 = vmatprep.subr.mxu0 0.0
  %168 = vmatpush1.msra.mxu0 0.0
  %169 = vmatprep.subr.mxu0 0.0
  %170 = vmatpush1.msra.mxu0 0.0
  %171 = vmatprep.subr.mxu0 0.0
  %172 = vmatpush1.msra.mxu0 0.0
  %173 = vmatprep.subr.mxu0 0.0
  %174 = vmatpush1.msra.mxu0 0.0
  %175 = vmatprep.subr.mxu0 0.0
  %176 = vmatpush1.msra.mxu0 0.0
  %177 = vmatprep.subr.mxu0 0.0
  %178 = vmatpush1.msra.mxu0 0.0
  %179 = vmatprep.subr.mxu0 0.0
  %180 = vmatpush1.msra.mxu0 0.0
  %181 = vmatprep.subr.mxu0 0.0
  %182 = vmatpush1.msra.mxu0 0.0
  %183 = vmatprep.subr.mxu0 0.0
  %184 = vmatpush1.msra.mxu0 0.0
  %185 = vmatprep.subr.mxu0 0.0
  %186 = vmatpush1.msra.mxu0 0.0
  %187 = vmatprep.subr.mxu0 0.0
  %188 = vmatpush1.msra.mxu0 0.0
  %189 = vmatprep.subr.mxu0 0.0
  %190 = vmatpush1.msra.mxu0 0.0
  %191 = vmatprep.subr.mxu0 0.0
  %192 = vmatpush1.msra.mxu0 0.0
  %193 = vmatprep.subr.mxu0 0.0
  %194 = vmatpush1.msra.mxu0 0.0
  %195 = vmatprep.subr.mxu0 0.0
  %196 = vmatpush1.msra.mxu0 0.0
  %197 = vmatprep.subr.mxu0 0.0
  %198 = vmatpush1.msra.mxu0 0.0
  %199 = vmatprep.subr.mxu0 0.0
  %200 = vmatpush1.msra.mxu0 0.0
  %201 = vmatprep.subr.mxu0 0.0
  %202 = vmatpush1.msra.mxu0 0.0
  %203 = vmatprep.subr.mxu0 0.0
  %204 = vmatpush1.msra.mxu0 0.0
  %205 = vmatprep.subr.mxu0 0.0
  %206 = vmatpush1.msra.mxu0 0.0
  %207 = vmatprep.subr.mxu0 0.0
  %208 = vmatpush1.msra.mxu0 0.0
  %209 = vmatprep.subr.mxu0 0.0
  %210 = vmatpush1.msra.mxu0 0.0
  %211 = vmatprep.subr.mxu0 0.0
  %212 = vmatpush1.msra.mxu0 0.0
  %213 = vmatprep.subr.mxu0 0.0
  %214 = vmatpush1.msra.mxu0 0.0
  %215 = vmatprep.subr.mxu0 0.0
  %216 = vmatpush1.msra.mxu0 0.0
  %217 = vmatprep.subr.mxu0 0.0
  %218 = vmatpush1.msra.mxu0 0.0
  %219 = vmatprep.subr.mxu0 0.0
  %220 = vmatpush1.msra.mxu0 0.0
  %221 = vmatprep.subr.mxu0 0.0
  %222 = vmatpush1.msra.mxu0 0.0
  %223 = vmatprep.subr.mxu0 0.0
  %224 = vmatpush1.msra.mxu0 0.0
  %225 = vmatprep.mubr.f32.mxu0 0.0
  %226 = vmatmul.mubr.f32.gmra.mrb[0].mxu0 %v138
  %v227 = vpop.f32.mrb[0].mxu0
  %v228 = vadd.f32 %v124, %v227
  %v229 = vpop.f32.mrb[0].mxu0
  %v230 = vadd.f32 %v128, %v229
  %231 = vmatprep.mubr.f32.mxu0 0.0
  %232 = vmatmul.mubr.f32.gmra.mrb[0].mxu0 %v141
  %v233 = vpop.f32.mrb[0].mxu0
  %v234 = vadd.f32 %v124, %v233
  %v235 = vpop.f32.mrb[0].mxu0
  %v236 = vadd.f32 %v128, %v235
  %237 = vmatprep.mubr.f32.mxu0 0.0
  %238 = vmatmul.mubr.f32.gmra.mrb[0].mxu0 %v144
  %v239 = vpop.f32.mrb[0].mxu0
  %v240 = vadd.f32 %v124, %v239
  %v241 = vpop.f32.mrb[0].mxu0
  %v242 = vadd.f32 %v128, %v241
  %243 = vmatprep.mubr.f32.mxu0 0.0
  %244 = vmatmul.mubr.f32.gmra.mrb[0].mxu0 %v147
  %v245 = vpop.f32.mrb[0].mxu0
  %v246 = vadd.f32 %v124, %v245
  %v247 = vpop.f32.mrb[0].mxu0
  %v248 = vadd.f32 %v128, %v247
  %249 = vmatprep.mubr.f32.mxu0 0.0
  %250 = vmatmul.mubr.f32.gmra.mrb[0].mxu0 %v150
  %v251 = vpop.f32.mrb[0].mxu0
  %v252 = vadd.f32 %v124, %v251
  %v253 = vpop.f32.mrb[0].mxu0
  %v254 = vadd.f32 %v128, %v253
  %255 = vmatprep.mubr.f32.mxu0 0.0
  %256 = vmatmul.mubr.f32.gmra.mrb[0].mxu0 %v153
  %v257 = vpop.f32.mrb[0].mxu0
  %v258 = vadd.f32 %v124, %v257
  %v259 = vpop.f32.mrb[0].mxu0
  %v260 = vadd.f32 %v128, %v259
  %261 = vmatprep.mubr.f32.mxu0 0.0
  %262 = vmatmul.mubr.f32.gmra.mrb[0].mxu0 %v156
  %v263 = vpop.f32.mrb[0].mxu0
  %v264 = vadd.f32 %v124, %v263
  %v265 = vpop.f32.mrb[0].mxu0
  %v266 = vadd.f32 %v128, %v265
  %267 = vmatprep.mubr.f32.mxu0 0.0
  %268 = vmatmul.mubr.f32.gmra.mrb[0].mxu0 %v159
  %v269 = vpop.f32.mrb[0].mxu0
  %v270 = vadd.f32 %v124, %v269
  %v271 = vpop.f32.mrb[0].mxu0
  %v272 = vadd.f32 %v128, %v271
  %273 = vdwg.mxu0
  %274 = vmatprep.subr.mxu0 0.0
  %275 = vmatpush1.msra.mxu0 %v40
  %276 = vmatprep.subr.mxu0 0.0
  %277 = vmatpush1.msra.mxu0 %v43
  %278 = vmatprep.subr.mxu0 0.0
  %279 = vmatpush1.msra.mxu0 0.0
  %280 = vmatprep.subr.mxu0 0.0
  %281 = vmatpush1.msra.mxu0 0.0
  %282 = vmatprep.subr.mxu0 0.0
  %283 = vmatpush1.msra.mxu0 0.0
  %284 = vmatprep.subr.mxu0 0.0
  %285 = vmatpush1.msra.mxu0 0.0
  %286 = vmatprep.subr.mxu0 0.0
  %287 = vmatpush1.msra.mxu0 0.0
  %288 = vmatprep.subr.mxu0 0.0
  %289 = vmatpush1.msra.mxu0 0.0
  %290 = vmatprep.subr.mxu0 0.0
  %291 = vmatpush1.msra.mxu0 0.0
  %292 = vmatprep.subr.mxu0 0.0
  %293 = vmatpush1.msra.mxu0 0.0
  %294 = vmatprep.subr.mxu0 0.0
  %295 = vmatpush1.msra.mxu0 0.0
  %296 = vmatprep.subr.mxu0 0.0
  %297 = vmatpush1.msra.mxu0 0.0
  %298 = vmatprep.subr.mxu0 0.0
  %299 = vmatpush1.msra.mxu0 0.0
  %300 = vmatprep.subr.mxu0 0.0
  %301 = vmatpush1.msra.mxu0 0.0
  %302 = vmatprep.subr.mxu0 0.0
  %303 = vmatpush1.msra.mxu0 0.0
  %304 = vmatprep.subr.mxu0 0.0
  %305 = vmatpush1.msra.mxu0 0.0
  %306 = vmatprep.subr.mxu0 0.0
  %307 = vmatpush1.msra.mxu0 0.0
  %308 = vmatprep.subr.mxu0 0.0
  %309 = vmatpush1.msra.mxu0 0.0
  %310 = vmatprep.subr.mxu0 0.0
  %311 = vmatpush1.msra.mxu0 0.0
  %312 = vmatprep.subr.mxu0 0.0
  %313 = vmatpush1.msra.mxu0 0.0
  %314 = vmatprep.subr.mxu0 0.0
  %315 = vmatpush1.msra.mxu0 0.0
  %316 = vmatprep.subr.mxu0 0.0
  %317 = vmatpush1.msra.mxu0 0.0
  %318 = vmatprep.subr.mxu0 0.0
  %319 = vmatpush1.msra.mxu0 0.0
  %320 = vmatprep.subr.mxu0 0.0
  %321 = vmatpush1.msra.mxu0 0.0
  %322 = vmatprep.subr.mxu0 0.0
  %323 = vmatpush1.msra.mxu0 0.0
  %324 = vmatprep.subr.mxu0 0.0
  %325 = vmatpush1.msra.mxu0 0.0
  %326 = vmatprep.subr.mxu0 0.0
  %327 = vmatpush1.msra.mxu0 0.0
  %328 = vmatprep.subr.mxu0 0.0
  %329 = vmatpush1.msra.mxu0 0.0
  %330 = vmatprep.subr.mxu0 0.0
  %331 = vmatpush1.msra.mxu0 0.0
  %332 = vmatprep.subr.mxu0 0.0
  %333 = vmatpush1.msra.mxu0 0.0
  %334 = vmatprep.subr.mxu0 0.0
  %335 = vmatpush1.msra.mxu0 0.0
  %336 = vmatprep.subr.mxu0 0.0
  %337 = vmatpush1.msra.mxu0 0.0
  %338 = vmatprep.mubr.f32.mxu0 0.0
  %339 = vmatmul.mubr.f32.gmra.mrb[0].mxu0 %v138
  %v340 = vpop.f32.mrb[0].mxu0
  %v341 = vadd.f32 %v132, %v340
  %v342 = vpop.f32.mrb[0].mxu0
  %343 = vmatprep.mubr.f32.mxu0 0.0
  %344 = vmatmul.mubr.f32.gmra.mrb[0].mxu0 %v141
  %v345 = vpop.f32.mrb[0].mxu0
  %v346 = vadd.f32 %v132, %v345
  %v347 = vpop.f32.mrb[0].mxu0
  %348 = vmatprep.mubr.f32.mxu0 0.0
  %349 = vmatmul.mubr.f32.gmra.mrb[0].mxu0 %v144
  %v350 = vpop.f32.mrb[0].mxu0
  %v351 = vadd.f32 %v132, %v350
  %v352 = vpop.f32.mrb[0].mxu0
  %353 = vmatprep.mubr.f32.mxu0 0.0
  %354 = vmatmul.mubr.f32.gmra.mrb[0].mxu0 %v147
  %v355 = vpop.f32.mrb[0].mxu0
  %v356 = vadd.f32 %v132, %v355
  %v357 = vpop.f32.mrb[0].mxu0
  %358 = vmatprep.mubr.f32.mxu0 0.0
  %359 = vmatmul.mubr.f32.gmra.mrb[0].mxu0 %v150
  %v360 = vpop.f32.mrb[0].mxu0
  %v361 = vadd.f32 %v132, %v360
  %v362 = vpop.f32.mrb[0].mxu0
  %363 = vmatprep.mubr.f32.mxu0 0.0
  %364 = vmatmul.mubr.f32.gmra.mrb[0].mxu0 %v153
  %v365 = vpop.f32.mrb[0].mxu0
  %v366 = vadd.f32 %v132, %v365
  %v367 = vpop.f32.mrb[0].mxu0
  %368 = vmatprep.mubr.f32.mxu0 0.0
  %369 = vmatmul.mubr.f32.gmra.mrb[0].mxu0 %v156
  %v370 = vpop.f32.mrb[0].mxu0
  %v371 = vadd.f32 %v132, %v370
  %v372 = vpop.f32.mrb[0].mxu0
  %373 = vmatprep.mubr.f32.mxu0 0.0
  %374 = vmatmul.mubr.f32.gmra.mrb[0].mxu0 %v159
  %v375 = vpop.f32.mrb[0].mxu0
  %v376 = vadd.f32 %v132, %v375
  %v377 = vpop.f32.mrb[0].mxu0
  %378 = vdwg.mxu0
  %vm379 = vcmask 261120
  %v381 = vsel %vm379, 0.0, 0
  %383 = vmatprep.subr.mxu0 %v57
  %384 = vmatpush1.msra.mxu0 %v56
  %385 = vmatprep.subr.mxu0 %v60
  %386 = vmatpush1.msra.mxu0 %v59
  %387 = vmatprep.subr.mxu0 %v63
  %388 = vmatpush1.msra.mxu0 %v62
  %389 = vmatprep.subr.mxu0 %v66
  %390 = vmatpush1.msra.mxu0 %v65
  %391 = vmatprep.subr.mxu0 0.0
  %392 = vmatpush1.msra.mxu0 0.0
  %393 = vmatprep.subr.mxu0 0.0
  %394 = vmatpush1.msra.mxu0 0.0
  %395 = vmatprep.subr.mxu0 0.0
  %396 = vmatpush1.msra.mxu0 0.0
  %397 = vmatprep.subr.mxu0 0.0
  %398 = vmatpush1.msra.mxu0 0.0
  %399 = vmatprep.subr.mxu0 0.0
  %400 = vmatpush1.msra.mxu0 0.0
  %401 = vmatprep.subr.mxu0 0.0
  %402 = vmatpush1.msra.mxu0 0.0
  %403 = vmatprep.subr.mxu0 0.0
  %404 = vmatpush1.msra.mxu0 0.0
  %405 = vmatprep.subr.mxu0 0.0
  %406 = vmatpush1.msra.mxu0 0.0
  %407 = vmatprep.subr.mxu0 0.0
  %408 = vmatpush1.msra.mxu0 0.0
  %409 = vmatprep.subr.mxu0 0.0
  %410 = vmatpush1.msra.mxu0 0.0
  %411 = vmatprep.subr.mxu0 0.0
  %412 = vmatpush1.msra.mxu0 0.0
  %413 = vmatprep.subr.mxu0 0.0
  %414 = vmatpush1.msra.mxu0 0.0
  %415 = vmatprep.subr.mxu0 0.0
  %416 = vmatpush1.msra.mxu0 0.0
  %417 = vmatprep.subr.mxu0 0.0
  %418 = vmatpush1.msra.mxu0 0.0
  %419 = vmatprep.subr.mxu0 0.0
  %420 = vmatpush1.msra.mxu0 0.0
  %421 = vmatprep.subr.mxu0 0.0
  %422 = vmatpush1.msra.mxu0 0.0
  %423 = vmatprep.subr.mxu0 0.0
  %424 = vmatpush1.msra.mxu0 0.0
  %425 = vmatprep.subr.mxu0 0.0
  %426 = vmatpush1.msra.mxu0 0.0
  %427 = vmatprep.subr.mxu0 0.0
  %428 = vmatpush1.msra.mxu0 0.0
  %429 = vmatprep.subr.mxu0 0.0
  %430 = vmatpush1.msra.mxu0 0.0
  %431 = vmatprep.subr.mxu0 0.0
  %432 = vmatpush1.msra.mxu0 0.0
  %433 = vmatprep.subr.mxu0 0.0
  %434 = vmatpush1.msra.mxu0 0.0
  %435 = vmatprep.subr.mxu0 0.0
  %436 = vmatpush1.msra.mxu0 0.0
  %437 = vmatprep.subr.mxu0 0.0
  %438 = vmatpush1.msra.mxu0 0.0
  %439 = vmatprep.subr.mxu0 0.0
  %440 = vmatpush1.msra.mxu0 0.0
  %441 = vmatprep.subr.mxu0 0.0
  %442 = vmatpush1.msra.mxu0 0.0
  %443 = vmatprep.subr.mxu0 0.0
  %444 = vmatpush1.msra.mxu0 0.0
  %445 = vmatprep.subr.mxu0 0.0
  %446 = vmatpush1.msra.mxu0 0.0
  %447 = vmatprep.mubr.f32.mxu0 0.0
  %448 = vmatmul.mubr.f32.gmra.mrb[0].mxu0 %v381
  %v449 = vpop.f32.mrb[0].mxu0
  %v450 = vadd.f32 0.0, %v449
  %v451 = vpop.f32.mrb[0].mxu0
  %v452 = vadd.f32 0.0, %v451
  %453 = vdwg.mxu0
  %454 = vmatprep.subr.mxu0 0.0
  %455 = vmatpush1.msra.mxu0 %v58
  %456 = vmatprep.subr.mxu0 0.0
  %457 = vmatpush1.msra.mxu0 %v61
  %458 = vmatprep.subr.mxu0 0.0
  %459 = vmatpush1.msra.mxu0 %v64
  %460 = vmatprep.subr.mxu0 0.0
  %461 = vmatpush1.msra.mxu0 %v67
  %462 = vmatprep.subr.mxu0 0.0
  %463 = vmatpush1.msra.mxu0 0.0
  %464 = vmatprep.subr.mxu0 0.0
  %465 = vmatpush1.msra.mxu0 0.0
  %466 = vmatprep.subr.mxu0 0.0
  %467 = vmatpush1.msra.mxu0 0.0
  %468 = vmatprep.subr.mxu0 0.0
  %469 = vmatpush1.msra.mxu0 0.0
  %470 = vmatprep.subr.mxu0 0.0
  %471 = vmatpush1.msra.mxu0 0.0
  %472 = vmatprep.subr.mxu0 0.0
  %473 = vmatpush1.msra.mxu0 0.0
  %474 = vmatprep.subr.mxu0 0.0
  %475 = vmatpush1.msra.mxu0 0.0
  %476 = vmatprep.subr.mxu0 0.0
  %477 = vmatpush1.msra.mxu0 0.0
  %478 = vmatprep.subr.mxu0 0.0
  %479 = vmatpush1.msra.mxu0 0.0
  %480 = vmatprep.subr.mxu0 0.0
  %481 = vmatpush1.msra.mxu0 0.0
  %482 = vmatprep.subr.mxu0 0.0
  %483 = vmatpush1.msra.mxu0 0.0
  %484 = vmatprep.subr.mxu0 0.0
  %485 = vmatpush1.msra.mxu0 0.0
  %486 = vmatprep.subr.mxu0 0.0
  %487 = vmatpush1.msra.mxu0 0.0
  %488 = vmatprep.subr.mxu0 0.0
  %489 = vmatpush1.msra.mxu0 0.0
  %490 = vmatprep.subr.mxu0 0.0
  %491 = vmatpush1.msra.mxu0 0.0
  %492 = vmatprep.subr.mxu0 0.0
  %493 = vmatpush1.msra.mxu0 0.0
  %494 = vmatprep.subr.mxu0 0.0
  %495 = vmatpush1.msra.mxu0 0.0
  %496 = vmatprep.subr.mxu0 0.0
  %497 = vmatpush1.msra.mxu0 0.0
  %498 = vmatprep.subr.mxu0 0.0
  %499 = vmatpush1.msra.mxu0 0.0
  %500 = vmatprep.subr.mxu0 0.0
  %501 = vmatpush1.msra.mxu0 0.0
  %502 = vmatprep.subr.mxu0 0.0
  %503 = vmatpush1.msra.mxu0 0.0
  %504 = vmatprep.subr.mxu0 0.0
  %505 = vmatpush1.msra.mxu0 0.0
  %506 = vmatprep.subr.mxu0 0.0
  %507 = vmatpush1.msra.mxu0 0.0
  %508 = vmatprep.subr.mxu0 0.0
  %509 = vmatpush1.msra.mxu0 0.0
  %510 = vmatprep.subr.mxu0 0.0
  %511 = vmatpush1.msra.mxu0 0.0
  %512 = vmatprep.subr.mxu0 0.0
  %513 = vmatpush1.msra.mxu0 0.0
  %514 = vmatprep.subr.mxu0 0.0
  %515 = vmatpush1.msra.mxu0 0.0
  %516 = vmatprep.subr.mxu0 0.0
  %517 = vmatpush1.msra.mxu0 0.0
  %518 = vmatprep.mubr.f32.mxu0 0.0
  %519 = vmatmul.mubr.f32.gmra.mrb[0].mxu0 %v381
  %v520 = vpop.f32.mrb[0].mxu0
  %v521 = vadd.f32 0.0, %v520
  %v522 = vpop.f32.mrb[0].mxu0
  %523 = vdwg.mxu0
  %v524 = vadd.f32 %v228, %v450
  %v525 = vxor.u32 %v524, 2147483648
  %v526 = vmul.f32 %v525, 1.442695
  %v527 = vpow.pop %v526
  %v528 = vadd.f32 %v527, 1.0
  %v529 = vrcp.pop %v528
  %v530 = vmul.f32 1.0, %v529
  %v531 = vadd.f32 %v230, %v452
  %v532 = vxor.u32 %v531, 2147483648
  %v533 = vmul.f32 %v532, 1.442695
  %v534 = vpow.pop %v533
  %v535 = vadd.f32 %v534, 1.0
  %v536 = vrcp.pop %v535
  %v537 = vmul.f32 1.0, %v536
  %v538 = vadd.f32 %v521, %v103
  %v539 = vmul.f32 %v530, %v538
  %v540 = vadd.f32 %v341, %v539
  %v541 = vtanh.pop %v540
  %v542 = vsub.f32 1.0, %v537
  %v543 = vmul.f32 %v542, %v541
  %v544 = vmul.f32 %v537, 0.0
  %v545 = vadd.f32 %v543, %v544
  %v547 = vsel %vm379, %v545, 0
  %549 = vmatprep.subr.mxu0 %v57
  %550 = vmatpush1.msra.mxu0 %v56
  %551 = vmatprep.subr.mxu0 %v60
  %552 = vmatpush1.msra.mxu0 %v59
  %553 = vmatprep.subr.mxu0 %v63
  %554 = vmatpush1.msra.mxu0 %v62
  %555 = vmatprep.subr.mxu0 %v66
  %556 = vmatpush1.msra.mxu0 %v65
  %557 = vmatprep.subr.mxu0 0.0
  %558 = vmatpush1.msra.mxu0 0.0
  %559 = vmatprep.subr.mxu0 0.0
  %560 = vmatpush1.msra.mxu0 0.0
  %561 = vmatprep.subr.mxu0 0.0
  %562 = vmatpush1.msra.mxu0 0.0
  %563 = vmatprep.subr.mxu0 0.0
  %564 = vmatpush1.msra.mxu0 0.0
  %565 = vmatprep.subr.mxu0 0.0
  %566 = vmatpush1.msra.mxu0 0.0
  %567 = vmatprep.subr.mxu0 0.0
  %568 = vmatpush1.msra.mxu0 0.0
  %569 = vmatprep.subr.mxu0 0.0
  %570 = vmatpush1.msra.mxu0 0.0
  %571 = vmatprep.subr.mxu0 0.0
  %572 = vmatpush1.msra.mxu0 0.0
  %573 = vmatprep.subr.mxu0 0.0
  %574 = vmatpush1.msra.mxu0 0.0
  %575 = vmatprep.subr.mxu0 0.0
  %576 = vmatpush1.msra.mxu0 0.0
  %577 = vmatprep.subr.mxu0 0.0
  %578 = vmatpush1.msra.mxu0 0.0
  %579 = vmatprep.subr.mxu0 0.0
  %580 = vmatpush1.msra.mxu0 0.0
  %581 = vmatprep.subr.mxu0 0.0
  %582 = vmatpush1.msra.mxu0 0.0
  %583 = vmatprep.subr.mxu0 0.0
  %584 = vmatpush1.msra.mxu0 0.0
  %585 = vmatprep.subr.mxu0 0.0
  %586 = vmatpush1.msra.mxu0 0.0
  %587 = vmatprep.subr.mxu0 0.0
  %588 = vmatpush1.msra.mxu0 0.0
  %589 = vmatprep.subr.mxu0 0.0
  %590 = vmatpush1.msra.mxu0 0.0
  %591 = vmatprep.subr.mxu0 0.0
  %592 = vmatpush1.msra.mxu0 0.0
  %593 = vmatprep.subr.mxu0 0.0
  %594 = vmatpush1.msra.mxu0 0.0
  %595 = vmatprep.subr.mxu0 0.0
  %596 = vmatpush1.msra.mxu0 0.0
  %597 = vmatprep.subr.mxu0 0.0
  %598 = vmatpush1.msra.mxu0 0.0
  %599 = vmatprep.subr.mxu0 0.0
  %600 = vmatpush1.msra.mxu0 0.0
  %601 = vmatprep.subr.mxu0 0.0
  %602 = vmatpush1.msra.mxu0 0.0
  %603 = vmatprep.subr.mxu0 0.0
  %604 = vmatpush1.msra.mxu0 0.0
  %605 = vmatprep.subr.mxu0 0.0
  %606 = vmatpush1.msra.mxu0 0.0
  %607 = vmatprep.subr.mxu0 0.0
  %608 = vmatpush1.msra.mxu0 0.0
  %609 = vmatprep.subr.mxu0 0.0
  %610 = vmatpush1.msra.mxu0 0.0
  %611 = vmatprep.subr.mxu0 0.0
  %612 = vmatpush1.msra.mxu0 0.0
  %613 = vmatprep.mubr.f32.mxu0 0.0
  %614 = vmatmul.mubr.f32.gmra.mrb[0].mxu0 %v547
  %v615 = vpop.f32.mrb[0].mxu0
  %v616 = vadd.f32 0.0, %v615
  %v617 = vpop.f32.mrb[0].mxu0
  %v618 = vadd.f32 0.0, %v617
  %619 = vdwg.mxu0
  %620 = vmatprep.subr.mxu0 0.0
  %621 = vmatpush1.msra.mxu0 %v58
  %622 = vmatprep.subr.mxu0 0.0
  %623 = vmatpush1.msra.mxu0 %v61
  %624 = vmatprep.subr.mxu0 0.0
  %625 = vmatpush1.msra.mxu0 %v64
  %626 = vmatprep.subr.mxu0 0.0
  %627 = vmatpush1.msra.mxu0 %v67
  %628 = vmatprep.subr.mxu0 0.0
  %629 = vmatpush1.msra.mxu0 0.0
  %630 = vmatprep.subr.mxu0 0.0
  %631 = vmatpush1.msra.mxu0 0.0
  %632 = vmatprep.subr.mxu0 0.0
  %633 = vmatpush1.msra.mxu0 0.0
  %634 = vmatprep.subr.mxu0 0.0
  %635 = vmatpush1.msra.mxu0 0.0
  %636 = vmatprep.subr.mxu0 0.0
  %637 = vmatpush1.msra.mxu0 0.0
  %638 = vmatprep.subr.mxu0 0.0
  %639 = vmatpush1.msra.mxu0 0.0
  %640 = vmatprep.subr.mxu0 0.0
  %641 = vmatpush1.msra.mxu0 0.0
  %642 = vmatprep.subr.mxu0 0.0
  %643 = vmatpush1.msra.mxu0 0.0
  %644 = vmatprep.subr.mxu0 0.0
  %645 = vmatpush1.msra.mxu0 0.0
  %646 = vmatprep.subr.mxu0 0.0
  %647 = vmatpush1.msra.mxu0 0.0
  %648 = vmatprep.subr.mxu0 0.0
  %649 = vmatpush1.msra.mxu0 0.0
  %650 = vmatprep.subr.mxu0 0.0
  %651 = vmatpush1.msra.mxu0 0.0
  %652 = vmatprep.subr.mxu0 0.0
  %653 = vmatpush1.msra.mxu0 0.0
  %654 = vmatprep.subr.mxu0 0.0
  %655 = vmatpush1.msra.mxu0 0.0
  %656 = vmatprep.subr.mxu0 0.0
  %657 = vmatpush1.msra.mxu0 0.0
  %658 = vmatprep.subr.mxu0 0.0
  %659 = vmatpush1.msra.mxu0 0.0
  %660 = vmatprep.subr.mxu0 0.0
  %661 = vmatpush1.msra.mxu0 0.0
  %662 = vmatprep.subr.mxu0 0.0
  %663 = vmatpush1.msra.mxu0 0.0
  %664 = vmatprep.subr.mxu0 0.0
  %665 = vmatpush1.msra.mxu0 0.0
  %666 = vmatprep.subr.mxu0 0.0
  %667 = vmatpush1.msra.mxu0 0.0
  %668 = vmatprep.subr.mxu0 0.0
  %669 = vmatpush1.msra.mxu0 0.0
  %670 = vmatprep.subr.mxu0 0.0
  %671 = vmatpush1.msra.mxu0 0.0
  %672 = vmatprep.subr.mxu0 0.0
  %673 = vmatpush1.msra.mxu0 0.0
  %674 = vmatprep.subr.mxu0 0.0
  %675 = vmatpush1.msra.mxu0 0.0
  %676 = vmatprep.subr.mxu0 0.0
  %677 = vmatpush1.msra.mxu0 0.0
  %678 = vmatprep.subr.mxu0 0.0
  %679 = vmatpush1.msra.mxu0 0.0
  %680 = vmatprep.subr.mxu0 0.0
  %681 = vmatpush1.msra.mxu0 0.0
  %682 = vmatprep.subr.mxu0 0.0
  %683 = vmatpush1.msra.mxu0 0.0
  %684 = vmatprep.mubr.f32.mxu0 0.0
  %685 = vmatmul.mubr.f32.gmra.mrb[0].mxu0 %v547
  %v686 = vpop.f32.mrb[0].mxu0
  %v687 = vadd.f32 0.0, %v686
  %v688 = vpop.f32.mrb[0].mxu0
  %689 = vdwg.mxu0
  %v690 = vadd.f32 %v234, %v616
  %v691 = vxor.u32 %v690, 2147483648
  %v692 = vmul.f32 %v691, 1.442695
  %v693 = vpow.pop %v692
  %v694 = vadd.f32 %v693, 1.0
  %v695 = vrcp.pop %v694
  %v696 = vmul.f32 1.0, %v695
  %v697 = vadd.f32 %v236, %v618
  %v698 = vxor.u32 %v697, 2147483648
  %v699 = vmul.f32 %v698, 1.442695
  %v700 = vpow.pop %v699
  %v701 = vadd.f32 %v700, 1.0
  %v702 = vrcp.pop %v701
  %v703 = vmul.f32 1.0, %v702
  %v704 = vadd.f32 %v687, %v103
  %v705 = vmul.f32 %v696, %v704
  %v706 = vadd.f32 %v346, %v705
  %v707 = vtanh.pop %v706
  %v708 = vsub.f32 1.0, %v703
  %v709 = vmul.f32 %v708, %v707
  %v710 = vmul.f32 %v703, %v545
  %v711 = vadd.f32 %v709, %v710
  %712 = vmatprep.subr.mxu0 %v45
  %713 = vmatpush1.msra.mxu0 %v44
  %714 = vmatprep.subr.mxu0 %v48
  %715 = vmatpush1.msra.mxu0 %v47
  %716 = vmatprep.subr.mxu0 %v51
  %717 = vmatpush1.msra.mxu0 %v50
  %718 = vmatprep.subr.mxu0 %v54
  %719 = vmatpush1.msra.mxu0 %v53
  %720 = vmatprep.subr.mxu0 0.0
  %721 = vmatpush1.msra.mxu0 0.0
  %722 = vmatprep.subr.mxu0 0.0
  %723 = vmatpush1.msra.mxu0 0.0
  %724 = vmatprep.subr.mxu0 0.0
  %725 = vmatpush1.msra.mxu0 0.0
  %726 = vmatprep.subr.mxu0 0.0
  %727 = vmatpush1.msra.mxu0 0.0
  %728 = vmatprep.subr.mxu0 0.0
  %729 = vmatpush1.msra.mxu0 0.0
  %730 = vmatprep.subr.mxu0 0.0
  %731 = vmatpush1.msra.mxu0 0.0
  %732 = vmatprep.subr.mxu0 0.0
  %733 = vmatpush1.msra.mxu0 0.0
  %734 = vmatprep.subr.mxu0 0.0
  %735 = vmatpush1.msra.mxu0 0.0
  %736 = vmatprep.subr.mxu0 0.0
  %737 = vmatpush1.msra.mxu0 0.0
  %738 = vmatprep.subr.mxu0 0.0
  %739 = vmatpush1.msra.mxu0 0.0
  %740 = vmatprep.subr.mxu0 0.0
  %741 = vmatpush1.msra.mxu0 0.0
  %742 = vmatprep.subr.mxu0 0.0
  %743 = vmatpush1.msra.mxu0 0.0
  %744 = vmatprep.subr.mxu0 0.0
  %745 = vmatpush1.msra.mxu0 0.0
  %746 = vmatprep.subr.mxu0 0.0
  %747 = vmatpush1.msra.mxu0 0.0
  %748 = vmatprep.subr.mxu0 0.0
  %749 = vmatpush1.msra.mxu0 0.0
  %750 = vmatprep.subr.mxu0 0.0
  %751 = vmatpush1.msra.mxu0 0.0
  %752 = vmatprep.subr.mxu0 0.0
  %753 = vmatpush1.msra.mxu0 0.0
  %754 = vmatprep.subr.mxu0 0.0
  %755 = vmatpush1.msra.mxu0 0.0
  %756 = vmatprep.subr.mxu0 0.0
  %757 = vmatpush1.msra.mxu0 0.0
  %758 = vmatprep.subr.mxu0 0.0
  %759 = vmatpush1.msra.mxu0 0.0
  %760 = vmatprep.subr.mxu0 0.0
  %761 = vmatpush1.msra.mxu0 0.0
  %762 = vmatprep.subr.mxu0 0.0
  %763 = vmatpush1.msra.mxu0 0.0
  %764 = vmatprep.subr.mxu0 0.0
  %765 = vmatpush1.msra.mxu0 0.0
  %766 = vmatprep.subr.mxu0 0.0
  %767 = vmatpush1.msra.mxu0 0.0
  %768 = vmatprep.subr.mxu0 0.0
  %769 = vmatpush1.msra.mxu0 0.0
  %770 = vmatprep.subr.mxu0 0.0
  %771 = vmatpush1.msra.mxu0 0.0
  %772 = vmatprep.subr.mxu0 0.0
  %773 = vmatpush1.msra.mxu0 0.0
  %774 = vmatprep.subr.mxu0 0.0
  %775 = vmatpush1.msra.mxu0 0.0
  %776 = vmatprep.mubr.f32.mxu0 0.0
  %777 = vmatmul.mubr.f32.gmra.mrb[0].mxu0 %v547
  %v778 = vpop.f32.mrb[0].mxu0
  %v779 = vadd.f32 %v86, %v778
  %v780 = vpop.f32.mrb[0].mxu0
  %v781 = vadd.f32 %v90, %v780
  %782 = vdwg.mxu0
  %783 = vmatprep.subr.mxu0 0.0
  %784 = vmatpush1.msra.mxu0 %v46
  %785 = vmatprep.subr.mxu0 0.0
  %786 = vmatpush1.msra.mxu0 %v49
  %787 = vmatprep.subr.mxu0 0.0
  %788 = vmatpush1.msra.mxu0 %v52
  %789 = vmatprep.subr.mxu0 0.0
  %790 = vmatpush1.msra.mxu0 %v55
  %791 = vmatprep.subr.mxu0 0.0
  %792 = vmatpush1.msra.mxu0 0.0
  %793 = vmatprep.subr.mxu0 0.0
  %794 = vmatpush1.msra.mxu0 0.0
  %795 = vmatprep.subr.mxu0 0.0
  %796 = vmatpush1.msra.mxu0 0.0
  %797 = vmatprep.subr.mxu0 0.0
  %798 = vmatpush1.msra.mxu0 0.0
  %799 = vmatprep.subr.mxu0 0.0
  %800 = vmatpush1.msra.mxu0 0.0
  %801 = vmatprep.subr.mxu0 0.0
  %802 = vmatpush1.msra.mxu0 0.0
  %803 = vmatprep.subr.mxu0 0.0
  %804 = vmatpush1.msra.mxu0 0.0
  %805 = vmatprep.subr.mxu0 0.0
  %806 = vmatpush1.msra.mxu0 0.0
  %807 = vmatprep.subr.mxu0 0.0
  %808 = vmatpush1.msra.mxu0 0.0
  %809 = vmatprep.subr.mxu0 0.0
  %810 = vmatpush1.msra.mxu0 0.0
  %811 = vmatprep.subr.mxu0 0.0
  %812 = vmatpush1.msra.mxu0 0.0
  %813 = vmatprep.subr.mxu0 0.0
  %814 = vmatpush1.msra.mxu0 0.0
  %815 = vmatprep.subr.mxu0 0.0
  %816 = vmatpush1.msra.mxu0 0.0
  %817 = vmatprep.subr.mxu0 0.0
  %818 = vmatpush1.msra.mxu0 0.0
  %819 = vmatprep.subr.mxu0 0.0
  %820 = vmatpush1.msra.mxu0 0.0
  %821 = vmatprep.subr.mxu0 0.0
  %822 = vmatpush1.msra.mxu0 0.0
  %823 = vmatprep.subr.mxu0 0.0
  %824 = vmatpush1.msra.mxu0 0.0
  %825 = vmatprep.subr.mxu0 0.0
  %826 = vmatpush1.msra.mxu0 0.0
  %827 = vmatprep.subr.mxu0 0.0
  %828 = vmatpush1.msra.mxu0 0.0
  %829 = vmatprep.subr.mxu0 0.0
  %830 = vmatpush1.msra.mxu0 0.0
  %831 = vmatprep.subr.mxu0 0.0
  %832 = vmatpush1.msra.mxu0 0.0
  %833 = vmatprep.subr.mxu0 0.0
  %834 = vmatpush1.msra.mxu0 0.0
  %835 = vmatprep.subr.mxu0 0.0
  %836 = vmatpush1.msra.mxu0 0.0
  %837 = vmatprep.subr.mxu0 0.0
  %838 = vmatpush1.msra.mxu0 0.0
  %839 = vmatprep.subr.mxu0 0.0
  %840 = vmatpush1.msra.mxu0 0.0
  %841 = vmatprep.subr.mxu0 0.0
  %842 = vmatpush1.msra.mxu0 0.0
  %843 = vmatprep.subr.mxu0 0.0
  %844 = vmatpush1.msra.mxu0 0.0
  %845 = vmatprep.subr.mxu0 0.0
  %846 = vmatpush1.msra.mxu0 0.0
  %847 = vmatprep.mubr.f32.mxu0 0.0
  %848 = vmatmul.mubr.f32.gmra.mrb[0].mxu0 %v547
  %v849 = vpop.f32.mrb[0].mxu0
  %v850 = vadd.f32 %v94, %v849
  %v851 = vpop.f32.mrb[0].mxu0
  %852 = vdwg.mxu0
  %853 = vmatprep.subr.mxu0 %v69
  %854 = vmatpush1.msra.mxu0 %v68
  %855 = vmatprep.subr.mxu0 %v72
  %856 = vmatpush1.msra.mxu0 %v71
  %857 = vmatprep.subr.mxu0 %v75
  %858 = vmatpush1.msra.mxu0 %v74
  %859 = vmatprep.subr.mxu0 %v78
  %860 = vmatpush1.msra.mxu0 %v77
  %861 = vmatprep.subr.mxu0 0.0
  %862 = vmatpush1.msra.mxu0 0.0
  %863 = vmatprep.subr.mxu0 0.0
  %864 = vmatpush1.msra.mxu0 0.0
  %865 = vmatprep.subr.mxu0 0.0
  %866 = vmatpush1.msra.mxu0 0.0
  %867 = vmatprep.subr.mxu0 0.0
  %868 = vmatpush1.msra.mxu0 0.0
  %869 = vmatprep.subr.mxu0 0.0
  %870 = vmatpush1.msra.mxu0 0.0
  %871 = vmatprep.subr.mxu0 0.0
  %872 = vmatpush1.msra.mxu0 0.0
  %873 = vmatprep.subr.mxu0 0.0
  %874 = vmatpush1.msra.mxu0 0.0
  %875 = vmatprep.subr.mxu0 0.0
  %876 = vmatpush1.msra.mxu0 0.0
  %877 = vmatprep.subr.mxu0 0.0
  %878 = vmatpush1.msra.mxu0 0.0
  %879 = vmatprep.subr.mxu0 0.0
  %880 = vmatpush1.msra.mxu0 0.0
  %881 = vmatprep.subr.mxu0 0.0
  %882 = vmatpush1.msra.mxu0 0.0
  %883 = vmatprep.subr.mxu0 0.0
  %884 = vmatpush1.msra.mxu0 0.0
  %885 = vmatprep.subr.mxu0 0.0
  %886 = vmatpush1.msra.mxu0 0.0
  %887 = vmatprep.subr.mxu0 0.0
  %888 = vmatpush1.msra.mxu0 0.0
  %889 = vmatprep.subr.mxu0 0.0
  %890 = vmatpush1.msra.mxu0 0.0
  %891 = vmatprep.subr.mxu0 0.0
  %892 = vmatpush1.msra.mxu0 0.0
  %893 = vmatprep.subr.mxu0 0.0
  %894 = vmatpush1.msra.mxu0 0.0
  %895 = vmatprep.subr.mxu0 0.0
  %896 = vmatpush1.msra.mxu0 0.0
  %897 = vmatprep.subr.mxu0 0.0
  %898 = vmatpush1.msra.mxu0 0.0
  %899 = vmatprep.subr.mxu0 0.0
  %900 = vmatpush1.msra.mxu0 0.0
  %901 = vmatprep.subr.mxu0 0.0
  %902 = vmatpush1.msra.mxu0 0.0
  %903 = vmatprep.subr.mxu0 0.0
  %904 = vmatpush1.msra.mxu0 0.0
  %905 = vmatprep.subr.mxu0 0.0
  %906 = vmatpush1.msra.mxu0 0.0
  %907 = vmatprep.subr.mxu0 0.0
  %908 = vmatpush1.msra.mxu0 0.0
  %909 = vmatprep.subr.mxu0 0.0
  %910 = vmatpush1.msra.mxu0 0.0
  %911 = vmatprep.subr.mxu0 0.0
  %912 = vmatpush1.msra.mxu0 0.0
  %913 = vmatprep.subr.mxu0 0.0
  %914 = vmatpush1.msra.mxu0 0.0
  %915 = vmatprep.subr.mxu0 0.0
  %916 = vmatpush1.msra.mxu0 0.0
  %917 = vmatprep.mubr.f32.mxu0 0.0
  %918 = vmatmul.mubr.f32.gmra.mrb[0].mxu0 %v381
  %v919 = vpop.f32.mrb[0].mxu0
  %v920 = vadd.f32 0.0, %v919
  %v921 = vpop.f32.mrb[0].mxu0
  %v922 = vadd.f32 0.0, %v921
  %923 = vdwg.mxu0
  %924 = vmatprep.subr.mxu0 0.0
  %925 = vmatpush1.msra.mxu0 %v70
  %926 = vmatprep.subr.mxu0 0.0
  %927 = vmatpush1.msra.mxu0 %v73
  %928 = vmatprep.subr.mxu0 0.0
  %929 = vmatpush1.msra.mxu0 %v76
  %930 = vmatprep.subr.mxu0 0.0
  %931 = vmatpush1.msra.mxu0 %v79
  %932 = vmatprep.subr.mxu0 0.0
  %933 = vmatpush1.msra.mxu0 0.0
  %934 = vmatprep.subr.mxu0 0.0
  %935 = vmatpush1.msra.mxu0 0.0
  %936 = vmatprep.subr.mxu0 0.0
  %937 = vmatpush1.msra.mxu0 0.0
  %938 = vmatprep.subr.mxu0 0.0
  %939 = vmatpush1.msra.mxu0 0.0
  %940 = vmatprep.subr.mxu0 0.0
  %941 = vmatpush1.msra.mxu0 0.0
  %942 = vmatprep.subr.mxu0 0.0
  %943 = vmatpush1.msra.mxu0 0.0
  %944 = vmatprep.subr.mxu0 0.0
  %945 = vmatpush1.msra.mxu0 0.0
  %946 = vmatprep.subr.mxu0 0.0
  %947 = vmatpush1.msra.mxu0 0.0
  %948 = vmatprep.subr.mxu0 0.0
  %949 = vmatpush1.msra.mxu0 0.0
  %950 = vmatprep.subr.mxu0 0.0
  %951 = vmatpush1.msra.mxu0 0.0
  %952 = vmatprep.subr.mxu0 0.0
  %953 = vmatpush1.msra.mxu0 0.0
  %954 = vmatprep.subr.mxu0 0.0
  %955 = vmatpush1.msra.mxu0 0.0
  %956 = vmatprep.subr.mxu0 0.0
  %957 = vmatpush1.msra.mxu0 0.0
  %958 = vmatprep.subr.mxu0 0.0
  %959 = vmatpush1.msra.mxu0 0.0
  %960 = vmatprep.subr.mxu0 0.0
  %961 = vmatpush1.msra.mxu0 0.0
  %962 = vmatprep.subr.mxu0 0.0
  %963 = vmatpush1.msra.mxu0 0.0
  %964 = vmatprep.subr.mxu0 0.0
  %965 = vmatpush1.msra.mxu0 0.0
  %966 = vmatprep.subr.mxu0 0.0
  %967 = vmatpush1.msra.mxu0 0.0
  %968 = vmatprep.subr.mxu0 0.0
  %969 = vmatpush1.msra.mxu0 0.0
  %970 = vmatprep.subr.mxu0 0.0
  %971 = vmatpush1.msra.mxu0 0.0
  %972 = vmatprep.subr.mxu0 0.0
  %973 = vmatpush1.msra.mxu0 0.0
  %974 = vmatprep.subr.mxu0 0.0
  %975 = vmatpush1.msra.mxu0 0.0
  %976 = vmatprep.subr.mxu0 0.0
  %977 = vmatpush1.msra.mxu0 0.0
  %978 = vmatprep.subr.mxu0 0.0
  %979 = vmatpush1.msra.mxu0 0.0
  %980 = vmatprep.subr.mxu0 0.0
  %981 = vmatpush1.msra.mxu0 0.0
  %982 = vmatprep.subr.mxu0 0.0
  %983 = vmatpush1.msra.mxu0 0.0
  %984 = vmatprep.subr.mxu0 0.0
  %985 = vmatpush1.msra.mxu0 0.0
  %986 = vmatprep.subr.mxu0 0.0
  %987 = vmatpush1.msra.mxu0 0.0
  %988 = vmatprep.mubr.f32.mxu0 0.0
  %989 = vmatmul.mubr.f32.gmra.mrb[0].mxu0 %v381
  %v990 = vpop.f32.mrb[0].mxu0
  %v991 = vadd.f32 0.0, %v990
  %v992 = vpop.f32.mrb[0].mxu0
  %993 = vdwg.mxu0
  %v994 = vadd.f32 %v779, %v920
  %v995 = vxor.u32 %v994, 2147483648
  %v996 = vmul.f32 %v995, 1.442695
  %v997 = vpow.pop %v996
  %v998 = vadd.f32 %v997, 1.0
  %v999 = vrcp.pop %v998
  %v1000 = vmul.f32 1.0, %v999
  %v1001 = vadd.f32 %v781, %v922
  %v1002 = vxor.u32 %v1001, 2147483648
  %v1003 = vmul.f32 %v1002, 1.442695
  %v1004 = vpow.pop %v1003
  %v1005 = vadd.f32 %v1004, 1.0
  %v1006 = vrcp.pop %v1005
  %v1007 = vmul.f32 1.0, %v1006
  %v1008 = vadd.f32 %v991, %v110
  %v1009 = vmul.f32 %v1000, %v1008
  %v1010 = vadd.f32 %v850, %v1009
  %v1011 = vtanh.pop %v1010
  %v1012 = vsub.f32 1.0, %v1007
  %v1013 = vmul.f32 %v1012, %v1011
  %v1014 = vmul.f32 %v1007, 0.0
  %v1015 = vadd.f32 %v1013, %v1014
  %v1017 = vsel %vm379, %v711, 0
  %1019 = vmatprep.subr.mxu0 %v57
  %1020 = vmatpush1.msra.mxu0 %v56
  %1021 = vmatprep.subr.mxu0 %v60
  %1022 = vmatpush1.msra.mxu0 %v59
  %1023 = vmatprep.subr.mxu0 %v63
  %1024 = vmatpush1.msra.mxu0 %v62
  %1025 = vmatprep.subr.mxu0 %v66
  %1026 = vmatpush1.msra.mxu0 %v65
  %1027 = vmatprep.subr.mxu0 0.0
  %1028 = vmatpush1.msra.mxu0 0.0
  %1029 = vmatprep.subr.mxu0 0.0
  %1030 = vmatpush1.msra.mxu0 0.0
  %1031 = vmatprep.subr.mxu0 0.0
  %1032 = vmatpush1.msra.mxu0 0.0
  %1033 = vmatprep.subr.mxu0 0.0
  %1034 = vmatpush1.msra.mxu0 0.0
  %1035 = vmatprep.subr.mxu0 0.0
  %1036 = vmatpush1.msra.mxu0 0.0
  %1037 = vmatprep.subr.mxu0 0.0
  %1038 = vmatpush1.msra.mxu0 0.0
  %1039 = vmatprep.subr.mxu0 0.0
  %1040 = vmatpush1.msra.mxu0 0.0
  %1041 = vmatprep.subr.mxu0 0.0
  %1042 = vmatpush1.msra.mxu0 0.0
  %1043 = vmatprep.subr.mxu0 0.0
  %1044 = vmatpush1.msra.mxu0 0.0
  %1045 = vmatprep.subr.mxu0 0.0
  %1046 = vmatpush1.msra.mxu0 0.0
  %1047 = vmatprep.subr.mxu0 0.0
  %1048 = vmatpush1.msra.mxu0 0.0
  %1049 = vmatprep.subr.mxu0 0.0
  %1050 = vmatpush1.msra.mxu0 0.0
  %1051 = vmatprep.subr.mxu0 0.0
  %1052 = vmatpush1.msra.mxu0 0.0
  %1053 = vmatprep.subr.mxu0 0.0
  %1054 = vmatpush1.msra.mxu0 0.0
  %1055 = vmatprep.subr.mxu0 0.0
  %1056 = vmatpush1.msra.mxu0 0.0
  %1057 = vmatprep.subr.mxu0 0.0
  %1058 = vmatpush1.msra.mxu0 0.0
  %1059 = vmatprep.subr.mxu0 0.0
  %1060 = vmatpush1.msra.mxu0 0.0
  %1061 = vmatprep.subr.mxu0 0.0
  %1062 = vmatpush1.msra.mxu0 0.0
  %1063 = vmatprep.subr.mxu0 0.0
  %1064 = vmatpush1.msra.mxu0 0.0
  %1065 = vmatprep.subr.mxu0 0.0
  %1066 = vmatpush1.msra.mxu0 0.0
  %1067 = vmatprep.subr.mxu0 0.0
  %1068 = vmatpush1.msra.mxu0 0.0
  %1069 = vmatprep.subr.mxu0 0.0
  %1070 = vmatpush1.msra.mxu0 0.0
  %1071 = vmatprep.subr.mxu0 0.0
  %1072 = vmatpush1.msra.mxu0 0.0
  %1073 = vmatprep.subr.mxu0 0.0
  %1074 = vmatpush1.msra.mxu0 0.0
  %1075 = vmatprep.subr.mxu0 0.0
  %1076 = vmatpush1.msra.mxu0 0.0
  %1077 = vmatprep.subr.mxu0 0.0
  %1078 = vmatpush1.msra.mxu0 0.0
  %1079 = vmatprep.subr.mxu0 0.0
  %1080 = vmatpush1.msra.mxu0 0.0
  %1081 = vmatprep.subr.mxu0 0.0
  %1082 = vmatpush1.msra.mxu0 0.0
  %1083 = vmatprep.mubr.f32.mxu0 0.0
  %1084 = vmatmul.mubr.f32.gmra.mrb[0].mxu0 %v1017
  %v1085 = vpop.f32.mrb[0].mxu0
  %v1086 = vadd.f32 0.0, %v1085
  %v1087 = vpop.f32.mrb[0].mxu0
  %v1088 = vadd.f32 0.0, %v1087
  %1089 = vdwg.mxu0
  %1090 = vmatprep.subr.mxu0 0.0
  %1091 = vmatpush1.msra.mxu0 %v58
  %1092 = vmatprep.subr.mxu0 0.0
  %1093 = vmatpush1.msra.mxu0 %v61
  %1094 = vmatprep.subr.mxu0 0.0
  %1095 = vmatpush1.msra.mxu0 %v64
  %1096 = vmatprep.subr.mxu0 0.0
  %1097 = vmatpush1.msra.mxu0 %v67
  %1098 = vmatprep.subr.mxu0 0.0
  %1099 = vmatpush1.msra.mxu0 0.0
  %1100 = vmatprep.subr.mxu0 0.0
  %1101 = vmatpush1.msra.mxu0 0.0
  %1102 = vmatprep.subr.mxu0 0.0
  %1103 = vmatpush1.msra.mxu0 0.0
  %1104 = vmatprep.subr.mxu0 0.0
  %1105 = vmatpush1.msra.mxu0 0.0
  %1106 = vmatprep.subr.mxu0 0.0
  %1107 = vmatpush1.msra.mxu0 0.0
  %1108 = vmatprep.subr.mxu0 0.0
  %1109 = vmatpush1.msra.mxu0 0.0
  %1110 = vmatprep.subr.mxu0 0.0
  %1111 = vmatpush1.msra.mxu0 0.0
  %1112 = vmatprep.subr.mxu0 0.0
  %1113 = vmatpush1.msra.mxu0 0.0
  %1114 = vmatprep.subr.mxu0 0.0
  %1115 = vmatpush1.msra.mxu0 0.0
  %1116 = vmatprep.subr.mxu0 0.0
  %1117 = vmatpush1.msra.mxu0 0.0
  %1118 = vmatprep.subr.mxu0 0.0
  %1119 = vmatpush1.msra.mxu0 0.0
  %1120 = vmatprep.subr.mxu0 0.0
  %1121 = vmatpush1.msra.mxu0 0.0
  %1122 = vmatprep.subr.mxu0 0.0
  %1123 = vmatpush1.msra.mxu0 0.0
  %1124 = vmatprep.subr.mxu0 0.0
  %1125 = vmatpush1.msra.mxu0 0.0
  %1126 = vmatprep.subr.mxu0 0.0
  %1127 = vmatpush1.msra.mxu0 0.0
  %1128 = vmatprep.subr.mxu0 0.0
  %1129 = vmatpush1.msra.mxu0 0.0
  %1130 = vmatprep.subr.mxu0 0.0
  %1131 = vmatpush1.msra.mxu0 0.0
  %1132 = vmatprep.subr.mxu0 0.0
  %1133 = vmatpush1.msra.mxu0 0.0
  %1134 = vmatprep.subr.mxu0 0.0
  %1135 = vmatpush1.msra.mxu0 0.0
  %1136 = vmatprep.subr.mxu0 0.0
  %1137 = vmatpush1.msra.mxu0 0.0
  %1138 = vmatprep.subr.mxu0 0.0
  %1139 = vmatpush1.msra.mxu0 0.0
  %1140 = vmatprep.subr.mxu0 0.0
  %1141 = vmatpush1.msra.mxu0 0.0
  %1142 = vmatprep.subr.mxu0 0.0
  %1143 = vmatpush1.msra.mxu0 0.0
  %1144 = vmatprep.subr.mxu0 0.0
  %1145 = vmatpush1.msra.mxu0 0.0
  %1146 = vmatprep.subr.mxu0 0.0
  %1147 = vmatpush1.msra.mxu0 0.0
  %1148 = vmatprep.subr.mxu0 0.0
  %1149 = vmatpush1.msra.mxu0 0.0
  %1150 = vmatprep.subr.mxu0 0.0
  %1151 = vmatpush1.msra.mxu0 0.0
  %1152 = vmatprep.subr.mxu0 0.0
  %1153 = vmatpush1.msra.mxu0 0.0
  %1154 = vmatprep.mubr.f32.mxu0 0.0
  %1155 = vmatmul.mubr.f32.gmra.mrb[0].mxu0 %v1017
  %v1156 = vpop.f32.mrb[0].mxu0
  %v1157 = vadd.f32 0.0, %v1156
  %v1158 = vpop.f32.mrb[0].mxu0
  %1159 = vdwg.mxu0
  %v1160 = vadd.f32 %v240, %v1086
  %v1161 = vxor.u32 %v1160, 2147483648
  %v1162 = vmul.f32 %v1161, 1.442695
  %v1163 = vpow.pop %v1162
  %v1164 = vadd.f32 %v1163, 1.0
  %v1165 = vrcp.pop %v1164
  %v1166 = vmul.f32 1.0, %v1165
  %v1167 = vadd.f32 %v242, %v1088
  %v1168 = vxor.u32 %v1167, 2147483648
  %v1169 = vmul.f32 %v1168, 1.442695
  %v1170 = vpow.pop %v1169
  %v1171 = vadd.f32 %v1170, 1.0
  %v1172 = vrcp.pop %v1171
  %v1173 = vmul.f32 1.0, %v1172
  %v1174 = vadd.f32 %v1157, %v103
  %v1175 = vmul.f32 %v1166, %v1174
  %v1176 = vadd.f32 %v351, %v1175
  %v1177 = vtanh.pop %v1176
  %v1178 = vsub.f32 1.0, %v1173
  %v1179 = vmul.f32 %v1178, %v1177
  %v1180 = vmul.f32 %v1173, %v711
  %v1181 = vadd.f32 %v1179, %v1180
  %1182 = vmatprep.subr.mxu0 %v45
  %1183 = vmatpush1.msra.mxu0 %v44
  %1184 = vmatprep.subr.mxu0 %v48
  %1185 = vmatpush1.msra.mxu0 %v47
  %1186 = vmatprep.subr.mxu0 %v51
  %1187 = vmatpush1.msra.mxu0 %v50
  %1188 = vmatprep.subr.mxu0 %v54
  %1189 = vmatpush1.msra.mxu0 %v53
  %1190 = vmatprep.subr.mxu0 0.0
  %1191 = vmatpush1.msra.mxu0 0.0
  %1192 = vmatprep.subr.mxu0 0.0
  %1193 = vmatpush1.msra.mxu0 0.0
  %1194 = vmatprep.subr.mxu0 0.0
  %1195 = vmatpush1.msra.mxu0 0.0
  %1196 = vmatprep.subr.mxu0 0.0
  %1197 = vmatpush1.msra.mxu0 0.0
  %1198 = vmatprep.subr.mxu0 0.0
  %1199 = vmatpush1.msra.mxu0 0.0
  %1200 = vmatprep.subr.mxu0 0.0
  %1201 = vmatpush1.msra.mxu0 0.0
  %1202 = vmatprep.subr.mxu0 0.0
  %1203 = vmatpush1.msra.mxu0 0.0
  %1204 = vmatprep.subr.mxu0 0.0
  %1205 = vmatpush1.msra.mxu0 0.0
  %1206 = vmatprep.subr.mxu0 0.0
  %1207 = vmatpush1.msra.mxu0 0.0
  %1208 = vmatprep.subr.mxu0 0.0
  %1209 = vmatpush1.msra.mxu0 0.0
  %1210 = vmatprep.subr.mxu0 0.0
  %1211 = vmatpush1.msra.mxu0 0.0
  %1212 = vmatprep.subr.mxu0 0.0
  %1213 = vmatpush1.msra.mxu0 0.0
  %1214 = vmatprep.subr.mxu0 0.0
  %1215 = vmatpush1.msra.mxu0 0.0
  %1216 = vmatprep.subr.mxu0 0.0
  %1217 = vmatpush1.msra.mxu0 0.0
  %1218 = vmatprep.subr.mxu0 0.0
  %1219 = vmatpush1.msra.mxu0 0.0
  %1220 = vmatprep.subr.mxu0 0.0
  %1221 = vmatpush1.msra.mxu0 0.0
  %1222 = vmatprep.subr.mxu0 0.0
  %1223 = vmatpush1.msra.mxu0 0.0
  %1224 = vmatprep.subr.mxu0 0.0
  %1225 = vmatpush1.msra.mxu0 0.0
  %1226 = vmatprep.subr.mxu0 0.0
  %1227 = vmatpush1.msra.mxu0 0.0
  %1228 = vmatprep.subr.mxu0 0.0
  %1229 = vmatpush1.msra.mxu0 0.0
  %1230 = vmatprep.subr.mxu0 0.0
  %1231 = vmatpush1.msra.mxu0 0.0
  %1232 = vmatprep.subr.mxu0 0.0
  %1233 = vmatpush1.msra.mxu0 0.0
  %1234 = vmatprep.subr.mxu0 0.0
  %1235 = vmatpush1.msra.mxu0 0.0
  %1236 = vmatprep.subr.mxu0 0.0
  %1237 = vmatpush1.msra.mxu0 0.0
  %1238 = vmatprep.subr.mxu0 0.0
  %1239 = vmatpush1.msra.mxu0 0.0
  %1240 = vmatprep.subr.mxu0 0.0
  %1241 = vmatpush1.msra.mxu0 0.0
  %1242 = vmatprep.subr.mxu0 0.0
  %1243 = vmatpush1.msra.mxu0 0.0
  %1244 = vmatprep.subr.mxu0 0.0
  %1245 = vmatpush1.msra.mxu0 0.0
  %1246 = vmatprep.mubr.f32.mxu0 0.0
  %1247 = vmatmul.mubr.f32.gmra.mrb[0].mxu0 %v1017
  %v1248 = vpop.f32.mrb[0].mxu0
  %v1249 = vadd.f32 %v86, %v1248
  %v1250 = vpop.f32.mrb[0].mxu0
  %v1251 = vadd.f32 %v90, %v1250
  %1252 = vdwg.mxu0
  %1253 = vmatprep.subr.mxu0 0.0
  %1254 = vmatpush1.msra.mxu0 %v46
  %1255 = vmatprep.subr.mxu0 0.0
  %1256 = vmatpush1.msra.mxu0 %v49
  %1257 = vmatprep.subr.mxu0 0.0
  %1258 = vmatpush1.msra.mxu0 %v52
  %1259 = vmatprep.subr.mxu0 0.0
  %1260 = vmatpush1.msra.mxu0 %v55
  %1261 = vmatprep.subr.mxu0 0.0
  %1262 = vmatpush1.msra.mxu0 0.0
  %1263 = vmatprep.subr.mxu0 0.0
  %1264 = vmatpush1.msra.mxu0 0.0
  %1265 = vmatprep.subr.mxu0 0.0
  %1266 = vmatpush1.msra.mxu0 0.0
  %1267 = vmatprep.subr.mxu0 0.0
  %1268 = vmatpush1.msra.mxu0 0.0
  %1269 = vmatprep.subr.mxu0 0.0
  %1270 = vmatpush1.msra.mxu0 0.0
  %1271 = vmatprep.subr.mxu0 0.0
  %1272 = vmatpush1.msra.mxu0 0.0
  %1273 = vmatprep.subr.mxu0 0.0
  %1274 = vmatpush1.msra.mxu0 0.0
  %1275 = vmatprep.subr.mxu0 0.0
  %1276 = vmatpush1.msra.mxu0 0.0
  %1277 = vmatprep.subr.mxu0 0.0
  %1278 = vmatpush1.msra.mxu0 0.0
  %1279 = vmatprep.subr.mxu0 0.0
  %1280 = vmatpush1.msra.mxu0 0.0
  %1281 = vmatprep.subr.mxu0 0.0
  %1282 = vmatpush1.msra.mxu0 0.0
  %1283 = vmatprep.subr.mxu0 0.0
  %1284 = vmatpush1.msra.mxu0 0.0
  %1285 = vmatprep.subr.mxu0 0.0
  %1286 = vmatpush1.msra.mxu0 0.0
  %1287 = vmatprep.subr.mxu0 0.0
  %1288 = vmatpush1.msra.mxu0 0.0
  %1289 = vmatprep.subr.mxu0 0.0
  %1290 = vmatpush1.msra.mxu0 0.0
  %1291 = vmatprep.subr.mxu0 0.0
  %1292 = vmatpush1.msra.mxu0 0.0
  %1293 = vmatprep.subr.mxu0 0.0
  %1294 = vmatpush1.msra.mxu0 0.0
  %1295 = vmatprep.subr.mxu0 0.0
  %1296 = vmatpush1.msra.mxu0 0.0
  %1297 = vmatprep.subr.mxu0 0.0
  %1298 = vmatpush1.msra.mxu0 0.0
  %1299 = vmatprep.subr.mxu0 0.0
  %1300 = vmatpush1.msra.mxu0 0.0
  %1301 = vmatprep.subr.mxu0 0.0
  %1302 = vmatpush1.msra.mxu0 0.0
  %1303 = vmatprep.subr.mxu0 0.0
  %1304 = vmatpush1.msra.mxu0 0.0
  %1305 = vmatprep.subr.mxu0 0.0
  %1306 = vmatpush1.msra.mxu0 0.0
  %1307 = vmatprep.subr.mxu0 0.0
  %1308 = vmatpush1.msra.mxu0 0.0
  %1309 = vmatprep.subr.mxu0 0.0
  %1310 = vmatpush1.msra.mxu0 0.0
  %1311 = vmatprep.subr.mxu0 0.0
  %1312 = vmatpush1.msra.mxu0 0.0
  %1313 = vmatprep.subr.mxu0 0.0
  %1314 = vmatpush1.msra.mxu0 0.0
  %1315 = vmatprep.subr.mxu0 0.0
  %1316 = vmatpush1.msra.mxu0 0.0
  %1317 = vmatprep.mubr.f32.mxu0 0.0
  %1318 = vmatmul.mubr.f32.gmra.mrb[0].mxu0 %v1017
  %v1319 = vpop.f32.mrb[0].mxu0
  %v1320 = vadd.f32 %v94, %v1319
  %v1321 = vpop.f32.mrb[0].mxu0
  %1322 = vdwg.mxu0
  %v1324 = vsel %vm379, %v1015, 0
  %1326 = vmatprep.subr.mxu0 %v69
  %1327 = vmatpush1.msra.mxu0 %v68
  %1328 = vmatprep.subr.mxu0 %v72
  %1329 = vmatpush1.msra.mxu0 %v71
  %1330 = vmatprep.subr.mxu0 %v75
  %1331 = vmatpush1.msra.mxu0 %v74
  %1332 = vmatprep.subr.mxu0 %v78
  %1333 = vmatpush1.msra.mxu0 %v77
  %1334 = vmatprep.subr.mxu0 0.0
  %1335 = vmatpush1.msra.mxu0 0.0
  %1336 = vmatprep.subr.mxu0 0.0
  %1337 = vmatpush1.msra.mxu0 0.0
  %1338 = vmatprep.subr.mxu0 0.0
  %1339 = vmatpush1.msra.mxu0 0.0
  %1340 = vmatprep.subr.mxu0 0.0
  %1341 = vmatpush1.msra.mxu0 0.0
  %1342 = vmatprep.subr.mxu0 0.0
  %1343 = vmatpush1.msra.mxu0 0.0
  %1344 = vmatprep.subr.mxu0 0.0
  %1345 = vmatpush1.msra.mxu0 0.0
  %1346 = vmatprep.subr.mxu0 0.0
  %1347 = vmatpush1.msra.mxu0 0.0
  %1348 = vmatprep.subr.mxu0 0.0
  %1349 = vmatpush1.msra.mxu0 0.0
  %1350 = vmatprep.subr.mxu0 0.0
  %1351 = vmatpush1.msra.mxu0 0.0
  %1352 = vmatprep.subr.mxu0 0.0
  %1353 = vmatpush1.msra.mxu0 0.0
  %1354 = vmatprep.subr.mxu0 0.0
  %1355 = vmatpush1.msra.mxu0 0.0
  %1356 = vmatprep.subr.mxu0 0.0
  %1357 = vmatpush1.msra.mxu0 0.0
  %1358 = vmatprep.subr.mxu0 0.0
  %1359 = vmatpush1.msra.mxu0 0.0
  %1360 = vmatprep.subr.mxu0 0.0
  %1361 = vmatpush1.msra.mxu0 0.0
  %1362 = vmatprep.subr.mxu0 0.0
  %1363 = vmatpush1.msra.mxu0 0.0
  %1364 = vmatprep.subr.mxu0 0.0
  %1365 = vmatpush1.msra.mxu0 0.0
  %1366 = vmatprep.subr.mxu0 0.0
  %1367 = vmatpush1.msra.mxu0 0.0
  %1368 = vmatprep.subr.mxu0 0.0
  %1369 = vmatpush1.msra.mxu0 0.0
  %1370 = vmatprep.subr.mxu0 0.0
  %1371 = vmatpush1.msra.mxu0 0.0
  %1372 = vmatprep.subr.mxu0 0.0
  %1373 = vmatpush1.msra.mxu0 0.0
  %1374 = vmatprep.subr.mxu0 0.0
  %1375 = vmatpush1.msra.mxu0 0.0
  %1376 = vmatprep.subr.mxu0 0.0
  %1377 = vmatpush1.msra.mxu0 0.0
  %1378 = vmatprep.subr.mxu0 0.0
  %1379 = vmatpush1.msra.mxu0 0.0
  %1380 = vmatprep.subr.mxu0 0.0
  %1381 = vmatpush1.msra.mxu0 0.0
  %1382 = vmatprep.subr.mxu0 0.0
  %1383 = vmatpush1.msra.mxu0 0.0
  %1384 = vmatprep.subr.mxu0 0.0
  %1385 = vmatpush1.msra.mxu0 0.0
  %1386 = vmatprep.subr.mxu0 0.0
  %1387 = vmatpush1.msra.mxu0 0.0
  %1388 = vmatprep.subr.mxu0 0.0
  %1389 = vmatpush1.msra.mxu0 0.0
  %1390 = vmatprep.mubr.f32.mxu0 0.0
  %1391 = vmatmul.mubr.f32.gmra.mrb[0].mxu0 %v1324
  %v1392 = vpop.f32.mrb[0].mxu0
  %v1393 = vadd.f32 0.0, %v1392
  %v1394 = vpop.f32.mrb[0].mxu0
  %v1395 = vadd.f32 0.0, %v1394
  %1396 = vdwg.mxu0
  %1397 = vmatprep.subr.mxu0 0.0
  %1398 = vmatpush1.msra.mxu0 %v70
  %1399 = vmatprep.subr.mxu0 0.0
  %1400 = vmatpush1.msra.mxu0 %v73
  %1401 = vmatprep.subr.mxu0 0.0
  %1402 = vmatpush1.msra.mxu0 %v76
  %1403 = vmatprep.subr.mxu0 0.0
  %1404 = vmatpush1.msra.mxu0 %v79
  %1405 = vmatprep.subr.mxu0 0.0
  %1406 = vmatpush1.msra.mxu0 0.0
  %1407 = vmatprep.subr.mxu0 0.0
  %1408 = vmatpush1.msra.mxu0 0.0
  %1409 = vmatprep.subr.mxu0 0.0
  %1410 = vmatpush1.msra.mxu0 0.0
  %1411 = vmatprep.subr.mxu0 0.0
  %1412 = vmatpush1.msra.mxu0 0.0
  %1413 = vmatprep.subr.mxu0 0.0
  %1414 = vmatpush1.msra.mxu0 0.0
  %1415 = vmatprep.subr.mxu0 0.0
  %1416 = vmatpush1.msra.mxu0 0.0
  %1417 = vmatprep.subr.mxu0 0.0
  %1418 = vmatpush1.msra.mxu0 0.0
  %1419 = vmatprep.subr.mxu0 0.0
  %1420 = vmatpush1.msra.mxu0 0.0
  %1421 = vmatprep.subr.mxu0 0.0
  %1422 = vmatpush1.msra.mxu0 0.0
  %1423 = vmatprep.subr.mxu0 0.0
  %1424 = vmatpush1.msra.mxu0 0.0
  %1425 = vmatprep.subr.mxu0 0.0
  %1426 = vmatpush1.msra.mxu0 0.0
  %1427 = vmatprep.subr.mxu0 0.0
  %1428 = vmatpush1.msra.mxu0 0.0
  %1429 = vmatprep.subr.mxu0 0.0
  %1430 = vmatpush1.msra.mxu0 0.0
  %1431 = vmatprep.subr.mxu0 0.0
  %1432 = vmatpush1.msra.mxu0 0.0
  %1433 = vmatprep.subr.mxu0 0.0
  %1434 = vmatpush1.msra.mxu0 0.0
  %1435 = vmatprep.subr.mxu0 0.0
  %1436 = vmatpush1.msra.mxu0 0.0
  %1437 = vmatprep.subr.mxu0 0.0
  %1438 = vmatpush1.msra.mxu0 0.0
  %1439 = vmatprep.subr.mxu0 0.0
  %1440 = vmatpush1.msra.mxu0 0.0
  %1441 = vmatprep.subr.mxu0 0.0
  %1442 = vmatpush1.msra.mxu0 0.0
  %1443 = vmatprep.subr.mxu0 0.0
  %1444 = vmatpush1.msra.mxu0 0.0
  %1445 = vmatprep.subr.mxu0 0.0
  %1446 = vmatpush1.msra.mxu0 0.0
  %1447 = vmatprep.subr.mxu0 0.0
  %1448 = vmatpush1.msra.mxu0 0.0
  %1449 = vmatprep.subr.mxu0 0.0
  %1450 = vmatpush1.msra.mxu0 0.0
  %1451 = vmatprep.subr.mxu0 0.0
  %1452 = vmatpush1.msra.mxu0 0.0
  %1453 = vmatprep.subr.mxu0 0.0
  %1454 = vmatpush1.msra.mxu0 0.0
  %1455 = vmatprep.subr.mxu0 0.0
  %1456 = vmatpush1.msra.mxu0 0.0
  %1457 = vmatprep.subr.mxu0 0.0
  %1458 = vmatpush1.msra.mxu0 0.0
  %1459 = vmatprep.subr.mxu0 0.0
  %1460 = vmatpush1.msra.mxu0 0.0
  %1461 = vmatprep.mubr.f32.mxu0 0.0
  %1462 = vmatmul.mubr.f32.gmra.mrb[0].mxu0 %v1324
  %v1463 = vpop.f32.mrb[0].mxu0
  %v1464 = vadd.f32 0.0, %v1463
  %v1465 = vpop.f32.mrb[0].mxu0
  %1466 = vdwg.mxu0
  %v1467 = vadd.f32 %v1249, %v1393
  %v1468 = vxor.u32 %v1467, 2147483648
  %v1469 = vmul.f32 %v1468, 1.442695
  %v1470 = vpow.pop %v1469
  %v1471 = vadd.f32 %v1470, 1.0
  %v1472 = vrcp.pop %v1471
  %v1473 = vmul.f32 1.0, %v1472
  %v1474 = vadd.f32 %v1251, %v1395
  %v1475 = vxor.u32 %v1474, 2147483648
  %v1476 = vmul.f32 %v1475, 1.442695
  %v1477 = vpow.pop %v1476
  %v1478 = vadd.f32 %v1477, 1.0
  %v1479 = vrcp.pop %v1478
  %v1480 = vmul.f32 1.0, %v1479
  %v1481 = vadd.f32 %v1464, %v110
  %v1482 = vmul.f32 %v1473, %v1481
  %v1483 = vadd.f32 %v1320, %v1482
  %v1484 = vtanh.pop %v1483
  %v1485 = vsub.f32 1.0, %v1480
  %v1486 = vmul.f32 %v1485, %v1484
  %v1487 = vmul.f32 %v1480, %v1015
  %v1488 = vadd.f32 %v1486, %v1487
  %v1490 = vsel %vm379, %v1181, 0
  %1492 = vmatprep.subr.mxu0 %v57
  %1493 = vmatpush1.msra.mxu0 %v56
  %1494 = vmatprep.subr.mxu0 %v60
  %1495 = vmatpush1.msra.mxu0 %v59
  %1496 = vmatprep.subr.mxu0 %v63
  %1497 = vmatpush1.msra.mxu0 %v62
  %1498 = vmatprep.subr.mxu0 %v66
  %1499 = vmatpush1.msra.mxu0 %v65
  %1500 = vmatprep.subr.mxu0 0.0
  %1501 = vmatpush1.msra.mxu0 0.0
  %1502 = vmatprep.subr.mxu0 0.0
  %1503 = vmatpush1.msra.mxu0 0.0
  %1504 = vmatprep.subr.mxu0 0.0
  %1505 = vmatpush1.msra.mxu0 0.0
  %1506 = vmatprep.subr.mxu0 0.0
  %1507 = vmatpush1.msra.mxu0 0.0
  %1508 = vmatprep.subr.mxu0 0.0
  %1509 = vmatpush1.msra.mxu0 0.0
  %1510 = vmatprep.subr.mxu0 0.0
  %1511 = vmatpush1.msra.mxu0 0.0
  %1512 = vmatprep.subr.mxu0 0.0
  %1513 = vmatpush1.msra.mxu0 0.0
  %1514 = vmatprep.subr.mxu0 0.0
  %1515 = vmatpush1.msra.mxu0 0.0
  %1516 = vmatprep.subr.mxu0 0.0
  %1517 = vmatpush1.msra.mxu0 0.0
  %1518 = vmatprep.subr.mxu0 0.0
  %1519 = vmatpush1.msra.mxu0 0.0
  %1520 = vmatprep.subr.mxu0 0.0
  %1521 = vmatpush1.msra.mxu0 0.0
  %1522 = vmatprep.subr.mxu0 0.0
  %1523 = vmatpush1.msra.mxu0 0.0
  %1524 = vmatprep.subr.mxu0 0.0
  %1525 = vmatpush1.msra.mxu0 0.0
  %1526 = vmatprep.subr.mxu0 0.0
  %1527 = vmatpush1.msra.mxu0 0.0
  %1528 = vmatprep.subr.mxu0 0.0
  %1529 = vmatpush1.msra.mxu0 0.0
  %1530 = vmatprep.subr.mxu0 0.0
  %1531 = vmatpush1.msra.mxu0 0.0
  %1532 = vmatprep.subr.mxu0 0.0
  %1533 = vmatpush1.msra.mxu0 0.0
  %1534 = vmatprep.subr.mxu0 0.0
  %1535 = vmatpush1.msra.mxu0 0.0
  %1536 = vmatprep.subr.mxu0 0.0
  %1537 = vmatpush1.msra.mxu0 0.0
  %1538 = vmatprep.subr.mxu0 0.0
  %1539 = vmatpush1.msra.mxu0 0.0
  %1540 = vmatprep.subr.mxu0 0.0
  %1541 = vmatpush1.msra.mxu0 0.0
  %1542 = vmatprep.subr.mxu0 0.0
  %1543 = vmatpush1.msra.mxu0 0.0
  %1544 = vmatprep.subr.mxu0 0.0
  %1545 = vmatpush1.msra.mxu0 0.0
  %1546 = vmatprep.subr.mxu0 0.0
  %1547 = vmatpush1.msra.mxu0 0.0
  %1548 = vmatprep.subr.mxu0 0.0
  %1549 = vmatpush1.msra.mxu0 0.0
  %1550 = vmatprep.subr.mxu0 0.0
  %1551 = vmatpush1.msra.mxu0 0.0
  %1552 = vmatprep.subr.mxu0 0.0
  %1553 = vmatpush1.msra.mxu0 0.0
  %1554 = vmatprep.subr.mxu0 0.0
  %1555 = vmatpush1.msra.mxu0 0.0
  %1556 = vmatprep.mubr.f32.mxu0 0.0
  %1557 = vmatmul.mubr.f32.gmra.mrb[0].mxu0 %v1490
  %v1558 = vpop.f32.mrb[0].mxu0
  %v1559 = vadd.f32 0.0, %v1558
  %v1560 = vpop.f32.mrb[0].mxu0
  %v1561 = vadd.f32 0.0, %v1560
  %1562 = vdwg.mxu0
  %1563 = vmatprep.subr.mxu0 0.0
  %1564 = vmatpush1.msra.mxu0 %v58
  %1565 = vmatprep.subr.mxu0 0.0
  %1566 = vmatpush1.msra.mxu0 %v61
  %1567 = vmatprep.subr.mxu0 0.0
  %1568 = vmatpush1.msra.mxu0 %v64
  %1569 = vmatprep.subr.mxu0 0.0
  %1570 = vmatpush1.msra.mxu0 %v67
  %1571 = vmatprep.subr.mxu0 0.0
  %1572 = vmatpush1.msra.mxu0 0.0
  %1573 = vmatprep.subr.mxu0 0.0
  %1574 = vmatpush1.msra.mxu0 0.0
  %1575 = vmatprep.subr.mxu0 0.0
  %1576 = vmatpush1.msra.mxu0 0.0
  %1577 = vmatprep.subr.mxu0 0.0
  %1578 = vmatpush1.msra.mxu0 0.0
  %1579 = vmatprep.subr.mxu0 0.0
  %1580 = vmatpush1.msra.mxu0 0.0
  %1581 = vmatprep.subr.mxu0 0.0
  %1582 = vmatpush1.msra.mxu0 0.0
  %1583 = vmatprep.subr.mxu0 0.0
  %1584 = vmatpush1.msra.mxu0 0.0
  %1585 = vmatprep.subr.mxu0 0.0
  %1586 = vmatpush1.msra.mxu0 0.0
  %1587 = vmatprep.subr.mxu0 0.0
  %1588 = vmatpush1.msra.mxu0 0.0
  %1589 = vmatprep.subr.mxu0 0.0
  %1590 = vmatpush1.msra.mxu0 0.0
  %1591 = vmatprep.subr.mxu0 0.0
  %1592 = vmatpush1.msra.mxu0 0.0
  %1593 = vmatprep.subr.mxu0 0.0
  %1594 = vmatpush1.msra.mxu0 0.0
  %1595 = vmatprep.subr.mxu0 0.0
  %1596 = vmatpush1.msra.mxu0 0.0
  %1597 = vmatprep.subr.mxu0 0.0
  %1598 = vmatpush1.msra.mxu0 0.0
  %1599 = vmatprep.subr.mxu0 0.0
  %1600 = vmatpush1.msra.mxu0 0.0
  %1601 = vmatprep.subr.mxu0 0.0
  %1602 = vmatpush1.msra.mxu0 0.0
  %1603 = vmatprep.subr.mxu0 0.0
  %1604 = vmatpush1.msra.mxu0 0.0
  %1605 = vmatprep.subr.mxu0 0.0
  %1606 = vmatpush1.msra.mxu0 0.0
  %1607 = vmatprep.subr.mxu0 0.0
  %1608 = vmatpush1.msra.mxu0 0.0
  %1609 = vmatprep.subr.mxu0 0.0
  %1610 = vmatpush1.msra.mxu0 0.0
  %1611 = vmatprep.subr.mxu0 0.0
  %1612 = vmatpush1.msra.mxu0 0.0
  %1613 = vmatprep.subr.mxu0 0.0
  %1614 = vmatpush1.msra.mxu0 0.0
  %1615 = vmatprep.subr.mxu0 0.0
  %1616 = vmatpush1.msra.mxu0 0.0
  %1617 = vmatprep.subr.mxu0 0.0
  %1618 = vmatpush1.msra.mxu0 0.0
  %1619 = vmatprep.subr.mxu0 0.0
  %1620 = vmatpush1.msra.mxu0 0.0
  %1621 = vmatprep.subr.mxu0 0.0
  %1622 = vmatpush1.msra.mxu0 0.0
  %1623 = vmatprep.subr.mxu0 0.0
  %1624 = vmatpush1.msra.mxu0 0.0
  %1625 = vmatprep.subr.mxu0 0.0
  %1626 = vmatpush1.msra.mxu0 0.0
  %1627 = vmatprep.mubr.f32.mxu0 0.0
  %1628 = vmatmul.mubr.f32.gmra.mrb[0].mxu0 %v1490
  %v1629 = vpop.f32.mrb[0].mxu0
  %v1630 = vadd.f32 0.0, %v1629
  %v1631 = vpop.f32.mrb[0].mxu0
  %1632 = vdwg.mxu0
  %v1633 = vadd.f32 %v246, %v1559
  %v1634 = vxor.u32 %v1633, 2147483648
  %v1635 = vmul.f32 %v1634, 1.442695
  %v1636 = vpow.pop %v1635
  %v1637 = vadd.f32 %v1636, 1.0
  %v1638 = vrcp.pop %v1637
  %v1639 = vmul.f32 1.0, %v1638
  %v1640 = vadd.f32 %v248, %v1561
  %v1641 = vxor.u32 %v1640, 2147483648
  %v1642 = vmul.f32 %v1641, 1.442695
  %v1643 = vpow.pop %v1642
  %v1644 = vadd.f32 %v1643, 1.0
  %v1645 = vrcp.pop %v1644
  %v1646 = vmul.f32 1.0, %v1645
  %v1647 = vadd.f32 %v1630, %v103
  %v1648 = vmul.f32 %v1639, %v1647
  %v1649 = vadd.f32 %v356, %v1648
  %v1650 = vtanh.pop %v1649
  %v1651 = vsub.f32 1.0, %v1646
  %v1652 = vmul.f32 %v1651, %v1650
  %v1653 = vmul.f32 %v1646, %v1181
  %v1654 = vadd.f32 %v1652, %v1653
  %1655 = vmatprep.subr.mxu0 %v45
  %1656 = vmatpush1.msra.mxu0 %v44
  %1657 = vmatprep.subr.mxu0 %v48
  %1658 = vmatpush1.msra.mxu0 %v47
  %1659 = vmatprep.subr.mxu0 %v51
  %1660 = vmatpush1.msra.mxu0 %v50
  %1661 = vmatprep.subr.mxu0 %v54
  %1662 = vmatpush1.msra.mxu0 %v53
  %1663 = vmatprep.subr.mxu0 0.0
  %1664 = vmatpush1.msra.mxu0 0.0
  %1665 = vmatprep.subr.mxu0 0.0
  %1666 = vmatpush1.msra.mxu0 0.0
  %1667 = vmatprep.subr.mxu0 0.0
  %1668 = vmatpush1.msra.mxu0 0.0
  %1669 = vmatprep.subr.mxu0 0.0
  %1670 = vmatpush1.msra.mxu0 0.0
  %1671 = vmatprep.subr.mxu0 0.0
  %1672 = vmatpush1.msra.mxu0 0.0
  %1673 = vmatprep.subr.mxu0 0.0
  %1674 = vmatpush1.msra.mxu0 0.0
  %1675 = vmatprep.subr.mxu0 0.0
  %1676 = vmatpush1.msra.mxu0 0.0
  %1677 = vmatprep.subr.mxu0 0.0
  %1678 = vmatpush1.msra.mxu0 0.0
  %1679 = vmatprep.subr.mxu0 0.0
  %1680 = vmatpush1.msra.mxu0 0.0
  %1681 = vmatprep.subr.mxu0 0.0
  %1682 = vmatpush1.msra.mxu0 0.0
  %1683 = vmatprep.subr.mxu0 0.0
  %1684 = vmatpush1.msra.mxu0 0.0
  %1685 = vmatprep.subr.mxu0 0.0
  %1686 = vmatpush1.msra.mxu0 0.0
  %1687 = vmatprep.subr.mxu0 0.0
  %1688 = vmatpush1.msra.mxu0 0.0
  %1689 = vmatprep.subr.mxu0 0.0
  %1690 = vmatpush1.msra.mxu0 0.0
  %1691 = vmatprep.subr.mxu0 0.0
  %1692 = vmatpush1.msra.mxu0 0.0
  %1693 = vmatprep.subr.mxu0 0.0
  %1694 = vmatpush1.msra.mxu0 0.0
  %1695 = vmatprep.subr.mxu0 0.0
  %1696 = vmatpush1.msra.mxu0 0.0
  %1697 = vmatprep.subr.mxu0 0.0
  %1698 = vmatpush1.msra.mxu0 0.0
  %1699 = vmatprep.subr.mxu0 0.0
  %1700 = vmatpush1.msra.mxu0 0.0
  %1701 = vmatprep.subr.mxu0 0.0
  %1702 = vmatpush1.msra.mxu0 0.0
  %1703 = vmatprep.subr.mxu0 0.0
  %1704 = vmatpush1.msra.mxu0 0.0
  %1705 = vmatprep.subr.mxu0 0.0
  %1706 = vmatpush1.msra.mxu0 0.0
  %1707 = vmatprep.subr.mxu0 0.0
  %1708 = vmatpush1.msra.mxu0 0.0
  %1709 = vmatprep.subr.mxu0 0.0
  %1710 = vmatpush1.msra.mxu0 0.0
  %1711 = vmatprep.subr.mxu0 0.0
  %1712 = vmatpush1.msra.mxu0 0.0
  %1713 = vmatprep.subr.mxu0 0.0
  %1714 = vmatpush1.msra.mxu0 0.0
  %1715 = vmatprep.subr.mxu0 0.0
  %1716 = vmatpush1.msra.mxu0 0.0
  %1717 = vmatprep.subr.mxu0 0.0
  %1718 = vmatpush1.msra.mxu0 0.0
  %1719 = vmatprep.mubr.f32.mxu0 0.0
  %1720 = vmatmul.mubr.f32.gmra.mrb[0].mxu0 %v1490
  %v1721 = vpop.f32.mrb[0].mxu0
  %v1722 = vadd.f32 %v86, %v1721
  %v1723 = vpop.f32.mrb[0].mxu0
  %v1724 = vadd.f32 %v90, %v1723
  %1725 = vdwg.mxu0
  %1726 = vmatprep.subr.mxu0 0.0
  %1727 = vmatpush1.msra.mxu0 %v46
  %1728 = vmatprep.subr.mxu0 0.0
  %1729 = vmatpush1.msra.mxu0 %v49
  %1730 = vmatprep.subr.mxu0 0.0
  %1731 = vmatpush1.msra.mxu0 %v52
  %1732 = vmatprep.subr.mxu0 0.0
  %1733 = vmatpush1.msra.mxu0 %v55
  %1734 = vmatprep.subr.mxu0 0.0
  %1735 = vmatpush1.msra.mxu0 0.0
  %1736 = vmatprep.subr.mxu0 0.0
  %1737 = vmatpush1.msra.mxu0 0.0
  %1738 = vmatprep.subr.mxu0 0.0
  %1739 = vmatpush1.msra.mxu0 0.0
  %1740 = vmatprep.subr.mxu0 0.0
  %1741 = vmatpush1.msra.mxu0 0.0
  %1742 = vmatprep.subr.mxu0 0.0
  %1743 = vmatpush1.msra.mxu0 0.0
  %1744 = vmatprep.subr.mxu0 0.0
  %1745 = vmatpush1.msra.mxu0 0.0
  %1746 = vmatprep.subr.mxu0 0.0
  %1747 = vmatpush1.msra.mxu0 0.0
  %1748 = vmatprep.subr.mxu0 0.0
  %1749 = vmatpush1.msra.mxu0 0.0
  %1750 = vmatprep.subr.mxu0 0.0
  %1751 = vmatpush1.msra.mxu0 0.0
  %1752 = vmatprep.subr.mxu0 0.0
  %1753 = vmatpush1.msra.mxu0 0.0
  %1754 = vmatprep.subr.mxu0 0.0
  %1755 = vmatpush1.msra.mxu0 0.0
  %1756 = vmatprep.subr.mxu0 0.0
  %1757 = vmatpush1.msra.mxu0 0.0
  %1758 = vmatprep.subr.mxu0 0.0
  %1759 = vmatpush1.msra.mxu0 0.0
  %1760 = vmatprep.subr.mxu0 0.0
  %1761 = vmatpush1.msra.mxu0 0.0
  %1762 = vmatprep.subr.mxu0 0.0
  %1763 = vmatpush1.msra.mxu0 0.0
  %1764 = vmatprep.subr.mxu0 0.0
  %1765 = vmatpush1.msra.mxu0 0.0
  %1766 = vmatprep.subr.mxu0 0.0
  %1767 = vmatpush1.msra.mxu0 0.0
  %1768 = vmatprep.subr.mxu0 0.0
  %1769 = vmatpush1.msra.mxu0 0.0
  %1770 = vmatprep.subr.mxu0 0.0
  %1771 = vmatpush1.msra.mxu0 0.0
  %1772 = vmatprep.subr.mxu0 0.0
  %1773 = vmatpush1.msra.mxu0 0.0
  %1774 = vmatprep.subr.mxu0 0.0
  %1775 = vmatpush1.msra.mxu0 0.0
  %1776 = vmatprep.subr.mxu0 0.0
  %1777 = vmatpush1.msra.mxu0 0.0
  %1778 = vmatprep.subr.mxu0 0.0
  %1779 = vmatpush1.msra.mxu0 0.0
  %1780 = vmatprep.subr.mxu0 0.0
  %1781 = vmatpush1.msra.mxu0 0.0
  %1782 = vmatprep.subr.mxu0 0.0
  %1783 = vmatpush1.msra.mxu0 0.0
  %1784 = vmatprep.subr.mxu0 0.0
  %1785 = vmatpush1.msra.mxu0 0.0
  %1786 = vmatprep.subr.mxu0 0.0
  %1787 = vmatpush1.msra.mxu0 0.0
  %1788 = vmatprep.subr.mxu0 0.0
  %1789 = vmatpush1.msra.mxu0 0.0
  %1790 = vmatprep.mubr.f32.mxu0 0.0
  %1791 = vmatmul.mubr.f32.gmra.mrb[0].mxu0 %v1490
  %v1792 = vpop.f32.mrb[0].mxu0
  %v1793 = vadd.f32 %v94, %v1792
  %v1794 = vpop.f32.mrb[0].mxu0
  %1795 = vdwg.mxu0
  %v1797 = vsel %vm379, %v1488, 0
  %1799 = vmatprep.subr.mxu0 %v69
  %1800 = vmatpush1.msra.mxu0 %v68
  %1801 = vmatprep.subr.mxu0 %v72
  %1802 = vmatpush1.msra.mxu0 %v71
  %1803 = vmatprep.subr.mxu0 %v75
  %1804 = vmatpush1.msra.mxu0 %v74
  %1805 = vmatprep.subr.mxu0 %v78
  %1806 = vmatpush1.msra.mxu0 %v77
  %1807 = vmatprep.subr.mxu0 0.0
  %1808 = vmatpush1.msra.mxu0 0.0
  %1809 = vmatprep.subr.mxu0 0.0
  %1810 = vmatpush1.msra.mxu0 0.0
  %1811 = vmatprep.subr.mxu0 0.0
  %1812 = vmatpush1.msra.mxu0 0.0
  %1813 = vmatprep.subr.mxu0 0.0
  %1814 = vmatpush1.msra.mxu0 0.0
  %1815 = vmatprep.subr.mxu0 0.0
  %1816 = vmatpush1.msra.mxu0 0.0
  %1817 = vmatprep.subr.mxu0 0.0
  %1818 = vmatpush1.msra.mxu0 0.0
  %1819 = vmatprep.subr.mxu0 0.0
  %1820 = vmatpush1.msra.mxu0 0.0
  %1821 = vmatprep.subr.mxu0 0.0
  %1822 = vmatpush1.msra.mxu0 0.0
  %1823 = vmatprep.subr.mxu0 0.0
  %1824 = vmatpush1.msra.mxu0 0.0
  %1825 = vmatprep.subr.mxu0 0.0
  %1826 = vmatpush1.msra.mxu0 0.0
  %1827 = vmatprep.subr.mxu0 0.0
  %1828 = vmatpush1.msra.mxu0 0.0
  %1829 = vmatprep.subr.mxu0 0.0
  %1830 = vmatpush1.msra.mxu0 0.0
  %1831 = vmatprep.subr.mxu0 0.0
  %1832 = vmatpush1.msra.mxu0 0.0
  %1833 = vmatprep.subr.mxu0 0.0
  %1834 = vmatpush1.msra.mxu0 0.0
  %1835 = vmatprep.subr.mxu0 0.0
  %1836 = vmatpush1.msra.mxu0 0.0
  %1837 = vmatprep.subr.mxu0 0.0
  %1838 = vmatpush1.msra.mxu0 0.0
  %1839 = vmatprep.subr.mxu0 0.0
  %1840 = vmatpush1.msra.mxu0 0.0
  %1841 = vmatprep.subr.mxu0 0.0
  %1842 = vmatpush1.msra.mxu0 0.0
  %1843 = vmatprep.subr.mxu0 0.0
  %1844 = vmatpush1.msra.mxu0 0.0
  %1845 = vmatprep.subr.mxu0 0.0
  %1846 = vmatpush1.msra.mxu0 0.0
  %1847 = vmatprep.subr.mxu0 0.0
  %1848 = vmatpush1.msra.mxu0 0.0
  %1849 = vmatprep.subr.mxu0 0.0
  %1850 = vmatpush1.msra.mxu0 0.0
  %1851 = vmatprep.subr.mxu0 0.0
  %1852 = vmatpush1.msra.mxu0 0.0
  %1853 = vmatprep.subr.mxu0 0.0
  %1854 = vmatpush1.msra.mxu0 0.0
  %1855 = vmatprep.subr.mxu0 0.0
  %1856 = vmatpush1.msra.mxu0 0.0
  %1857 = vmatprep.subr.mxu0 0.0
  %1858 = vmatpush1.msra.mxu0 0.0
  %1859 = vmatprep.subr.mxu0 0.0
  %1860 = vmatpush1.msra.mxu0 0.0
  %1861 = vmatprep.subr.mxu0 0.0
  %1862 = vmatpush1.msra.mxu0 0.0
  %1863 = vmatprep.mubr.f32.mxu0 0.0
  %1864 = vmatmul.mubr.f32.gmra.mrb[0].mxu0 %v1797
  %v1865 = vpop.f32.mrb[0].mxu0
  %v1866 = vadd.f32 0.0, %v1865
  %v1867 = vpop.f32.mrb[0].mxu0
  %v1868 = vadd.f32 0.0, %v1867
  %1869 = vdwg.mxu0
  %1870 = vmatprep.subr.mxu0 0.0
  %1871 = vmatpush1.msra.mxu0 %v70
  %1872 = vmatprep.subr.mxu0 0.0
  %1873 = vmatpush1.msra.mxu0 %v73
  %1874 = vmatprep.subr.mxu0 0.0
  %1875 = vmatpush1.msra.mxu0 %v76
  %1876 = vmatprep.subr.mxu0 0.0
  %1877 = vmatpush1.msra.mxu0 %v79
  %1878 = vmatprep.subr.mxu0 0.0
  %1879 = vmatpush1.msra.mxu0 0.0
  %1880 = vmatprep.subr.mxu0 0.0
  %1881 = vmatpush1.msra.mxu0 0.0
  %1882 = vmatprep.subr.mxu0 0.0
  %1883 = vmatpush1.msra.mxu0 0.0
  %1884 = vmatprep.subr.mxu0 0.0
  %1885 = vmatpush1.msra.mxu0 0.0
  %1886 = vmatprep.subr.mxu0 0.0
  %1887 = vmatpush1.msra.mxu0 0.0
  %1888 = vmatprep.subr.mxu0 0.0
  %1889 = vmatpush1.msra.mxu0 0.0
  %1890 = vmatprep.subr.mxu0 0.0
  %1891 = vmatpush1.msra.mxu0 0.0
  %1892 = vmatprep.subr.mxu0 0.0
  %1893 = vmatpush1.msra.mxu0 0.0
  %1894 = vmatprep.subr.mxu0 0.0
  %1895 = vmatpush1.msra.mxu0 0.0
  %1896 = vmatprep.subr.mxu0 0.0
  %1897 = vmatpush1.msra.mxu0 0.0
  %1898 = vmatprep.subr.mxu0 0.0
  %1899 = vmatpush1.msra.mxu0 0.0
  %1900 = vmatprep.subr.mxu0 0.0
  %1901 = vmatpush1.msra.mxu0 0.0
  %1902 = vmatprep.subr.mxu0 0.0
  %1903 = vmatpush1.msra.mxu0 0.0
  %1904 = vmatprep.subr.mxu0 0.0
  %1905 = vmatpush1.msra.mxu0 0.0
  %1906 = vmatprep.subr.mxu0 0.0
  %1907 = vmatpush1.msra.mxu0 0.0
  %1908 = vmatprep.subr.mxu0 0.0
  %1909 = vmatpush1.msra.mxu0 0.0
  %1910 = vmatprep.subr.mxu0 0.0
  %1911 = vmatpush1.msra.mxu0 0.0
  %1912 = vmatprep.subr.mxu0 0.0
  %1913 = vmatpush1.msra.mxu0 0.0
  %1914 = vmatprep.subr.mxu0 0.0
  %1915 = vmatpush1.msra.mxu0 0.0
  %1916 = vmatprep.subr.mxu0 0.0
  %1917 = vmatpush1.msra.mxu0 0.0
  %1918 = vmatprep.subr.mxu0 0.0
  %1919 = vmatpush1.msra.mxu0 0.0
  %1920 = vmatprep.subr.mxu0 0.0
  %1921 = vmatpush1.msra.mxu0 0.0
  %1922 = vmatprep.subr.mxu0 0.0
  %1923 = vmatpush1.msra.mxu0 0.0
  %1924 = vmatprep.subr.mxu0 0.0
  %1925 = vmatpush1.msra.mxu0 0.0
  %1926 = vmatprep.subr.mxu0 0.0
  %1927 = vmatpush1.msra.mxu0 0.0
  %1928 = vmatprep.subr.mxu0 0.0
  %1929 = vmatpush1.msra.mxu0 0.0
  %1930 = vmatprep.subr.mxu0 0.0
  %1931 = vmatpush1.msra.mxu0 0.0
  %1932 = vmatprep.subr.mxu0 0.0
  %1933 = vmatpush1.msra.mxu0 0.0
  %1934 = vmatprep.mubr.f32.mxu0 0.0
  %1935 = vmatmul.mubr.f32.gmra.mrb[0].mxu0 %v1797
  %v1936 = vpop.f32.mrb[0].mxu0
  %v1937 = vadd.f32 0.0, %v1936
  %v1938 = vpop.f32.mrb[0].mxu0
  %1939 = vdwg.mxu0
  %v1940 = vadd.f32 %v1722, %v1866
  %v1941 = vxor.u32 %v1940, 2147483648
  %v1942 = vmul.f32 %v1941, 1.442695
  %v1943 = vpow.pop %v1942
  %v1944 = vadd.f32 %v1943, 1.0
  %v1945 = vrcp.pop %v1944
  %v1946 = vmul.f32 1.0, %v1945
  %v1947 = vadd.f32 %v1724, %v1868
  %v1948 = vxor.u32 %v1947, 2147483648
  %v1949 = vmul.f32 %v1948, 1.442695
  %v1950 = vpow.pop %v1949
  %v1951 = vadd.f32 %v1950, 1.0
  %v1952 = vrcp.pop %v1951
  %v1953 = vmul.f32 1.0, %v1952
  %v1954 = vadd.f32 %v1937, %v110
  %v1955 = vmul.f32 %v1946, %v1954
  %v1956 = vadd.f32 %v1793, %v1955
  %v1957 = vtanh.pop %v1956
  %v1958 = vsub.f32 1.0, %v1953
  %v1959 = vmul.f32 %v1958, %v1957
  %v1960 = vmul.f32 %v1953, %v1488
  %v1961 = vadd.f32 %v1959, %v1960
  %v1963 = vsel %vm379, %v1654, 0
  %1965 = vmatprep.subr.mxu0 %v57
  %1966 = vmatpush1.msra.mxu0 %v56
  %1967 = vmatprep.subr.mxu0 %v60
  %1968 = vmatpush1.msra.mxu0 %v59
  %1969 = vmatprep.subr.mxu0 %v63
  %1970 = vmatpush1.msra.mxu0 %v62
  %1971 = vmatprep.subr.mxu0 %v66
  %1972 = vmatpush1.msra.mxu0 %v65
  %1973 = vmatprep.subr.mxu0 0.0
  %1974 = vmatpush1.msra.mxu0 0.0
  %1975 = vmatprep.subr.mxu0 0.0
  %1976 = vmatpush1.msra.mxu0 0.0
  %1977 = vmatprep.subr.mxu0 0.0
  %1978 = vmatpush1.msra.mxu0 0.0
  %1979 = vmatprep.subr.mxu0 0.0
  %1980 = vmatpush1.msra.mxu0 0.0
  %1981 = vmatprep.subr.mxu0 0.0
  %1982 = vmatpush1.msra.mxu0 0.0
  %1983 = vmatprep.subr.mxu0 0.0
  %1984 = vmatpush1.msra.mxu0 0.0
  %1985 = vmatprep.subr.mxu0 0.0
  %1986 = vmatpush1.msra.mxu0 0.0
  %1987 = vmatprep.subr.mxu0 0.0
  %1988 = vmatpush1.msra.mxu0 0.0
  %1989 = vmatprep.subr.mxu0 0.0
  %1990 = vmatpush1.msra.mxu0 0.0
  %1991 = vmatprep.subr.mxu0 0.0
  %1992 = vmatpush1.msra.mxu0 0.0
  %1993 = vmatprep.subr.mxu0 0.0
  %1994 = vmatpush1.msra.mxu0 0.0
  %1995 = vmatprep.subr.mxu0 0.0
  %1996 = vmatpush1.msra.mxu0 0.0
  %1997 = vmatprep.subr.mxu0 0.0
  %1998 = vmatpush1.msra.mxu0 0.0
  %1999 = vmatprep.subr.mxu0 0.0
  %2000 = vmatpush1.msra.mxu0 0.0
  %2001 = vmatprep.subr.mxu0 0.0
  %2002 = vmatpush1.msra.mxu0 0.0
  %2003 = vmatprep.subr.mxu0 0.0
  %2004 = vmatpush1.msra.mxu0 0.0
  %2005 = vmatprep.subr.mxu0 0.0
  %2006 = vmatpush1.msra.mxu0 0.0
  %2007 = vmatprep.subr.mxu0 0.0
  %2008 = vmatpush1.msra.mxu0 0.0
  %2009 = vmatprep.subr.mxu0 0.0
  %2010 = vmatpush1.msra.mxu0 0.0
  %2011 = vmatprep.subr.mxu0 0.0
  %2012 = vmatpush1.msra.mxu0 0.0
  %2013 = vmatprep.subr.mxu0 0.0
  %2014 = vmatpush1.msra.mxu0 0.0
  %2015 = vmatprep.subr.mxu0 0.0
  %2016 = vmatpush1.msra.mxu0 0.0
  %2017 = vmatprep.subr.mxu0 0.0
  %2018 = vmatpush1.msra.mxu0 0.0
  %2019 = vmatprep.subr.mxu0 0.0
  %2020 = vmatpush1.msra.mxu0 0.0
  %2021 = vmatprep.subr.mxu0 0.0
  %2022 = vmatpush1.msra.mxu0 0.0
  %2023 = vmatprep.subr.mxu0 0.0
  %2024 = vmatpush1.msra.mxu0 0.0
  %2025 = vmatprep.subr.mxu0 0.0
  %2026 = vmatpush1.msra.mxu0 0.0
  %2027 = vmatprep.subr.mxu0 0.0
  %2028 = vmatpush1.msra.mxu0 0.0
  %2029 = vmatprep.mubr.f32.mxu0 0.0
  %2030 = vmatmul.mubr.f32.gmra.mrb[0].mxu0 %v1963
  %v2031 = vpop.f32.mrb[0].mxu0
  %v2032 = vadd.f32 0.0, %v2031
  %v2033 = vpop.f32.mrb[0].mxu0
  %v2034 = vadd.f32 0.0, %v2033
  %2035 = vdwg.mxu0
  %2036 = vmatprep.subr.mxu0 0.0
  %2037 = vmatpush1.msra.mxu0 %v58
  %2038 = vmatprep.subr.mxu0 0.0
  %2039 = vmatpush1.msra.mxu0 %v61
  %2040 = vmatprep.subr.mxu0 0.0
  %2041 = vmatpush1.msra.mxu0 %v64
  %2042 = vmatprep.subr.mxu0 0.0
  %2043 = vmatpush1.msra.mxu0 %v67
  %2044 = vmatprep.subr.mxu0 0.0
  %2045 = vmatpush1.msra.mxu0 0.0
  %2046 = vmatprep.subr.mxu0 0.0
  %2047 = vmatpush1.msra.mxu0 0.0
  %2048 = vmatprep.subr.mxu0 0.0
  %2049 = vmatpush1.msra.mxu0 0.0
  %2050 = vmatprep.subr.mxu0 0.0
  %2051 = vmatpush1.msra.mxu0 0.0
  %2052 = vmatprep.subr.mxu0 0.0
  %2053 = vmatpush1.msra.mxu0 0.0
  %2054 = vmatprep.subr.mxu0 0.0
  %2055 = vmatpush1.msra.mxu0 0.0
  %2056 = vmatprep.subr.mxu0 0.0
  %2057 = vmatpush1.msra.mxu0 0.0
  %2058 = vmatprep.subr.mxu0 0.0
  %2059 = vmatpush1.msra.mxu0 0.0
  %2060 = vmatprep.subr.mxu0 0.0
  %2061 = vmatpush1.msra.mxu0 0.0
  %2062 = vmatprep.subr.mxu0 0.0
  %2063 = vmatpush1.msra.mxu0 0.0
  %2064 = vmatprep.subr.mxu0 0.0
  %2065 = vmatpush1.msra.mxu0 0.0
  %2066 = vmatprep.subr.mxu0 0.0
  %2067 = vmatpush1.msra.mxu0 0.0
  %2068 = vmatprep.subr.mxu0 0.0
  %2069 = vmatpush1.msra.mxu0 0.0
  %2070 = vmatprep.subr.mxu0 0.0
  %2071 = vmatpush1.msra.mxu0 0.0
  %2072 = vmatprep.subr.mxu0 0.0
  %2073 = vmatpush1.msra.mxu0 0.0
  %2074 = vmatprep.subr.mxu0 0.0
  %2075 = vmatpush1.msra.mxu0 0.0
  %2076 = vmatprep.subr.mxu0 0.0
  %2077 = vmatpush1.msra.mxu0 0.0
  %2078 = vmatprep.subr.mxu0 0.0
  %2079 = vmatpush1.msra.mxu0 0.0
  %2080 = vmatprep.subr.mxu0 0.0
  %2081 = vmatpush1.msra.mxu0 0.0
  %2082 = vmatprep.subr.mxu0 0.0
  %2083 = vmatpush1.msra.mxu0 0.0
  %2084 = vmatprep.subr.mxu0 0.0
  %2085 = vmatpush1.msra.mxu0 0.0
  %2086 = vmatprep.subr.mxu0 0.0
  %2087 = vmatpush1.msra.mxu0 0.0
  %2088 = vmatprep.subr.mxu0 0.0
  %2089 = vmatpush1.msra.mxu0 0.0
  %2090 = vmatprep.subr.mxu0 0.0
  %2091 = vmatpush1.msra.mxu0 0.0
  %2092 = vmatprep.subr.mxu0 0.0
  %2093 = vmatpush1.msra.mxu0 0.0
  %2094 = vmatprep.subr.mxu0 0.0
  %2095 = vmatpush1.msra.mxu0 0.0
  %2096 = vmatprep.subr.mxu0 0.0
  %2097 = vmatpush1.msra.mxu0 0.0
  %2098 = vmatprep.subr.mxu0 0.0
  %2099 = vmatpush1.msra.mxu0 0.0
  %2100 = vmatprep.mubr.f32.mxu0 0.0
  %2101 = vmatmul.mubr.f32.gmra.mrb[0].mxu0 %v1963
  %v2102 = vpop.f32.mrb[0].mxu0
  %v2103 = vadd.f32 0.0, %v2102
  %v2104 = vpop.f32.mrb[0].mxu0
  %2105 = vdwg.mxu0
  %v2106 = vadd.f32 %v252, %v2032
  %v2107 = vxor.u32 %v2106, 2147483648
  %v2108 = vmul.f32 %v2107, 1.442695
  %v2109 = vpow.pop %v2108
  %v2110 = vadd.f32 %v2109, 1.0
  %v2111 = vrcp.pop %v2110
  %v2112 = vmul.f32 1.0, %v2111
  %v2113 = vadd.f32 %v254, %v2034
  %v2114 = vxor.u32 %v2113, 2147483648
  %v2115 = vmul.f32 %v2114, 1.442695
  %v2116 = vpow.pop %v2115
  %v2117 = vadd.f32 %v2116, 1.0
  %v2118 = vrcp.pop %v2117
  %v2119 = vmul.f32 1.0, %v2118
  %v2120 = vadd.f32 %v2103, %v103
  %v2121 = vmul.f32 %v2112, %v2120
  %v2122 = vadd.f32 %v361, %v2121
  %v2123 = vtanh.pop %v2122
  %v2124 = vsub.f32 1.0, %v2119
  %v2125 = vmul.f32 %v2124, %v2123
  %v2126 = vmul.f32 %v2119, %v1654
  %v2127 = vadd.f32 %v2125, %v2126
  %2128 = vmatprep.subr.mxu0 %v45
  %2129 = vmatpush1.msra.mxu0 %v44
  %2130 = vmatprep.subr.mxu0 %v48
  %2131 = vmatpush1.msra.mxu0 %v47
  %2132 = vmatprep.subr.mxu0 %v51
  %2133 = vmatpush1.msra.mxu0 %v50
  %2134 = vmatprep.subr.mxu0 %v54
  %2135 = vmatpush1.msra.mxu0 %v53
  %2136 = vmatprep.subr.mxu0 0.0
  %2137 = vmatpush1.msra.mxu0 0.0
  %2138 = vmatprep.subr.mxu0 0.0
  %2139 = vmatpush1.msra.mxu0 0.0
  %2140 = vmatprep.subr.mxu0 0.0
  %2141 = vmatpush1.msra.mxu0 0.0
  %2142 = vmatprep.subr.mxu0 0.0
  %2143 = vmatpush1.msra.mxu0 0.0
  %2144 = vmatprep.subr.mxu0 0.0
  %2145 = vmatpush1.msra.mxu0 0.0
  %2146 = vmatprep.subr.mxu0 0.0
  %2147 = vmatpush1.msra.mxu0 0.0
  %2148 = vmatprep.subr.mxu0 0.0
  %2149 = vmatpush1.msra.mxu0 0.0
  %2150 = vmatprep.subr.mxu0 0.0
  %2151 = vmatpush1.msra.mxu0 0.0
  %2152 = vmatprep.subr.mxu0 0.0
  %2153 = vmatpush1.msra.mxu0 0.0
  %2154 = vmatprep.subr.mxu0 0.0
  %2155 = vmatpush1.msra.mxu0 0.0
  %2156 = vmatprep.subr.mxu0 0.0
  %2157 = vmatpush1.msra.mxu0 0.0
  %2158 = vmatprep.subr.mxu0 0.0
  %2159 = vmatpush1.msra.mxu0 0.0
  %2160 = vmatprep.subr.mxu0 0.0
  %2161 = vmatpush1.msra.mxu0 0.0
  %2162 = vmatprep.subr.mxu0 0.0
  %2163 = vmatpush1.msra.mxu0 0.0
  %2164 = vmatprep.subr.mxu0 0.0
  %2165 = vmatpush1.msra.mxu0 0.0
  %2166 = vmatprep.subr.mxu0 0.0
  %2167 = vmatpush1.msra.mxu0 0.0
  %2168 = vmatprep.subr.mxu0 0.0
  %2169 = vmatpush1.msra.mxu0 0.0
  %2170 = vmatprep.subr.mxu0 0.0
  %2171 = vmatpush1.msra.mxu0 0.0
  %2172 = vmatprep.subr.mxu0 0.0
  %2173 = vmatpush1.msra.mxu0 0.0
  %2174 = vmatprep.subr.mxu0 0.0
  %2175 = vmatpush1.msra.mxu0 0.0
  %2176 = vmatprep.subr.mxu0 0.0
  %2177 = vmatpush1.msra.mxu0 0.0
  %2178 = vmatprep.subr.mxu0 0.0
  %2179 = vmatpush1.msra.mxu0 0.0
  %2180 = vmatprep.subr.mxu0 0.0
  %2181 = vmatpush1.msra.mxu0 0.0
  %2182 = vmatprep.subr.mxu0 0.0
  %2183 = vmatpush1.msra.mxu0 0.0
  %2184 = vmatprep.subr.mxu0 0.0
  %2185 = vmatpush1.msra.mxu0 0.0
  %2186 = vmatprep.subr.mxu0 0.0
  %2187 = vmatpush1.msra.mxu0 0.0
  %2188 = vmatprep.subr.mxu0 0.0
  %2189 = vmatpush1.msra.mxu0 0.0
  %2190 = vmatprep.subr.mxu0 0.0
  %2191 = vmatpush1.msra.mxu0 0.0
  %2192 = vmatprep.mubr.f32.mxu0 0.0
  %2193 = vmatmul.mubr.f32.gmra.mrb[0].mxu0 %v1963
  %v2194 = vpop.f32.mrb[0].mxu0
  %v2195 = vadd.f32 %v86, %v2194
  %v2196 = vpop.f32.mrb[0].mxu0
  %v2197 = vadd.f32 %v90, %v2196
  %2198 = vdwg.mxu0
  %2199 = vmatprep.subr.mxu0 0.0
  %2200 = vmatpush1.msra.mxu0 %v46
  %2201 = vmatprep.subr.mxu0 0.0
  %2202 = vmatpush1.msra.mxu0 %v49
  %2203 = vmatprep.subr.mxu0 0.0
  %2204 = vmatpush1.msra.mxu0 %v52
  %2205 = vmatprep.subr.mxu0 0.0
  %2206 = vmatpush1.msra.mxu0 %v55
  %2207 = vmatprep.subr.mxu0 0.0
  %2208 = vmatpush1.msra.mxu0 0.0
  %2209 = vmatprep.subr.mxu0 0.0
  %2210 = vmatpush1.msra.mxu0 0.0
  %2211 = vmatprep.subr.mxu0 0.0
  %2212 = vmatpush1.msra.mxu0 0.0
  %2213 = vmatprep.subr.mxu0 0.0
  %2214 = vmatpush1.msra.mxu0 0.0
  %2215 = vmatprep.subr.mxu0 0.0
  %2216 = vmatpush1.msra.mxu0 0.0
  %2217 = vmatprep.subr.mxu0 0.0
  %2218 = vmatpush1.msra.mxu0 0.0
  %2219 = vmatprep.subr.mxu0 0.0
  %2220 = vmatpush1.msra.mxu0 0.0
  %2221 = vmatprep.subr.mxu0 0.0
  %2222 = vmatpush1.msra.mxu0 0.0
  %2223 = vmatprep.subr.mxu0 0.0
  %2224 = vmatpush1.msra.mxu0 0.0
  %2225 = vmatprep.subr.mxu0 0.0
  %2226 = vmatpush1.msra.mxu0 0.0
  %2227 = vmatprep.subr.mxu0 0.0
  %2228 = vmatpush1.msra.mxu0 0.0
  %2229 = vmatprep.subr.mxu0 0.0
  %2230 = vmatpush1.msra.mxu0 0.0
  %2231 = vmatprep.subr.mxu0 0.0
  %2232 = vmatpush1.msra.mxu0 0.0
  %2233 = vmatprep.subr.mxu0 0.0
  %2234 = vmatpush1.msra.mxu0 0.0
  %2235 = vmatprep.subr.mxu0 0.0
  %2236 = vmatpush1.msra.mxu0 0.0
  %2237 = vmatprep.subr.mxu0 0.0
  %2238 = vmatpush1.msra.mxu0 0.0
  %2239 = vmatprep.subr.mxu0 0.0
  %2240 = vmatpush1.msra.mxu0 0.0
  %2241 = vmatprep.subr.mxu0 0.0
  %2242 = vmatpush1.msra.mxu0 0.0
  %2243 = vmatprep.subr.mxu0 0.0
  %2244 = vmatpush1.msra.mxu0 0.0
  %2245 = vmatprep.subr.mxu0 0.0
  %2246 = vmatpush1.msra.mxu0 0.0
  %2247 = vmatprep.subr.mxu0 0.0
  %2248 = vmatpush1.msra.mxu0 0.0
  %2249 = vmatprep.subr.mxu0 0.0
  %2250 = vmatpush1.msra.mxu0 0.0
  %2251 = vmatprep.subr.mxu0 0.0
  %2252 = vmatpush1.msra.mxu0 0.0
  %2253 = vmatprep.subr.mxu0 0.0
  %2254 = vmatpush1.msra.mxu0 0.0
  %2255 = vmatprep.subr.mxu0 0.0
  %2256 = vmatpush1.msra.mxu0 0.0
  %2257 = vmatprep.subr.mxu0 0.0
  %2258 = vmatpush1.msra.mxu0 0.0
  %2259 = vmatprep.subr.mxu0 0.0
  %2260 = vmatpush1.msra.mxu0 0.0
  %2261 = vmatprep.subr.mxu0 0.0
  %2262 = vmatpush1.msra.mxu0 0.0
  %2263 = vmatprep.mubr.f32.mxu0 0.0
  %2264 = vmatmul.mubr.f32.gmra.mrb[0].mxu0 %v1963
  %v2265 = vpop.f32.mrb[0].mxu0
  %v2266 = vadd.f32 %v94, %v2265
  %v2267 = vpop.f32.mrb[0].mxu0
  %2268 = vdwg.mxu0
  %v2270 = vsel %vm379, %v1961, 0
  %2272 = vmatprep.subr.mxu0 %v69
  %2273 = vmatpush1.msra.mxu0 %v68
  %2274 = vmatprep.subr.mxu0 %v72
  %2275 = vmatpush1.msra.mxu0 %v71
  %2276 = vmatprep.subr.mxu0 %v75
  %2277 = vmatpush1.msra.mxu0 %v74
  %2278 = vmatprep.subr.mxu0 %v78
  %2279 = vmatpush1.msra.mxu0 %v77
  %2280 = vmatprep.subr.mxu0 0.0
  %2281 = vmatpush1.msra.mxu0 0.0
  %2282 = vmatprep.subr.mxu0 0.0
  %2283 = vmatpush1.msra.mxu0 0.0
  %2284 = vmatprep.subr.mxu0 0.0
  %2285 = vmatpush1.msra.mxu0 0.0
  %2286 = vmatprep.subr.mxu0 0.0
  %2287 = vmatpush1.msra.mxu0 0.0
  %2288 = vmatprep.subr.mxu0 0.0
  %2289 = vmatpush1.msra.mxu0 0.0
  %2290 = vmatprep.subr.mxu0 0.0
  %2291 = vmatpush1.msra.mxu0 0.0
  %2292 = vmatprep.subr.mxu0 0.0
  %2293 = vmatpush1.msra.mxu0 0.0
  %2294 = vmatprep.subr.mxu0 0.0
  %2295 = vmatpush1.msra.mxu0 0.0
  %2296 = vmatprep.subr.mxu0 0.0
  %2297 = vmatpush1.msra.mxu0 0.0
  %2298 = vmatprep.subr.mxu0 0.0
  %2299 = vmatpush1.msra.mxu0 0.0
  %2300 = vmatprep.subr.mxu0 0.0
  %2301 = vmatpush1.msra.mxu0 0.0
  %2302 = vmatprep.subr.mxu0 0.0
  %2303 = vmatpush1.msra.mxu0 0.0
  %2304 = vmatprep.subr.mxu0 0.0
  %2305 = vmatpush1.msra.mxu0 0.0
  %2306 = vmatprep.subr.mxu0 0.0
  %2307 = vmatpush1.msra.mxu0 0.0
  %2308 = vmatprep.subr.mxu0 0.0
  %2309 = vmatpush1.msra.mxu0 0.0
  %2310 = vmatprep.subr.mxu0 0.0
  %2311 = vmatpush1.msra.mxu0 0.0
  %2312 = vmatprep.subr.mxu0 0.0
  %2313 = vmatpush1.msra.mxu0 0.0
  %2314 = vmatprep.subr.mxu0 0.0
  %2315 = vmatpush1.msra.mxu0 0.0
  %2316 = vmatprep.subr.mxu0 0.0
  %2317 = vmatpush1.msra.mxu0 0.0
  %2318 = vmatprep.subr.mxu0 0.0
  %2319 = vmatpush1.msra.mxu0 0.0
  %2320 = vmatprep.subr.mxu0 0.0
  %2321 = vmatpush1.msra.mxu0 0.0
  %2322 = vmatprep.subr.mxu0 0.0
  %2323 = vmatpush1.msra.mxu0 0.0
  %2324 = vmatprep.subr.mxu0 0.0
  %2325 = vmatpush1.msra.mxu0 0.0
  %2326 = vmatprep.subr.mxu0 0.0
  %2327 = vmatpush1.msra.mxu0 0.0
  %2328 = vmatprep.subr.mxu0 0.0
  %2329 = vmatpush1.msra.mxu0 0.0
  %2330 = vmatprep.subr.mxu0 0.0
  %2331 = vmatpush1.msra.mxu0 0.0
  %2332 = vmatprep.subr.mxu0 0.0
  %2333 = vmatpush1.msra.mxu0 0.0
  %2334 = vmatprep.subr.mxu0 0.0
  %2335 = vmatpush1.msra.mxu0 0.0
  %2336 = vmatprep.mubr.f32.mxu0 0.0
  %2337 = vmatmul.mubr.f32.gmra.mrb[0].mxu0 %v2270
  %v2338 = vpop.f32.mrb[0].mxu0
  %v2339 = vadd.f32 0.0, %v2338
  %v2340 = vpop.f32.mrb[0].mxu0
  %v2341 = vadd.f32 0.0, %v2340
  %2342 = vdwg.mxu0
  %2343 = vmatprep.subr.mxu0 0.0
  %2344 = vmatpush1.msra.mxu0 %v70
  %2345 = vmatprep.subr.mxu0 0.0
  %2346 = vmatpush1.msra.mxu0 %v73
  %2347 = vmatprep.subr.mxu0 0.0
  %2348 = vmatpush1.msra.mxu0 %v76
  %2349 = vmatprep.subr.mxu0 0.0
  %2350 = vmatpush1.msra.mxu0 %v79
  %2351 = vmatprep.subr.mxu0 0.0
  %2352 = vmatpush1.msra.mxu0 0.0
  %2353 = vmatprep.subr.mxu0 0.0
  %2354 = vmatpush1.msra.mxu0 0.0
  %2355 = vmatprep.subr.mxu0 0.0
  %2356 = vmatpush1.msra.mxu0 0.0
  %2357 = vmatprep.subr.mxu0 0.0
  %2358 = vmatpush1.msra.mxu0 0.0
  %2359 = vmatprep.subr.mxu0 0.0
  %2360 = vmatpush1.msra.mxu0 0.0
  %2361 = vmatprep.subr.mxu0 0.0
  %2362 = vmatpush1.msra.mxu0 0.0
  %2363 = vmatprep.subr.mxu0 0.0
  %2364 = vmatpush1.msra.mxu0 0.0
  %2365 = vmatprep.subr.mxu0 0.0
  %2366 = vmatpush1.msra.mxu0 0.0
  %2367 = vmatprep.subr.mxu0 0.0
  %2368 = vmatpush1.msra.mxu0 0.0
  %2369 = vmatprep.subr.mxu0 0.0
  %2370 = vmatpush1.msra.mxu0 0.0
  %2371 = vmatprep.subr.mxu0 0.0
  %2372 = vmatpush1.msra.mxu0 0.0
  %2373 = vmatprep.subr.mxu0 0.0
  %2374 = vmatpush1.msra.mxu0 0.0
  %2375 = vmatprep.subr.mxu0 0.0
  %2376 = vmatpush1.msra.mxu0 0.0
  %2377 = vmatprep.subr.mxu0 0.0
  %2378 = vmatpush1.msra.mxu0 0.0
  %2379 = vmatprep.subr.mxu0 0.0
  %2380 = vmatpush1.msra.mxu0 0.0
  %2381 = vmatprep.subr.mxu0 0.0
  %2382 = vmatpush1.msra.mxu0 0.0
  %2383 = vmatprep.subr.mxu0 0.0
  %2384 = vmatpush1.msra.mxu0 0.0
  %2385 = vmatprep.subr.mxu0 0.0
  %2386 = vmatpush1.msra.mxu0 0.0
  %2387 = vmatprep.subr.mxu0 0.0
  %2388 = vmatpush1.msra.mxu0 0.0
  %2389 = vmatprep.subr.mxu0 0.0
  %2390 = vmatpush1.msra.mxu0 0.0
  %2391 = vmatprep.subr.mxu0 0.0
  %2392 = vmatpush1.msra.mxu0 0.0
  %2393 = vmatprep.subr.mxu0 0.0
  %2394 = vmatpush1.msra.mxu0 0.0
  %2395 = vmatprep.subr.mxu0 0.0
  %2396 = vmatpush1.msra.mxu0 0.0
  %2397 = vmatprep.subr.mxu0 0.0
  %2398 = vmatpush1.msra.mxu0 0.0
  %2399 = vmatprep.subr.mxu0 0.0
  %2400 = vmatpush1.msra.mxu0 0.0
  %2401 = vmatprep.subr.mxu0 0.0
  %2402 = vmatpush1.msra.mxu0 0.0
  %2403 = vmatprep.subr.mxu0 0.0
  %2404 = vmatpush1.msra.mxu0 0.0
  %2405 = vmatprep.subr.mxu0 0.0
  %2406 = vmatpush1.msra.mxu0 0.0
  %2407 = vmatprep.mubr.f32.mxu0 0.0
  %2408 = vmatmul.mubr.f32.gmra.mrb[0].mxu0 %v2270
  %v2409 = vpop.f32.mrb[0].mxu0
  %v2410 = vadd.f32 0.0, %v2409
  %v2411 = vpop.f32.mrb[0].mxu0
  %2412 = vdwg.mxu0
  %v2413 = vadd.f32 %v2195, %v2339
  %v2414 = vxor.u32 %v2413, 2147483648
  %v2415 = vmul.f32 %v2414, 1.442695
  %v2416 = vpow.pop %v2415
  %v2417 = vadd.f32 %v2416, 1.0
  %v2418 = vrcp.pop %v2417
  %v2419 = vmul.f32 1.0, %v2418
  %v2420 = vadd.f32 %v2197, %v2341
  %v2421 = vxor.u32 %v2420, 2147483648
  %v2422 = vmul.f32 %v2421, 1.442695
  %v2423 = vpow.pop %v2422
  %v2424 = vadd.f32 %v2423, 1.0
  %v2425 = vrcp.pop %v2424
  %v2426 = vmul.f32 1.0, %v2425
  %v2427 = vadd.f32 %v2410, %v110
  %v2428 = vmul.f32 %v2419, %v2427
  %v2429 = vadd.f32 %v2266, %v2428
  %v2430 = vtanh.pop %v2429
  %v2431 = vsub.f32 1.0, %v2426
  %v2432 = vmul.f32 %v2431, %v2430
  %v2433 = vmul.f32 %v2426, %v1961
  %v2434 = vadd.f32 %v2432, %v2433
  %v2436 = vsel %vm379, %v2127, 0
  %2438 = vmatprep.subr.mxu0 %v57
  %2439 = vmatpush1.msra.mxu0 %v56
  %2440 = vmatprep.subr.mxu0 %v60
  %2441 = vmatpush1.msra.mxu0 %v59
  %2442 = vmatprep.subr.mxu0 %v63
  %2443 = vmatpush1.msra.mxu0 %v62
  %2444 = vmatprep.subr.mxu0 %v66
  %2445 = vmatpush1.msra.mxu0 %v65
  %2446 = vmatprep.subr.mxu0 0.0
  %2447 = vmatpush1.msra.mxu0 0.0
  %2448 = vmatprep.subr.mxu0 0.0
  %2449 = vmatpush1.msra.mxu0 0.0
  %2450 = vmatprep.subr.mxu0 0.0
  %2451 = vmatpush1.msra.mxu0 0.0
  %2452 = vmatprep.subr.mxu0 0.0
  %2453 = vmatpush1.msra.mxu0 0.0
  %2454 = vmatprep.subr.mxu0 0.0
  %2455 = vmatpush1.msra.mxu0 0.0
  %2456 = vmatprep.subr.mxu0 0.0
  %2457 = vmatpush1.msra.mxu0 0.0
  %2458 = vmatprep.subr.mxu0 0.0
  %2459 = vmatpush1.msra.mxu0 0.0
  %2460 = vmatprep.subr.mxu0 0.0
  %2461 = vmatpush1.msra.mxu0 0.0
  %2462 = vmatprep.subr.mxu0 0.0
  %2463 = vmatpush1.msra.mxu0 0.0
  %2464 = vmatprep.subr.mxu0 0.0
  %2465 = vmatpush1.msra.mxu0 0.0
  %2466 = vmatprep.subr.mxu0 0.0
  %2467 = vmatpush1.msra.mxu0 0.0
  %2468 = vmatprep.subr.mxu0 0.0
  %2469 = vmatpush1.msra.mxu0 0.0
  %2470 = vmatprep.subr.mxu0 0.0
  %2471 = vmatpush1.msra.mxu0 0.0
  %2472 = vmatprep.subr.mxu0 0.0
  %2473 = vmatpush1.msra.mxu0 0.0
  %2474 = vmatprep.subr.mxu0 0.0
  %2475 = vmatpush1.msra.mxu0 0.0
  %2476 = vmatprep.subr.mxu0 0.0
  %2477 = vmatpush1.msra.mxu0 0.0
  %2478 = vmatprep.subr.mxu0 0.0
  %2479 = vmatpush1.msra.mxu0 0.0
  %2480 = vmatprep.subr.mxu0 0.0
  %2481 = vmatpush1.msra.mxu0 0.0
  %2482 = vmatprep.subr.mxu0 0.0
  %2483 = vmatpush1.msra.mxu0 0.0
  %2484 = vmatprep.subr.mxu0 0.0
  %2485 = vmatpush1.msra.mxu0 0.0
  %2486 = vmatprep.subr.mxu0 0.0
  %2487 = vmatpush1.msra.mxu0 0.0
  %2488 = vmatprep.subr.mxu0 0.0
  %2489 = vmatpush1.msra.mxu0 0.0
  %2490 = vmatprep.subr.mxu0 0.0
  %2491 = vmatpush1.msra.mxu0 0.0
  %2492 = vmatprep.subr.mxu0 0.0
  %2493 = vmatpush1.msra.mxu0 0.0
  %2494 = vmatprep.subr.mxu0 0.0
  %2495 = vmatpush1.msra.mxu0 0.0
  %2496 = vmatprep.subr.mxu0 0.0
  %2497 = vmatpush1.msra.mxu0 0.0
  %2498 = vmatprep.subr.mxu0 0.0
  %2499 = vmatpush1.msra.mxu0 0.0
  %2500 = vmatprep.subr.mxu0 0.0
  %2501 = vmatpush1.msra.mxu0 0.0
  %2502 = vmatprep.mubr.f32.mxu0 0.0
  %2503 = vmatmul.mubr.f32.gmra.mrb[0].mxu0 %v2436
  %v2504 = vpop.f32.mrb[0].mxu0
  %v2505 = vadd.f32 0.0, %v2504
  %v2506 = vpop.f32.mrb[0].mxu0
  %v2507 = vadd.f32 0.0, %v2506
  %2508 = vdwg.mxu0
  %2509 = vmatprep.subr.mxu0 0.0
  %2510 = vmatpush1.msra.mxu0 %v58
  %2511 = vmatprep.subr.mxu0 0.0
  %2512 = vmatpush1.msra.mxu0 %v61
  %2513 = vmatprep.subr.mxu0 0.0
  %2514 = vmatpush1.msra.mxu0 %v64
  %2515 = vmatprep.subr.mxu0 0.0
  %2516 = vmatpush1.msra.mxu0 %v67
  %2517 = vmatprep.subr.mxu0 0.0
  %2518 = vmatpush1.msra.mxu0 0.0
  %2519 = vmatprep.subr.mxu0 0.0
  %2520 = vmatpush1.msra.mxu0 0.0
  %2521 = vmatprep.subr.mxu0 0.0
  %2522 = vmatpush1.msra.mxu0 0.0
  %2523 = vmatprep.subr.mxu0 0.0
  %2524 = vmatpush1.msra.mxu0 0.0
  %2525 = vmatprep.subr.mxu0 0.0
  %2526 = vmatpush1.msra.mxu0 0.0
  %2527 = vmatprep.subr.mxu0 0.0
  %2528 = vmatpush1.msra.mxu0 0.0
  %2529 = vmatprep.subr.mxu0 0.0
  %2530 = vmatpush1.msra.mxu0 0.0
  %2531 = vmatprep.subr.mxu0 0.0
  %2532 = vmatpush1.msra.mxu0 0.0
  %2533 = vmatprep.subr.mxu0 0.0
  %2534 = vmatpush1.msra.mxu0 0.0
  %2535 = vmatprep.subr.mxu0 0.0
  %2536 = vmatpush1.msra.mxu0 0.0
  %2537 = vmatprep.subr.mxu0 0.0
  %2538 = vmatpush1.msra.mxu0 0.0
  %2539 = vmatprep.subr.mxu0 0.0
  %2540 = vmatpush1.msra.mxu0 0.0
  %2541 = vmatprep.subr.mxu0 0.0
  %2542 = vmatpush1.msra.mxu0 0.0
  %2543 = vmatprep.subr.mxu0 0.0
  %2544 = vmatpush1.msra.mxu0 0.0
  %2545 = vmatprep.subr.mxu0 0.0
  %2546 = vmatpush1.msra.mxu0 0.0
  %2547 = vmatprep.subr.mxu0 0.0
  %2548 = vmatpush1.msra.mxu0 0.0
  %2549 = vmatprep.subr.mxu0 0.0
  %2550 = vmatpush1.msra.mxu0 0.0
  %2551 = vmatprep.subr.mxu0 0.0
  %2552 = vmatpush1.msra.mxu0 0.0
  %2553 = vmatprep.subr.mxu0 0.0
  %2554 = vmatpush1.msra.mxu0 0.0
  %2555 = vmatprep.subr.mxu0 0.0
  %2556 = vmatpush1.msra.mxu0 0.0
  %2557 = vmatprep.subr.mxu0 0.0
  %2558 = vmatpush1.msra.mxu0 0.0
  %2559 = vmatprep.subr.mxu0 0.0
  %2560 = vmatpush1.msra.mxu0 0.0
  %2561 = vmatprep.subr.mxu0 0.0
  %2562 = vmatpush1.msra.mxu0 0.0
  %2563 = vmatprep.subr.mxu0 0.0
  %2564 = vmatpush1.msra.mxu0 0.0
  %2565 = vmatprep.subr.mxu0 0.0
  %2566 = vmatpush1.msra.mxu0 0.0
  %2567 = vmatprep.subr.mxu0 0.0
  %2568 = vmatpush1.msra.mxu0 0.0
  %2569 = vmatprep.subr.mxu0 0.0
  %2570 = vmatpush1.msra.mxu0 0.0
  %2571 = vmatprep.subr.mxu0 0.0
  %2572 = vmatpush1.msra.mxu0 0.0
  %2573 = vmatprep.mubr.f32.mxu0 0.0
  %2574 = vmatmul.mubr.f32.gmra.mrb[0].mxu0 %v2436
  %v2575 = vpop.f32.mrb[0].mxu0
  %v2576 = vadd.f32 0.0, %v2575
  %v2577 = vpop.f32.mrb[0].mxu0
  %2578 = vdwg.mxu0
  %v2579 = vadd.f32 %v258, %v2505
  %v2580 = vxor.u32 %v2579, 2147483648
  %v2581 = vmul.f32 %v2580, 1.442695
  %v2582 = vpow.pop %v2581
  %v2583 = vadd.f32 %v2582, 1.0
  %v2584 = vrcp.pop %v2583
  %v2585 = vmul.f32 1.0, %v2584
  %v2586 = vadd.f32 %v260, %v2507
  %v2587 = vxor.u32 %v2586, 2147483648
  %v2588 = vmul.f32 %v2587, 1.442695
  %v2589 = vpow.pop %v2588
  %v2590 = vadd.f32 %v2589, 1.0
  %v2591 = vrcp.pop %v2590
  %v2592 = vmul.f32 1.0, %v2591
  %v2593 = vadd.f32 %v2576, %v103
  %v2594 = vmul.f32 %v2585, %v2593
  %v2595 = vadd.f32 %v366, %v2594
  %v2596 = vtanh.pop %v2595
  %v2597 = vsub.f32 1.0, %v2592
  %v2598 = vmul.f32 %v2597, %v2596
  %v2599 = vmul.f32 %v2592, %v2127
  %v2600 = vadd.f32 %v2598, %v2599
  %2601 = vmatprep.subr.mxu0 %v45
  %2602 = vmatpush1.msra.mxu0 %v44
  %2603 = vmatprep.subr.mxu0 %v48
  %2604 = vmatpush1.msra.mxu0 %v47
  %2605 = vmatprep.subr.mxu0 %v51
  %2606 = vmatpush1.msra.mxu0 %v50
  %2607 = vmatprep.subr.mxu0 %v54
  %2608 = vmatpush1.msra.mxu0 %v53
  %2609 = vmatprep.subr.mxu0 0.0
  %2610 = vmatpush1.msra.mxu0 0.0
  %2611 = vmatprep.subr.mxu0 0.0
  %2612 = vmatpush1.msra.mxu0 0.0
  %2613 = vmatprep.subr.mxu0 0.0
  %2614 = vmatpush1.msra.mxu0 0.0
  %2615 = vmatprep.subr.mxu0 0.0
  %2616 = vmatpush1.msra.mxu0 0.0
  %2617 = vmatprep.subr.mxu0 0.0
  %2618 = vmatpush1.msra.mxu0 0.0
  %2619 = vmatprep.subr.mxu0 0.0
  %2620 = vmatpush1.msra.mxu0 0.0
  %2621 = vmatprep.subr.mxu0 0.0
  %2622 = vmatpush1.msra.mxu0 0.0
  %2623 = vmatprep.subr.mxu0 0.0
  %2624 = vmatpush1.msra.mxu0 0.0
  %2625 = vmatprep.subr.mxu0 0.0
  %2626 = vmatpush1.msra.mxu0 0.0
  %2627 = vmatprep.subr.mxu0 0.0
  %2628 = vmatpush1.msra.mxu0 0.0
  %2629 = vmatprep.subr.mxu0 0.0
  %2630 = vmatpush1.msra.mxu0 0.0
  %2631 = vmatprep.subr.mxu0 0.0
  %2632 = vmatpush1.msra.mxu0 0.0
  %2633 = vmatprep.subr.mxu0 0.0
  %2634 = vmatpush1.msra.mxu0 0.0
  %2635 = vmatprep.subr.mxu0 0.0
  %2636 = vmatpush1.msra.mxu0 0.0
  %2637 = vmatprep.subr.mxu0 0.0
  %2638 = vmatpush1.msra.mxu0 0.0
  %2639 = vmatprep.subr.mxu0 0.0
  %2640 = vmatpush1.msra.mxu0 0.0
  %2641 = vmatprep.subr.mxu0 0.0
  %2642 = vmatpush1.msra.mxu0 0.0
  %2643 = vmatprep.subr.mxu0 0.0
  %2644 = vmatpush1.msra.mxu0 0.0
  %2645 = vmatprep.subr.mxu0 0.0
  %2646 = vmatpush1.msra.mxu0 0.0
  %2647 = vmatprep.subr.mxu0 0.0
  %2648 = vmatpush1.msra.mxu0 0.0
  %2649 = vmatprep.subr.mxu0 0.0
  %2650 = vmatpush1.msra.mxu0 0.0
  %2651 = vmatprep.subr.mxu0 0.0
  %2652 = vmatpush1.msra.mxu0 0.0
  %2653 = vmatprep.subr.mxu0 0.0
  %2654 = vmatpush1.msra.mxu0 0.0
  %2655 = vmatprep.subr.mxu0 0.0
  %2656 = vmatpush1.msra.mxu0 0.0
  %2657 = vmatprep.subr.mxu0 0.0
  %2658 = vmatpush1.msra.mxu0 0.0
  %2659 = vmatprep.subr.mxu0 0.0
  %2660 = vmatpush1.msra.mxu0 0.0
  %2661 = vmatprep.subr.mxu0 0.0
  %2662 = vmatpush1.msra.mxu0 0.0
  %2663 = vmatprep.subr.mxu0 0.0
  %2664 = vmatpush1.msra.mxu0 0.0
  %2665 = vmatprep.mubr.f32.mxu0 0.0
  %2666 = vmatmul.mubr.f32.gmra.mrb[0].mxu0 %v2436
  %v2667 = vpop.f32.mrb[0].mxu0
  %v2668 = vadd.f32 %v86, %v2667
  %v2669 = vpop.f32.mrb[0].mxu0
  %v2670 = vadd.f32 %v90, %v2669
  %2671 = vdwg.mxu0
  %2672 = vmatprep.subr.mxu0 0.0
  %2673 = vmatpush1.msra.mxu0 %v46
  %2674 = vmatprep.subr.mxu0 0.0
  %2675 = vmatpush1.msra.mxu0 %v49
  %2676 = vmatprep.subr.mxu0 0.0
  %2677 = vmatpush1.msra.mxu0 %v52
  %2678 = vmatprep.subr.mxu0 0.0
  %2679 = vmatpush1.msra.mxu0 %v55
  %2680 = vmatprep.subr.mxu0 0.0
  %2681 = vmatpush1.msra.mxu0 0.0
  %2682 = vmatprep.subr.mxu0 0.0
  %2683 = vmatpush1.msra.mxu0 0.0
  %2684 = vmatprep.subr.mxu0 0.0
  %2685 = vmatpush1.msra.mxu0 0.0
  %2686 = vmatprep.subr.mxu0 0.0
  %2687 = vmatpush1.msra.mxu0 0.0
  %2688 = vmatprep.subr.mxu0 0.0
  %2689 = vmatpush1.msra.mxu0 0.0
  %2690 = vmatprep.subr.mxu0 0.0
  %2691 = vmatpush1.msra.mxu0 0.0
  %2692 = vmatprep.subr.mxu0 0.0
  %2693 = vmatpush1.msra.mxu0 0.0
  %2694 = vmatprep.subr.mxu0 0.0
  %2695 = vmatpush1.msra.mxu0 0.0
  %2696 = vmatprep.subr.mxu0 0.0
  %2697 = vmatpush1.msra.mxu0 0.0
  %2698 = vmatprep.subr.mxu0 0.0
  %2699 = vmatpush1.msra.mxu0 0.0
  %2700 = vmatprep.subr.mxu0 0.0
  %2701 = vmatpush1.msra.mxu0 0.0
  %2702 = vmatprep.subr.mxu0 0.0
  %2703 = vmatpush1.msra.mxu0 0.0
  %2704 = vmatprep.subr.mxu0 0.0
  %2705 = vmatpush1.msra.mxu0 0.0
  %2706 = vmatprep.subr.mxu0 0.0
  %2707 = vmatpush1.msra.mxu0 0.0
  %2708 = vmatprep.subr.mxu0 0.0
  %2709 = vmatpush1.msra.mxu0 0.0
  %2710 = vmatprep.subr.mxu0 0.0
  %2711 = vmatpush1.msra.mxu0 0.0
  %2712 = vmatprep.subr.mxu0 0.0
  %2713 = vmatpush1.msra.mxu0 0.0
  %2714 = vmatprep.subr.mxu0 0.0
  %2715 = vmatpush1.msra.mxu0 0.0
  %2716 = vmatprep.subr.mxu0 0.0
  %2717 = vmatpush1.msra.mxu0 0.0
  %2718 = vmatprep.subr.mxu0 0.0
  %2719 = vmatpush1.msra.mxu0 0.0
  %2720 = vmatprep.subr.mxu0 0.0
  %2721 = vmatpush1.msra.mxu0 0.0
  %2722 = vmatprep.subr.mxu0 0.0
  %2723 = vmatpush1.msra.mxu0 0.0
  %2724 = vmatprep.subr.mxu0 0.0
  %2725 = vmatpush1.msra.mxu0 0.0
  %2726 = vmatprep.subr.mxu0 0.0
  %2727 = vmatpush1.msra.mxu0 0.0
  %2728 = vmatprep.subr.mxu0 0.0
  %2729 = vmatpush1.msra.mxu0 0.0
  %2730 = vmatprep.subr.mxu0 0.0
  %2731 = vmatpush1.msra.mxu0 0.0
  %2732 = vmatprep.subr.mxu0 0.0
  %2733 = vmatpush1.msra.mxu0 0.0
  %2734 = vmatprep.subr.mxu0 0.0
  %2735 = vmatpush1.msra.mxu0 0.0
  %2736 = vmatprep.mubr.f32.mxu0 0.0
  %2737 = vmatmul.mubr.f32.gmra.mrb[0].mxu0 %v2436
  %v2738 = vpop.f32.mrb[0].mxu0
  %v2739 = vadd.f32 %v94, %v2738
  %v2740 = vpop.f32.mrb[0].mxu0
  %2741 = vdwg.mxu0
  %v2743 = vsel %vm379, %v2434, 0
  %2745 = vmatprep.subr.mxu0 %v69
  %2746 = vmatpush1.msra.mxu0 %v68
  %2747 = vmatprep.subr.mxu0 %v72
  %2748 = vmatpush1.msra.mxu0 %v71
  %2749 = vmatprep.subr.mxu0 %v75
  %2750 = vmatpush1.msra.mxu0 %v74
  %2751 = vmatprep.subr.mxu0 %v78
  %2752 = vmatpush1.msra.mxu0 %v77
  %2753 = vmatprep.subr.mxu0 0.0
  %2754 = vmatpush1.msra.mxu0 0.0
  %2755 = vmatprep.subr.mxu0 0.0
  %2756 = vmatpush1.msra.mxu0 0.0
  %2757 = vmatprep.subr.mxu0 0.0
  %2758 = vmatpush1.msra.mxu0 0.0
  %2759 = vmatprep.subr.mxu0 0.0
  %2760 = vmatpush1.msra.mxu0 0.0
  %2761 = vmatprep.subr.mxu0 0.0
  %2762 = vmatpush1.msra.mxu0 0.0
  %2763 = vmatprep.subr.mxu0 0.0
  %2764 = vmatpush1.msra.mxu0 0.0
  %2765 = vmatprep.subr.mxu0 0.0
  %2766 = vmatpush1.msra.mxu0 0.0
  %2767 = vmatprep.subr.mxu0 0.0
  %2768 = vmatpush1.msra.mxu0 0.0
  %2769 = vmatprep.subr.mxu0 0.0
  %2770 = vmatpush1.msra.mxu0 0.0
  %2771 = vmatprep.subr.mxu0 0.0
  %2772 = vmatpush1.msra.mxu0 0.0
  %2773 = vmatprep.subr.mxu0 0.0
  %2774 = vmatpush1.msra.mxu0 0.0
  %2775 = vmatprep.subr.mxu0 0.0
  %2776 = vmatpush1.msra.mxu0 0.0
  %2777 = vmatprep.subr.mxu0 0.0
  %2778 = vmatpush1.msra.mxu0 0.0
  %2779 = vmatprep.subr.mxu0 0.0
  %2780 = vmatpush1.msra.mxu0 0.0
  %2781 = vmatprep.subr.mxu0 0.0
  %2782 = vmatpush1.msra.mxu0 0.0
  %2783 = vmatprep.subr.mxu0 0.0
  %2784 = vmatpush1.msra.mxu0 0.0
  %2785 = vmatprep.subr.mxu0 0.0
  %2786 = vmatpush1.msra.mxu0 0.0
  %2787 = vmatprep.subr.mxu0 0.0
  %2788 = vmatpush1.msra.mxu0 0.0
  %2789 = vmatprep.subr.mxu0 0.0
  %2790 = vmatpush1.msra.mxu0 0.0
  %2791 = vmatprep.subr.mxu0 0.0
  %2792 = vmatpush1.msra.mxu0 0.0
  %2793 = vmatprep.subr.mxu0 0.0
  %2794 = vmatpush1.msra.mxu0 0.0
  %2795 = vmatprep.subr.mxu0 0.0
  %2796 = vmatpush1.msra.mxu0 0.0
  %2797 = vmatprep.subr.mxu0 0.0
  %2798 = vmatpush1.msra.mxu0 0.0
  %2799 = vmatprep.subr.mxu0 0.0
  %2800 = vmatpush1.msra.mxu0 0.0
  %2801 = vmatprep.subr.mxu0 0.0
  %2802 = vmatpush1.msra.mxu0 0.0
  %2803 = vmatprep.subr.mxu0 0.0
  %2804 = vmatpush1.msra.mxu0 0.0
  %2805 = vmatprep.subr.mxu0 0.0
  %2806 = vmatpush1.msra.mxu0 0.0
  %2807 = vmatprep.subr.mxu0 0.0
  %2808 = vmatpush1.msra.mxu0 0.0
  %2809 = vmatprep.mubr.f32.mxu0 0.0
  %2810 = vmatmul.mubr.f32.gmra.mrb[0].mxu0 %v2743
  %v2811 = vpop.f32.mrb[0].mxu0
  %v2812 = vadd.f32 0.0, %v2811
  %v2813 = vpop.f32.mrb[0].mxu0
  %v2814 = vadd.f32 0.0, %v2813
  %2815 = vdwg.mxu0
  %2816 = vmatprep.subr.mxu0 0.0
  %2817 = vmatpush1.msra.mxu0 %v70
  %2818 = vmatprep.subr.mxu0 0.0
  %2819 = vmatpush1.msra.mxu0 %v73
  %2820 = vmatprep.subr.mxu0 0.0
  %2821 = vmatpush1.msra.mxu0 %v76
  %2822 = vmatprep.subr.mxu0 0.0
  %2823 = vmatpush1.msra.mxu0 %v79
  %2824 = vmatprep.subr.mxu0 0.0
  %2825 = vmatpush1.msra.mxu0 0.0
  %2826 = vmatprep.subr.mxu0 0.0
  %2827 = vmatpush1.msra.mxu0 0.0
  %2828 = vmatprep.subr.mxu0 0.0
  %2829 = vmatpush1.msra.mxu0 0.0
  %2830 = vmatprep.subr.mxu0 0.0
  %2831 = vmatpush1.msra.mxu0 0.0
  %2832 = vmatprep.subr.mxu0 0.0
  %2833 = vmatpush1.msra.mxu0 0.0
  %2834 = vmatprep.subr.mxu0 0.0
  %2835 = vmatpush1.msra.mxu0 0.0
  %2836 = vmatprep.subr.mxu0 0.0
  %2837 = vmatpush1.msra.mxu0 0.0
  %2838 = vmatprep.subr.mxu0 0.0
  %2839 = vmatpush1.msra.mxu0 0.0
  %2840 = vmatprep.subr.mxu0 0.0
  %2841 = vmatpush1.msra.mxu0 0.0
  %2842 = vmatprep.subr.mxu0 0.0
  %2843 = vmatpush1.msra.mxu0 0.0
  %2844 = vmatprep.subr.mxu0 0.0
  %2845 = vmatpush1.msra.mxu0 0.0
  %2846 = vmatprep.subr.mxu0 0.0
  %2847 = vmatpush1.msra.mxu0 0.0
  %2848 = vmatprep.subr.mxu0 0.0
  %2849 = vmatpush1.msra.mxu0 0.0
  %2850 = vmatprep.subr.mxu0 0.0
  %2851 = vmatpush1.msra.mxu0 0.0
  %2852 = vmatprep.subr.mxu0 0.0
  %2853 = vmatpush1.msra.mxu0 0.0
  %2854 = vmatprep.subr.mxu0 0.0
  %2855 = vmatpush1.msra.mxu0 0.0
  %2856 = vmatprep.subr.mxu0 0.0
  %2857 = vmatpush1.msra.mxu0 0.0
  %2858 = vmatprep.subr.mxu0 0.0
  %2859 = vmatpush1.msra.mxu0 0.0
  %2860 = vmatprep.subr.mxu0 0.0
  %2861 = vmatpush1.msra.mxu0 0.0
  %2862 = vmatprep.subr.mxu0 0.0
  %2863 = vmatpush1.msra.mxu0 0.0
  %2864 = vmatprep.subr.mxu0 0.0
  %2865 = vmatpush1.msra.mxu0 0.0
  %2866 = vmatprep.subr.mxu0 0.0
  %2867 = vmatpush1.msra.mxu0 0.0
  %2868 = vmatprep.subr.mxu0 0.0
  %2869 = vmatpush1.msra.mxu0 0.0
  %2870 = vmatprep.subr.mxu0 0.0
  %2871 = vmatpush1.msra.mxu0 0.0
  %2872 = vmatprep.subr.mxu0 0.0
  %2873 = vmatpush1.msra.mxu0 0.0
  %2874 = vmatprep.subr.mxu0 0.0
  %2875 = vmatpush1.msra.mxu0 0.0
  %2876 = vmatprep.subr.mxu0 0.0
  %2877 = vmatpush1.msra.mxu0 0.0
  %2878 = vmatprep.subr.mxu0 0.0
  %2879 = vmatpush1.msra.mxu0 0.0
  %2880 = vmatprep.mubr.f32.mxu0 0.0
  %2881 = vmatmul.mubr.f32.gmra.mrb[0].mxu0 %v2743
  %v2882 = vpop.f32.mrb[0].mxu0
  %v2883 = vadd.f32 0.0, %v2882
  %v2884 = vpop.f32.mrb[0].mxu0
  %2885 = vdwg.mxu0
  %v2886 = vadd.f32 %v2668, %v2812
  %v2887 = vxor.u32 %v2886, 2147483648
  %v2888 = vmul.f32 %v2887, 1.442695
  %v2889 = vpow.pop %v2888
  %v2890 = vadd.f32 %v2889, 1.0
  %v2891 = vrcp.pop %v2890
  %v2892 = vmul.f32 1.0, %v2891
  %v2893 = vadd.f32 %v2670, %v2814
  %v2894 = vxor.u32 %v2893, 2147483648
  %v2895 = vmul.f32 %v2894, 1.442695
  %v2896 = vpow.pop %v2895
  %v2897 = vadd.f32 %v2896, 1.0
  %v2898 = vrcp.pop %v2897
  %v2899 = vmul.f32 1.0, %v2898
  %v2900 = vadd.f32 %v2883, %v110
  %v2901 = vmul.f32 %v2892, %v2900
  %v2902 = vadd.f32 %v2739, %v2901
  %v2903 = vtanh.pop %v2902
  %v2904 = vsub.f32 1.0, %v2899
  %v2905 = vmul.f32 %v2904, %v2903
  %v2906 = vmul.f32 %v2899, %v2434
  %v2907 = vadd.f32 %v2905, %v2906
  %v2909 = vsel %vm379, %v2600, 0
  %2911 = vmatprep.subr.mxu0 %v57
  %2912 = vmatpush1.msra.mxu0 %v56
  %2913 = vmatprep.subr.mxu0 %v60
  %2914 = vmatpush1.msra.mxu0 %v59
  %2915 = vmatprep.subr.mxu0 %v63
  %2916 = vmatpush1.msra.mxu0 %v62
  %2917 = vmatprep.subr.mxu0 %v66
  %2918 = vmatpush1.msra.mxu0 %v65
  %2919 = vmatprep.subr.mxu0 0.0
  %2920 = vmatpush1.msra.mxu0 0.0
  %2921 = vmatprep.subr.mxu0 0.0
  %2922 = vmatpush1.msra.mxu0 0.0
  %2923 = vmatprep.subr.mxu0 0.0
  %2924 = vmatpush1.msra.mxu0 0.0
  %2925 = vmatprep.subr.mxu0 0.0
  %2926 = vmatpush1.msra.mxu0 0.0
  %2927 = vmatprep.subr.mxu0 0.0
  %2928 = vmatpush1.msra.mxu0 0.0
  %2929 = vmatprep.subr.mxu0 0.0
  %2930 = vmatpush1.msra.mxu0 0.0
  %2931 = vmatprep.subr.mxu0 0.0
  %2932 = vmatpush1.msra.mxu0 0.0
  %2933 = vmatprep.subr.mxu0 0.0
  %2934 = vmatpush1.msra.mxu0 0.0
  %2935 = vmatprep.subr.mxu0 0.0
  %2936 = vmatpush1.msra.mxu0 0.0
  %2937 = vmatprep.subr.mxu0 0.0
  %2938 = vmatpush1.msra.mxu0 0.0
  %2939 = vmatprep.subr.mxu0 0.0
  %2940 = vmatpush1.msra.mxu0 0.0
  %2941 = vmatprep.subr.mxu0 0.0
  %2942 = vmatpush1.msra.mxu0 0.0
  %2943 = vmatprep.subr.mxu0 0.0
  %2944 = vmatpush1.msra.mxu0 0.0
  %2945 = vmatprep.subr.mxu0 0.0
  %2946 = vmatpush1.msra.mxu0 0.0
  %2947 = vmatprep.subr.mxu0 0.0
  %2948 = vmatpush1.msra.mxu0 0.0
  %2949 = vmatprep.subr.mxu0 0.0
  %2950 = vmatpush1.msra.mxu0 0.0
  %2951 = vmatprep.subr.mxu0 0.0
  %2952 = vmatpush1.msra.mxu0 0.0
  %2953 = vmatprep.subr.mxu0 0.0
  %2954 = vmatpush1.msra.mxu0 0.0
  %2955 = vmatprep.subr.mxu0 0.0
  %2956 = vmatpush1.msra.mxu0 0.0
  %2957 = vmatprep.subr.mxu0 0.0
  %2958 = vmatpush1.msra.mxu0 0.0
  %2959 = vmatprep.subr.mxu0 0.0
  %2960 = vmatpush1.msra.mxu0 0.0
  %2961 = vmatprep.subr.mxu0 0.0
  %2962 = vmatpush1.msra.mxu0 0.0
  %2963 = vmatprep.subr.mxu0 0.0
  %2964 = vmatpush1.msra.mxu0 0.0
  %2965 = vmatprep.subr.mxu0 0.0
  %2966 = vmatpush1.msra.mxu0 0.0
  %2967 = vmatprep.subr.mxu0 0.0
  %2968 = vmatpush1.msra.mxu0 0.0
  %2969 = vmatprep.subr.mxu0 0.0
  %2970 = vmatpush1.msra.mxu0 0.0
  %2971 = vmatprep.subr.mxu0 0.0
  %2972 = vmatpush1.msra.mxu0 0.0
  %2973 = vmatprep.subr.mxu0 0.0
  %2974 = vmatpush1.msra.mxu0 0.0
  %2975 = vmatprep.mubr.f32.mxu0 0.0
  %2976 = vmatmul.mubr.f32.gmra.mrb[0].mxu0 %v2909
  %v2977 = vpop.f32.mrb[0].mxu0
  %v2978 = vadd.f32 0.0, %v2977
  %v2979 = vpop.f32.mrb[0].mxu0
  %v2980 = vadd.f32 0.0, %v2979
  %2981 = vdwg.mxu0
  %2982 = vmatprep.subr.mxu0 0.0
  %2983 = vmatpush1.msra.mxu0 %v58
  %2984 = vmatprep.subr.mxu0 0.0
  %2985 = vmatpush1.msra.mxu0 %v61
  %2986 = vmatprep.subr.mxu0 0.0
  %2987 = vmatpush1.msra.mxu0 %v64
  %2988 = vmatprep.subr.mxu0 0.0
  %2989 = vmatpush1.msra.mxu0 %v67
  %2990 = vmatprep.subr.mxu0 0.0
  %2991 = vmatpush1.msra.mxu0 0.0
  %2992 = vmatprep.subr.mxu0 0.0
  %2993 = vmatpush1.msra.mxu0 0.0
  %2994 = vmatprep.subr.mxu0 0.0
  %2995 = vmatpush1.msra.mxu0 0.0
  %2996 = vmatprep.subr.mxu0 0.0
  %2997 = vmatpush1.msra.mxu0 0.0
  %2998 = vmatprep.subr.mxu0 0.0
  %2999 = vmatpush1.msra.mxu0 0.0
  %3000 = vmatprep.subr.mxu0 0.0
  %3001 = vmatpush1.msra.mxu0 0.0
  %3002 = vmatprep.subr.mxu0 0.0
  %3003 = vmatpush1.msra.mxu0 0.0
  %3004 = vmatprep.subr.mxu0 0.0
  %3005 = vmatpush1.msra.mxu0 0.0
  %3006 = vmatprep.subr.mxu0 0.0
  %3007 = vmatpush1.msra.mxu0 0.0
  %3008 = vmatprep.subr.mxu0 0.0
  %3009 = vmatpush1.msra.mxu0 0.0
  %3010 = vmatprep.subr.mxu0 0.0
  %3011 = vmatpush1.msra.mxu0 0.0
  %3012 = vmatprep.subr.mxu0 0.0
  %3013 = vmatpush1.msra.mxu0 0.0
  %3014 = vmatprep.subr.mxu0 0.0
  %3015 = vmatpush1.msra.mxu0 0.0
  %3016 = vmatprep.subr.mxu0 0.0
  %3017 = vmatpush1.msra.mxu0 0.0
  %3018 = vmatprep.subr.mxu0 0.0
  %3019 = vmatpush1.msra.mxu0 0.0
  %3020 = vmatprep.subr.mxu0 0.0
  %3021 = vmatpush1.msra.mxu0 0.0
  %3022 = vmatprep.subr.mxu0 0.0
  %3023 = vmatpush1.msra.mxu0 0.0
  %3024 = vmatprep.subr.mxu0 0.0
  %3025 = vmatpush1.msra.mxu0 0.0
  %3026 = vmatprep.subr.mxu0 0.0
  %3027 = vmatpush1.msra.mxu0 0.0
  %3028 = vmatprep.subr.mxu0 0.0
  %3029 = vmatpush1.msra.mxu0 0.0
  %3030 = vmatprep.subr.mxu0 0.0
  %3031 = vmatpush1.msra.mxu0 0.0
  %3032 = vmatprep.subr.mxu0 0.0
  %3033 = vmatpush1.msra.mxu0 0.0
  %3034 = vmatprep.subr.mxu0 0.0
  %3035 = vmatpush1.msra.mxu0 0.0
  %3036 = vmatprep.subr.mxu0 0.0
  %3037 = vmatpush1.msra.mxu0 0.0
  %3038 = vmatprep.subr.mxu0 0.0
  %3039 = vmatpush1.msra.mxu0 0.0
  %3040 = vmatprep.subr.mxu0 0.0
  %3041 = vmatpush1.msra.mxu0 0.0
  %3042 = vmatprep.subr.mxu0 0.0
  %3043 = vmatpush1.msra.mxu0 0.0
  %3044 = vmatprep.subr.mxu0 0.0
  %3045 = vmatpush1.msra.mxu0 0.0
  %3046 = vmatprep.mubr.f32.mxu0 0.0
  %3047 = vmatmul.mubr.f32.gmra.mrb[0].mxu0 %v2909
  %v3048 = vpop.f32.mrb[0].mxu0
  %v3049 = vadd.f32 0.0, %v3048
  %v3050 = vpop.f32.mrb[0].mxu0
  %3051 = vdwg.mxu0
  %v3052 = vadd.f32 %v264, %v2978
  %v3053 = vxor.u32 %v3052, 2147483648
  %v3054 = vmul.f32 %v3053, 1.442695
  %v3055 = vpow.pop %v3054
  %v3056 = vadd.f32 %v3055, 1.0
  %v3057 = vrcp.pop %v3056
  %v3058 = vmul.f32 1.0, %v3057
  %v3059 = vadd.f32 %v266, %v2980
  %v3060 = vxor.u32 %v3059, 2147483648
  %v3061 = vmul.f32 %v3060, 1.442695
  %v3062 = vpow.pop %v3061
  %v3063 = vadd.f32 %v3062, 1.0
  %v3064 = vrcp.pop %v3063
  %v3065 = vmul.f32 1.0, %v3064
  %v3066 = vadd.f32 %v3049, %v103
  %v3067 = vmul.f32 %v3058, %v3066
  %v3068 = vadd.f32 %v371, %v3067
  %v3069 = vtanh.pop %v3068
  %v3070 = vsub.f32 1.0, %v3065
  %v3071 = vmul.f32 %v3070, %v3069
  %v3072 = vmul.f32 %v3065, %v2600
  %v3073 = vadd.f32 %v3071, %v3072
  %3074 = vmatprep.subr.mxu0 %v45
  %3075 = vmatpush1.msra.mxu0 %v44
  %3076 = vmatprep.subr.mxu0 %v48
  %3077 = vmatpush1.msra.mxu0 %v47
  %3078 = vmatprep.subr.mxu0 %v51
  %3079 = vmatpush1.msra.mxu0 %v50
  %3080 = vmatprep.subr.mxu0 %v54
  %3081 = vmatpush1.msra.mxu0 %v53
  %3082 = vmatprep.subr.mxu0 0.0
  %3083 = vmatpush1.msra.mxu0 0.0
  %3084 = vmatprep.subr.mxu0 0.0
  %3085 = vmatpush1.msra.mxu0 0.0
  %3086 = vmatprep.subr.mxu0 0.0
  %3087 = vmatpush1.msra.mxu0 0.0
  %3088 = vmatprep.subr.mxu0 0.0
  %3089 = vmatpush1.msra.mxu0 0.0
  %3090 = vmatprep.subr.mxu0 0.0
  %3091 = vmatpush1.msra.mxu0 0.0
  %3092 = vmatprep.subr.mxu0 0.0
  %3093 = vmatpush1.msra.mxu0 0.0
  %3094 = vmatprep.subr.mxu0 0.0
  %3095 = vmatpush1.msra.mxu0 0.0
  %3096 = vmatprep.subr.mxu0 0.0
  %3097 = vmatpush1.msra.mxu0 0.0
  %3098 = vmatprep.subr.mxu0 0.0
  %3099 = vmatpush1.msra.mxu0 0.0
  %3100 = vmatprep.subr.mxu0 0.0
  %3101 = vmatpush1.msra.mxu0 0.0
  %3102 = vmatprep.subr.mxu0 0.0
  %3103 = vmatpush1.msra.mxu0 0.0
  %3104 = vmatprep.subr.mxu0 0.0
  %3105 = vmatpush1.msra.mxu0 0.0
  %3106 = vmatprep.subr.mxu0 0.0
  %3107 = vmatpush1.msra.mxu0 0.0
  %3108 = vmatprep.subr.mxu0 0.0
  %3109 = vmatpush1.msra.mxu0 0.0
  %3110 = vmatprep.subr.mxu0 0.0
  %3111 = vmatpush1.msra.mxu0 0.0
  %3112 = vmatprep.subr.mxu0 0.0
  %3113 = vmatpush1.msra.mxu0 0.0
  %3114 = vmatprep.subr.mxu0 0.0
  %3115 = vmatpush1.msra.mxu0 0.0
  %3116 = vmatprep.subr.mxu0 0.0
  %3117 = vmatpush1.msra.mxu0 0.0
  %3118 = vmatprep.subr.mxu0 0.0
  %3119 = vmatpush1.msra.mxu0 0.0
  %3120 = vmatprep.subr.mxu0 0.0
  %3121 = vmatpush1.msra.mxu0 0.0
  %3122 = vmatprep.subr.mxu0 0.0
  %3123 = vmatpush1.msra.mxu0 0.0
  %3124 = vmatprep.subr.mxu0 0.0
  %3125 = vmatpush1.msra.mxu0 0.0
  %3126 = vmatprep.subr.mxu0 0.0
  %3127 = vmatpush1.msra.mxu0 0.0
  %3128 = vmatprep.subr.mxu0 0.0
  %3129 = vmatpush1.msra.mxu0 0.0
  %3130 = vmatprep.subr.mxu0 0.0
  %3131 = vmatpush1.msra.mxu0 0.0
  %3132 = vmatprep.subr.mxu0 0.0
  %3133 = vmatpush1.msra.mxu0 0.0
  %3134 = vmatprep.subr.mxu0 0.0
  %3135 = vmatpush1.msra.mxu0 0.0
  %3136 = vmatprep.subr.mxu0 0.0
  %3137 = vmatpush1.msra.mxu0 0.0
  %3138 = vmatprep.mubr.f32.mxu0 0.0
  %3139 = vmatmul.mubr.f32.gmra.mrb[0].mxu0 %v2909
  %v3140 = vpop.f32.mrb[0].mxu0
  %v3141 = vadd.f32 %v86, %v3140
  %v3142 = vpop.f32.mrb[0].mxu0
  %v3143 = vadd.f32 %v90, %v3142
  %3144 = vdwg.mxu0
  %3145 = vmatprep.subr.mxu0 0.0
  %3146 = vmatpush1.msra.mxu0 %v46
  %3147 = vmatprep.subr.mxu0 0.0
  %3148 = vmatpush1.msra.mxu0 %v49
  %3149 = vmatprep.subr.mxu0 0.0
  %3150 = vmatpush1.msra.mxu0 %v52
  %3151 = vmatprep.subr.mxu0 0.0
  %3152 = vmatpush1.msra.mxu0 %v55
  %3153 = vmatprep.subr.mxu0 0.0
  %3154 = vmatpush1.msra.mxu0 0.0
  %3155 = vmatprep.subr.mxu0 0.0
  %3156 = vmatpush1.msra.mxu0 0.0
  %3157 = vmatprep.subr.mxu0 0.0
  %3158 = vmatpush1.msra.mxu0 0.0
  %3159 = vmatprep.subr.mxu0 0.0
  %3160 = vmatpush1.msra.mxu0 0.0
  %3161 = vmatprep.subr.mxu0 0.0
  %3162 = vmatpush1.msra.mxu0 0.0
  %3163 = vmatprep.subr.mxu0 0.0
  %3164 = vmatpush1.msra.mxu0 0.0
  %3165 = vmatprep.subr.mxu0 0.0
  %3166 = vmatpush1.msra.mxu0 0.0
  %3167 = vmatprep.subr.mxu0 0.0
  %3168 = vmatpush1.msra.mxu0 0.0
  %3169 = vmatprep.subr.mxu0 0.0
  %3170 = vmatpush1.msra.mxu0 0.0
  %3171 = vmatprep.subr.mxu0 0.0
  %3172 = vmatpush1.msra.mxu0 0.0
  %3173 = vmatprep.subr.mxu0 0.0
  %3174 = vmatpush1.msra.mxu0 0.0
  %3175 = vmatprep.subr.mxu0 0.0
  %3176 = vmatpush1.msra.mxu0 0.0
  %3177 = vmatprep.subr.mxu0 0.0
  %3178 = vmatpush1.msra.mxu0 0.0
  %3179 = vmatprep.subr.mxu0 0.0
  %3180 = vmatpush1.msra.mxu0 0.0
  %3181 = vmatprep.subr.mxu0 0.0
  %3182 = vmatpush1.msra.mxu0 0.0
  %3183 = vmatprep.subr.mxu0 0.0
  %3184 = vmatpush1.msra.mxu0 0.0
  %3185 = vmatprep.subr.mxu0 0.0
  %3186 = vmatpush1.msra.mxu0 0.0
  %3187 = vmatprep.subr.mxu0 0.0
  %3188 = vmatpush1.msra.mxu0 0.0
  %3189 = vmatprep.subr.mxu0 0.0
  %3190 = vmatpush1.msra.mxu0 0.0
  %3191 = vmatprep.subr.mxu0 0.0
  %3192 = vmatpush1.msra.mxu0 0.0
  %3193 = vmatprep.subr.mxu0 0.0
  %3194 = vmatpush1.msra.mxu0 0.0
  %3195 = vmatprep.subr.mxu0 0.0
  %3196 = vmatpush1.msra.mxu0 0.0
  %3197 = vmatprep.subr.mxu0 0.0
  %3198 = vmatpush1.msra.mxu0 0.0
  %3199 = vmatprep.subr.mxu0 0.0
  %3200 = vmatpush1.msra.mxu0 0.0
  %3201 = vmatprep.subr.mxu0 0.0
  %3202 = vmatpush1.msra.mxu0 0.0
  %3203 = vmatprep.subr.mxu0 0.0
  %3204 = vmatpush1.msra.mxu0 0.0
  %3205 = vmatprep.subr.mxu0 0.0
  %3206 = vmatpush1.msra.mxu0 0.0
  %3207 = vmatprep.subr.mxu0 0.0
  %3208 = vmatpush1.msra.mxu0 0.0
  %3209 = vmatprep.mubr.f32.mxu0 0.0
  %3210 = vmatmul.mubr.f32.gmra.mrb[0].mxu0 %v2909
  %v3211 = vpop.f32.mrb[0].mxu0
  %v3212 = vadd.f32 %v94, %v3211
  %v3213 = vpop.f32.mrb[0].mxu0
  %3214 = vdwg.mxu0
  %v3216 = vsel %vm379, %v2907, 0
  %3218 = vmatprep.subr.mxu0 %v69
  %3219 = vmatpush1.msra.mxu0 %v68
  %3220 = vmatprep.subr.mxu0 %v72
  %3221 = vmatpush1.msra.mxu0 %v71
  %3222 = vmatprep.subr.mxu0 %v75
  %3223 = vmatpush1.msra.mxu0 %v74
  %3224 = vmatprep.subr.mxu0 %v78
  %3225 = vmatpush1.msra.mxu0 %v77
  %3226 = vmatprep.subr.mxu0 0.0
  %3227 = vmatpush1.msra.mxu0 0.0
  %3228 = vmatprep.subr.mxu0 0.0
  %3229 = vmatpush1.msra.mxu0 0.0
  %3230 = vmatprep.subr.mxu0 0.0
  %3231 = vmatpush1.msra.mxu0 0.0
  %3232 = vmatprep.subr.mxu0 0.0
  %3233 = vmatpush1.msra.mxu0 0.0
  %3234 = vmatprep.subr.mxu0 0.0
  %3235 = vmatpush1.msra.mxu0 0.0
  %3236 = vmatprep.subr.mxu0 0.0
  %3237 = vmatpush1.msra.mxu0 0.0
  %3238 = vmatprep.subr.mxu0 0.0
  %3239 = vmatpush1.msra.mxu0 0.0
  %3240 = vmatprep.subr.mxu0 0.0
  %3241 = vmatpush1.msra.mxu0 0.0
  %3242 = vmatprep.subr.mxu0 0.0
  %3243 = vmatpush1.msra.mxu0 0.0
  %3244 = vmatprep.subr.mxu0 0.0
  %3245 = vmatpush1.msra.mxu0 0.0
  %3246 = vmatprep.subr.mxu0 0.0
  %3247 = vmatpush1.msra.mxu0 0.0
  %3248 = vmatprep.subr.mxu0 0.0
  %3249 = vmatpush1.msra.mxu0 0.0
  %3250 = vmatprep.subr.mxu0 0.0
  %3251 = vmatpush1.msra.mxu0 0.0
  %3252 = vmatprep.subr.mxu0 0.0
  %3253 = vmatpush1.msra.mxu0 0.0
  %3254 = vmatprep.subr.mxu0 0.0
  %3255 = vmatpush1.msra.mxu0 0.0
  %3256 = vmatprep.subr.mxu0 0.0
  %3257 = vmatpush1.msra.mxu0 0.0
  %3258 = vmatprep.subr.mxu0 0.0
  %3259 = vmatpush1.msra.mxu0 0.0
  %3260 = vmatprep.subr.mxu0 0.0
  %3261 = vmatpush1.msra.mxu0 0.0
  %3262 = vmatprep.subr.mxu0 0.0
  %3263 = vmatpush1.msra.mxu0 0.0
  %3264 = vmatprep.subr.mxu0 0.0
  %3265 = vmatpush1.msra.mxu0 0.0
  %3266 = vmatprep.subr.mxu0 0.0
  %3267 = vmatpush1.msra.mxu0 0.0
  %3268 = vmatprep.subr.mxu0 0.0
  %3269 = vmatpush1.msra.mxu0 0.0
  %3270 = vmatprep.subr.mxu0 0.0
  %3271 = vmatpush1.msra.mxu0 0.0
  %3272 = vmatprep.subr.mxu0 0.0
  %3273 = vmatpush1.msra.mxu0 0.0
  %3274 = vmatprep.subr.mxu0 0.0
  %3275 = vmatpush1.msra.mxu0 0.0
  %3276 = vmatprep.subr.mxu0 0.0
  %3277 = vmatpush1.msra.mxu0 0.0
  %3278 = vmatprep.subr.mxu0 0.0
  %3279 = vmatpush1.msra.mxu0 0.0
  %3280 = vmatprep.subr.mxu0 0.0
  %3281 = vmatpush1.msra.mxu0 0.0
  %3282 = vmatprep.mubr.f32.mxu0 0.0
  %3283 = vmatmul.mubr.f32.gmra.mrb[0].mxu0 %v3216
  %v3284 = vpop.f32.mrb[0].mxu0
  %v3285 = vadd.f32 0.0, %v3284
  %v3286 = vpop.f32.mrb[0].mxu0
  %v3287 = vadd.f32 0.0, %v3286
  %3288 = vdwg.mxu0
  %3289 = vmatprep.subr.mxu0 0.0
  %3290 = vmatpush1.msra.mxu0 %v70
  %3291 = vmatprep.subr.mxu0 0.0
  %3292 = vmatpush1.msra.mxu0 %v73
  %3293 = vmatprep.subr.mxu0 0.0
  %3294 = vmatpush1.msra.mxu0 %v76
  %3295 = vmatprep.subr.mxu0 0.0
  %3296 = vmatpush1.msra.mxu0 %v79
  %3297 = vmatprep.subr.mxu0 0.0
  %3298 = vmatpush1.msra.mxu0 0.0
  %3299 = vmatprep.subr.mxu0 0.0
  %3300 = vmatpush1.msra.mxu0 0.0
  %3301 = vmatprep.subr.mxu0 0.0
  %3302 = vmatpush1.msra.mxu0 0.0
  %3303 = vmatprep.subr.mxu0 0.0
  %3304 = vmatpush1.msra.mxu0 0.0
  %3305 = vmatprep.subr.mxu0 0.0
  %3306 = vmatpush1.msra.mxu0 0.0
  %3307 = vmatprep.subr.mxu0 0.0
  %3308 = vmatpush1.msra.mxu0 0.0
  %3309 = vmatprep.subr.mxu0 0.0
  %3310 = vmatpush1.msra.mxu0 0.0
  %3311 = vmatprep.subr.mxu0 0.0
  %3312 = vmatpush1.msra.mxu0 0.0
  %3313 = vmatprep.subr.mxu0 0.0
  %3314 = vmatpush1.msra.mxu0 0.0
  %3315 = vmatprep.subr.mxu0 0.0
  %3316 = vmatpush1.msra.mxu0 0.0
  %3317 = vmatprep.subr.mxu0 0.0
  %3318 = vmatpush1.msra.mxu0 0.0
  %3319 = vmatprep.subr.mxu0 0.0
  %3320 = vmatpush1.msra.mxu0 0.0
  %3321 = vmatprep.subr.mxu0 0.0
  %3322 = vmatpush1.msra.mxu0 0.0
  %3323 = vmatprep.subr.mxu0 0.0
  %3324 = vmatpush1.msra.mxu0 0.0
  %3325 = vmatprep.subr.mxu0 0.0
  %3326 = vmatpush1.msra.mxu0 0.0
  %3327 = vmatprep.subr.mxu0 0.0
  %3328 = vmatpush1.msra.mxu0 0.0
  %3329 = vmatprep.subr.mxu0 0.0
  %3330 = vmatpush1.msra.mxu0 0.0
  %3331 = vmatprep.subr.mxu0 0.0
  %3332 = vmatpush1.msra.mxu0 0.0
  %3333 = vmatprep.subr.mxu0 0.0
  %3334 = vmatpush1.msra.mxu0 0.0
  %3335 = vmatprep.subr.mxu0 0.0
  %3336 = vmatpush1.msra.mxu0 0.0
  %3337 = vmatprep.subr.mxu0 0.0
  %3338 = vmatpush1.msra.mxu0 0.0
  %3339 = vmatprep.subr.mxu0 0.0
  %3340 = vmatpush1.msra.mxu0 0.0
  %3341 = vmatprep.subr.mxu0 0.0
  %3342 = vmatpush1.msra.mxu0 0.0
  %3343 = vmatprep.subr.mxu0 0.0
  %3344 = vmatpush1.msra.mxu0 0.0
  %3345 = vmatprep.subr.mxu0 0.0
  %3346 = vmatpush1.msra.mxu0 0.0
  %3347 = vmatprep.subr.mxu0 0.0
  %3348 = vmatpush1.msra.mxu0 0.0
  %3349 = vmatprep.subr.mxu0 0.0
  %3350 = vmatpush1.msra.mxu0 0.0
  %3351 = vmatprep.subr.mxu0 0.0
  %3352 = vmatpush1.msra.mxu0 0.0
  %3353 = vmatprep.mubr.f32.mxu0 0.0
  %3354 = vmatmul.mubr.f32.gmra.mrb[0].mxu0 %v3216
  %v3355 = vpop.f32.mrb[0].mxu0
  %v3356 = vadd.f32 0.0, %v3355
  %v3357 = vpop.f32.mrb[0].mxu0
  %3358 = vdwg.mxu0
  %v3359 = vadd.f32 %v3141, %v3285
  %v3360 = vxor.u32 %v3359, 2147483648
  %v3361 = vmul.f32 %v3360, 1.442695
  %v3362 = vpow.pop %v3361
  %v3363 = vadd.f32 %v3362, 1.0
  %v3364 = vrcp.pop %v3363
  %v3365 = vmul.f32 1.0, %v3364
  %v3366 = vadd.f32 %v3143, %v3287
  %v3367 = vxor.u32 %v3366, 2147483648
  %v3368 = vmul.f32 %v3367, 1.442695
  %v3369 = vpow.pop %v3368
  %v3370 = vadd.f32 %v3369, 1.0
  %v3371 = vrcp.pop %v3370
  %v3372 = vmul.f32 1.0, %v3371
  %v3373 = vadd.f32 %v3356, %v110
  %v3374 = vmul.f32 %v3365, %v3373
  %v3375 = vadd.f32 %v3212, %v3374
  %v3376 = vtanh.pop %v3375
  %v3377 = vsub.f32 1.0, %v3372
  %v3378 = vmul.f32 %v3377, %v3376
  %v3379 = vmul.f32 %v3372, %v2907
  %v3380 = vadd.f32 %v3378, %v3379
  %v3382 = vsel %vm379, %v3073, 0
  %3384 = vmatprep.subr.mxu0 %v57
  %3385 = vmatpush1.msra.mxu0 %v56
  %3386 = vmatprep.subr.mxu0 %v60
  %3387 = vmatpush1.msra.mxu0 %v59
  %3388 = vmatprep.subr.mxu0 %v63
  %3389 = vmatpush1.msra.mxu0 %v62
  %3390 = vmatprep.subr.mxu0 %v66
  %3391 = vmatpush1.msra.mxu0 %v65
  %3392 = vmatprep.subr.mxu0 0.0
  %3393 = vmatpush1.msra.mxu0 0.0
  %3394 = vmatprep.subr.mxu0 0.0
  %3395 = vmatpush1.msra.mxu0 0.0
  %3396 = vmatprep.subr.mxu0 0.0
  %3397 = vmatpush1.msra.mxu0 0.0
  %3398 = vmatprep.subr.mxu0 0.0
  %3399 = vmatpush1.msra.mxu0 0.0
  %3400 = vmatprep.subr.mxu0 0.0
  %3401 = vmatpush1.msra.mxu0 0.0
  %3402 = vmatprep.subr.mxu0 0.0
  %3403 = vmatpush1.msra.mxu0 0.0
  %3404 = vmatprep.subr.mxu0 0.0
  %3405 = vmatpush1.msra.mxu0 0.0
  %3406 = vmatprep.subr.mxu0 0.0
  %3407 = vmatpush1.msra.mxu0 0.0
  %3408 = vmatprep.subr.mxu0 0.0
  %3409 = vmatpush1.msra.mxu0 0.0
  %3410 = vmatprep.subr.mxu0 0.0
  %3411 = vmatpush1.msra.mxu0 0.0
  %3412 = vmatprep.subr.mxu0 0.0
  %3413 = vmatpush1.msra.mxu0 0.0
  %3414 = vmatprep.subr.mxu0 0.0
  %3415 = vmatpush1.msra.mxu0 0.0
  %3416 = vmatprep.subr.mxu0 0.0
  %3417 = vmatpush1.msra.mxu0 0.0
  %3418 = vmatprep.subr.mxu0 0.0
  %3419 = vmatpush1.msra.mxu0 0.0
  %3420 = vmatprep.subr.mxu0 0.0
  %3421 = vmatpush1.msra.mxu0 0.0
  %3422 = vmatprep.subr.mxu0 0.0
  %3423 = vmatpush1.msra.mxu0 0.0
  %3424 = vmatprep.subr.mxu0 0.0
  %3425 = vmatpush1.msra.mxu0 0.0
  %3426 = vmatprep.subr.mxu0 0.0
  %3427 = vmatpush1.msra.mxu0 0.0
  %3428 = vmatprep.subr.mxu0 0.0
  %3429 = vmatpush1.msra.mxu0 0.0
  %3430 = vmatprep.subr.mxu0 0.0
  %3431 = vmatpush1.msra.mxu0 0.0
  %3432 = vmatprep.subr.mxu0 0.0
  %3433 = vmatpush1.msra.mxu0 0.0
  %3434 = vmatprep.subr.mxu0 0.0
  %3435 = vmatpush1.msra.mxu0 0.0
  %3436 = vmatprep.subr.mxu0 0.0
  %3437 = vmatpush1.msra.mxu0 0.0
  %3438 = vmatprep.subr.mxu0 0.0
  %3439 = vmatpush1.msra.mxu0 0.0
  %3440 = vmatprep.subr.mxu0 0.0
  %3441 = vmatpush1.msra.mxu0 0.0
  %3442 = vmatprep.subr.mxu0 0.0
  %3443 = vmatpush1.msra.mxu0 0.0
  %3444 = vmatprep.subr.mxu0 0.0
  %3445 = vmatpush1.msra.mxu0 0.0
  %3446 = vmatprep.subr.mxu0 0.0
  %3447 = vmatpush1.msra.mxu0 0.0
  %3448 = vmatprep.mubr.f32.mxu0 0.0
  %3449 = vmatmul.mubr.f32.gmra.mrb[0].mxu0 %v3382
  %v3450 = vpop.f32.mrb[0].mxu0
  %v3451 = vadd.f32 0.0, %v3450
  %v3452 = vpop.f32.mrb[0].mxu0
  %v3453 = vadd.f32 0.0, %v3452
  %3454 = vdwg.mxu0
  %3455 = vmatprep.subr.mxu0 0.0
  %3456 = vmatpush1.msra.mxu0 %v58
  %3457 = vmatprep.subr.mxu0 0.0
  %3458 = vmatpush1.msra.mxu0 %v61
  %3459 = vmatprep.subr.mxu0 0.0
  %3460 = vmatpush1.msra.mxu0 %v64
  %3461 = vmatprep.subr.mxu0 0.0
  %3462 = vmatpush1.msra.mxu0 %v67
  %3463 = vmatprep.subr.mxu0 0.0
  %3464 = vmatpush1.msra.mxu0 0.0
  %3465 = vmatprep.subr.mxu0 0.0
  %3466 = vmatpush1.msra.mxu0 0.0
  %3467 = vmatprep.subr.mxu0 0.0
  %3468 = vmatpush1.msra.mxu0 0.0
  %3469 = vmatprep.subr.mxu0 0.0
  %3470 = vmatpush1.msra.mxu0 0.0
  %3471 = vmatprep.subr.mxu0 0.0
  %3472 = vmatpush1.msra.mxu0 0.0
  %3473 = vmatprep.subr.mxu0 0.0
  %3474 = vmatpush1.msra.mxu0 0.0
  %3475 = vmatprep.subr.mxu0 0.0
  %3476 = vmatpush1.msra.mxu0 0.0
  %3477 = vmatprep.subr.mxu0 0.0
  %3478 = vmatpush1.msra.mxu0 0.0
  %3479 = vmatprep.subr.mxu0 0.0
  %3480 = vmatpush1.msra.mxu0 0.0
  %3481 = vmatprep.subr.mxu0 0.0
  %3482 = vmatpush1.msra.mxu0 0.0
  %3483 = vmatprep.subr.mxu0 0.0
  %3484 = vmatpush1.msra.mxu0 0.0
  %3485 = vmatprep.subr.mxu0 0.0
  %3486 = vmatpush1.msra.mxu0 0.0
  %3487 = vmatprep.subr.mxu0 0.0
  %3488 = vmatpush1.msra.mxu0 0.0
  %3489 = vmatprep.subr.mxu0 0.0
  %3490 = vmatpush1.msra.mxu0 0.0
  %3491 = vmatprep.subr.mxu0 0.0
  %3492 = vmatpush1.msra.mxu0 0.0
  %3493 = vmatprep.subr.mxu0 0.0
  %3494 = vmatpush1.msra.mxu0 0.0
  %3495 = vmatprep.subr.mxu0 0.0
  %3496 = vmatpush1.msra.mxu0 0.0
  %3497 = vmatprep.subr.mxu0 0.0
  %3498 = vmatpush1.msra.mxu0 0.0
  %3499 = vmatprep.subr.mxu0 0.0
  %3500 = vmatpush1.msra.mxu0 0.0
  %3501 = vmatprep.subr.mxu0 0.0
  %3502 = vmatpush1.msra.mxu0 0.0
  %3503 = vmatprep.subr.mxu0 0.0
  %3504 = vmatpush1.msra.mxu0 0.0
  %3505 = vmatprep.subr.mxu0 0.0
  %3506 = vmatpush1.msra.mxu0 0.0
  %3507 = vmatprep.subr.mxu0 0.0
  %3508 = vmatpush1.msra.mxu0 0.0
  %3509 = vmatprep.subr.mxu0 0.0
  %3510 = vmatpush1.msra.mxu0 0.0
  %3511 = vmatprep.subr.mxu0 0.0
  %3512 = vmatpush1.msra.mxu0 0.0
  %3513 = vmatprep.subr.mxu0 0.0
  %3514 = vmatpush1.msra.mxu0 0.0
  %3515 = vmatprep.subr.mxu0 0.0
  %3516 = vmatpush1.msra.mxu0 0.0
  %3517 = vmatprep.subr.mxu0 0.0
  %3518 = vmatpush1.msra.mxu0 0.0
  %3519 = vmatprep.mubr.f32.mxu0 0.0
  %3520 = vmatmul.mubr.f32.gmra.mrb[0].mxu0 %v3382
  %v3521 = vpop.f32.mrb[0].mxu0
  %v3522 = vadd.f32 0.0, %v3521
  %v3523 = vpop.f32.mrb[0].mxu0
  %3524 = vdwg.mxu0
  %v3525 = vadd.f32 %v270, %v3451
  %v3526 = vxor.u32 %v3525, 2147483648
  %v3527 = vmul.f32 %v3526, 1.442695
  %v3528 = vpow.pop %v3527
  %v3529 = vadd.f32 %v3528, 1.0
  %v3530 = vrcp.pop %v3529
  %v3531 = vmul.f32 1.0, %v3530
  %v3532 = vadd.f32 %v272, %v3453
  %v3533 = vxor.u32 %v3532, 2147483648
  %v3534 = vmul.f32 %v3533, 1.442695
  %v3535 = vpow.pop %v3534
  %v3536 = vadd.f32 %v3535, 1.0
  %v3537 = vrcp.pop %v3536
  %v3538 = vmul.f32 1.0, %v3537
  %v3539 = vadd.f32 %v3522, %v103
  %v3540 = vmul.f32 %v3531, %v3539
  %v3541 = vadd.f32 %v376, %v3540
  %v3542 = vtanh.pop %v3541
  %v3543 = vsub.f32 1.0, %v3538
  %v3544 = vmul.f32 %v3543, %v3542
  %v3545 = vmul.f32 %v3538, %v3073
  %v3546 = vadd.f32 %v3544, %v3545
  %3547 = vmatprep.subr.mxu0 %v45
  %3548 = vmatpush1.msra.mxu0 %v44
  %3549 = vmatprep.subr.mxu0 %v48
  %3550 = vmatpush1.msra.mxu0 %v47
  %3551 = vmatprep.subr.mxu0 %v51
  %3552 = vmatpush1.msra.mxu0 %v50
  %3553 = vmatprep.subr.mxu0 %v54
  %3554 = vmatpush1.msra.mxu0 %v53
  %3555 = vmatprep.subr.mxu0 0.0
  %3556 = vmatpush1.msra.mxu0 0.0
  %3557 = vmatprep.subr.mxu0 0.0
  %3558 = vmatpush1.msra.mxu0 0.0
  %3559 = vmatprep.subr.mxu0 0.0
  %3560 = vmatpush1.msra.mxu0 0.0
  %3561 = vmatprep.subr.mxu0 0.0
  %3562 = vmatpush1.msra.mxu0 0.0
  %3563 = vmatprep.subr.mxu0 0.0
  %3564 = vmatpush1.msra.mxu0 0.0
  %3565 = vmatprep.subr.mxu0 0.0
  %3566 = vmatpush1.msra.mxu0 0.0
  %3567 = vmatprep.subr.mxu0 0.0
  %3568 = vmatpush1.msra.mxu0 0.0
  %3569 = vmatprep.subr.mxu0 0.0
  %3570 = vmatpush1.msra.mxu0 0.0
  %3571 = vmatprep.subr.mxu0 0.0
  %3572 = vmatpush1.msra.mxu0 0.0
  %3573 = vmatprep.subr.mxu0 0.0
  %3574 = vmatpush1.msra.mxu0 0.0
  %3575 = vmatprep.subr.mxu0 0.0
  %3576 = vmatpush1.msra.mxu0 0.0
  %3577 = vmatprep.subr.mxu0 0.0
  %3578 = vmatpush1.msra.mxu0 0.0
  %3579 = vmatprep.subr.mxu0 0.0
  %3580 = vmatpush1.msra.mxu0 0.0
  %3581 = vmatprep.subr.mxu0 0.0
  %3582 = vmatpush1.msra.mxu0 0.0
  %3583 = vmatprep.subr.mxu0 0.0
  %3584 = vmatpush1.msra.mxu0 0.0
  %3585 = vmatprep.subr.mxu0 0.0
  %3586 = vmatpush1.msra.mxu0 0.0
  %3587 = vmatprep.subr.mxu0 0.0
  %3588 = vmatpush1.msra.mxu0 0.0
  %3589 = vmatprep.subr.mxu0 0.0
  %3590 = vmatpush1.msra.mxu0 0.0
  %3591 = vmatprep.subr.mxu0 0.0
  %3592 = vmatpush1.msra.mxu0 0.0
  %3593 = vmatprep.subr.mxu0 0.0
  %3594 = vmatpush1.msra.mxu0 0.0
  %3595 = vmatprep.subr.mxu0 0.0
  %3596 = vmatpush1.msra.mxu0 0.0
  %3597 = vmatprep.subr.mxu0 0.0
  %3598 = vmatpush1.msra.mxu0 0.0
  %3599 = vmatprep.subr.mxu0 0.0
  %3600 = vmatpush1.msra.mxu0 0.0
  %3601 = vmatprep.subr.mxu0 0.0
  %3602 = vmatpush1.msra.mxu0 0.0
  %3603 = vmatprep.subr.mxu0 0.0
  %3604 = vmatpush1.msra.mxu0 0.0
  %3605 = vmatprep.subr.mxu0 0.0
  %3606 = vmatpush1.msra.mxu0 0.0
  %3607 = vmatprep.subr.mxu0 0.0
  %3608 = vmatpush1.msra.mxu0 0.0
  %3609 = vmatprep.subr.mxu0 0.0
  %3610 = vmatpush1.msra.mxu0 0.0
  %3611 = vmatprep.mubr.f32.mxu0 0.0
  %3612 = vmatmul.mubr.f32.gmra.mrb[0].mxu0 %v3382
  %v3613 = vpop.f32.mrb[0].mxu0
  %v3614 = vadd.f32 %v86, %v3613
  %v3615 = vpop.f32.mrb[0].mxu0
  %v3616 = vadd.f32 %v90, %v3615
  %3617 = vdwg.mxu0
  %3618 = vmatprep.subr.mxu0 0.0
  %3619 = vmatpush1.msra.mxu0 %v46
  %3620 = vmatprep.subr.mxu0 0.0
  %3621 = vmatpush1.msra.mxu0 %v49
  %3622 = vmatprep.subr.mxu0 0.0
  %3623 = vmatpush1.msra.mxu0 %v52
  %3624 = vmatprep.subr.mxu0 0.0
  %3625 = vmatpush1.msra.mxu0 %v55
  %3626 = vmatprep.subr.mxu0 0.0
  %3627 = vmatpush1.msra.mxu0 0.0
  %3628 = vmatprep.subr.mxu0 0.0
  %3629 = vmatpush1.msra.mxu0 0.0
  %3630 = vmatprep.subr.mxu0 0.0
  %3631 = vmatpush1.msra.mxu0 0.0
  %3632 = vmatprep.subr.mxu0 0.0
  %3633 = vmatpush1.msra.mxu0 0.0
  %3634 = vmatprep.subr.mxu0 0.0
  %3635 = vmatpush1.msra.mxu0 0.0
  %3636 = vmatprep.subr.mxu0 0.0
  %3637 = vmatpush1.msra.mxu0 0.0
  %3638 = vmatprep.subr.mxu0 0.0
  %3639 = vmatpush1.msra.mxu0 0.0
  %3640 = vmatprep.subr.mxu0 0.0
  %3641 = vmatpush1.msra.mxu0 0.0
  %3642 = vmatprep.subr.mxu0 0.0
  %3643 = vmatpush1.msra.mxu0 0.0
  %3644 = vmatprep.subr.mxu0 0.0
  %3645 = vmatpush1.msra.mxu0 0.0
  %3646 = vmatprep.subr.mxu0 0.0
  %3647 = vmatpush1.msra.mxu0 0.0
  %3648 = vmatprep.subr.mxu0 0.0
  %3649 = vmatpush1.msra.mxu0 0.0
  %3650 = vmatprep.subr.mxu0 0.0
  %3651 = vmatpush1.msra.mxu0 0.0
  %3652 = vmatprep.subr.mxu0 0.0
  %3653 = vmatpush1.msra.mxu0 0.0
  %3654 = vmatprep.subr.mxu0 0.0
  %3655 = vmatpush1.msra.mxu0 0.0
  %3656 = vmatprep.subr.mxu0 0.0
  %3657 = vmatpush1.msra.mxu0 0.0
  %3658 = vmatprep.subr.mxu0 0.0
  %3659 = vmatpush1.msra.mxu0 0.0
  %3660 = vmatprep.subr.mxu0 0.0
  %3661 = vmatpush1.msra.mxu0 0.0
  %3662 = vmatprep.subr.mxu0 0.0
  %3663 = vmatpush1.msra.mxu0 0.0
  %3664 = vmatprep.subr.mxu0 0.0
  %3665 = vmatpush1.msra.mxu0 0.0
  %3666 = vmatprep.subr.mxu0 0.0
  %3667 = vmatpush1.msra.mxu0 0.0
  %3668 = vmatprep.subr.mxu0 0.0
  %3669 = vmatpush1.msra.mxu0 0.0
  %3670 = vmatprep.subr.mxu0 0.0
  %3671 = vmatpush1.msra.mxu0 0.0
  %3672 = vmatprep.subr.mxu0 0.0
  %3673 = vmatpush1.msra.mxu0 0.0
  %3674 = vmatprep.subr.mxu0 0.0
  %3675 = vmatpush1.msra.mxu0 0.0
  %3676 = vmatprep.subr.mxu0 0.0
  %3677 = vmatpush1.msra.mxu0 0.0
  %3678 = vmatprep.subr.mxu0 0.0
  %3679 = vmatpush1.msra.mxu0 0.0
  %3680 = vmatprep.subr.mxu0 0.0
  %3681 = vmatpush1.msra.mxu0 0.0
  %3682 = vmatprep.mubr.f32.mxu0 0.0
  %3683 = vmatmul.mubr.f32.gmra.mrb[0].mxu0 %v3382
  %v3684 = vpop.f32.mrb[0].mxu0
  %v3685 = vadd.f32 %v94, %v3684
  %v3686 = vpop.f32.mrb[0].mxu0
  %3687 = vdwg.mxu0
  %v3689 = vsel %vm379, %v3380, 0
  %3691 = vmatprep.subr.mxu0 %v69
  %3692 = vmatpush1.msra.mxu0 %v68
  %3693 = vmatprep.subr.mxu0 %v72
  %3694 = vmatpush1.msra.mxu0 %v71
  %3695 = vmatprep.subr.mxu0 %v75
  %3696 = vmatpush1.msra.mxu0 %v74
  %3697 = vmatprep.subr.mxu0 %v78
  %3698 = vmatpush1.msra.mxu0 %v77
  %3699 = vmatprep.subr.mxu0 0.0
  %3700 = vmatpush1.msra.mxu0 0.0
  %3701 = vmatprep.subr.mxu0 0.0
  %3702 = vmatpush1.msra.mxu0 0.0
  %3703 = vmatprep.subr.mxu0 0.0
  %3704 = vmatpush1.msra.mxu0 0.0
  %3705 = vmatprep.subr.mxu0 0.0
  %3706 = vmatpush1.msra.mxu0 0.0
  %3707 = vmatprep.subr.mxu0 0.0
  %3708 = vmatpush1.msra.mxu0 0.0
  %3709 = vmatprep.subr.mxu0 0.0
  %3710 = vmatpush1.msra.mxu0 0.0
  %3711 = vmatprep.subr.mxu0 0.0
  %3712 = vmatpush1.msra.mxu0 0.0
  %3713 = vmatprep.subr.mxu0 0.0
  %3714 = vmatpush1.msra.mxu0 0.0
  %3715 = vmatprep.subr.mxu0 0.0
  %3716 = vmatpush1.msra.mxu0 0.0
  %3717 = vmatprep.subr.mxu0 0.0
  %3718 = vmatpush1.msra.mxu0 0.0
  %3719 = vmatprep.subr.mxu0 0.0
  %3720 = vmatpush1.msra.mxu0 0.0
  %3721 = vmatprep.subr.mxu0 0.0
  %3722 = vmatpush1.msra.mxu0 0.0
  %3723 = vmatprep.subr.mxu0 0.0
  %3724 = vmatpush1.msra.mxu0 0.0
  %3725 = vmatprep.subr.mxu0 0.0
  %3726 = vmatpush1.msra.mxu0 0.0
  %3727 = vmatprep.subr.mxu0 0.0
  %3728 = vmatpush1.msra.mxu0 0.0
  %3729 = vmatprep.subr.mxu0 0.0
  %3730 = vmatpush1.msra.mxu0 0.0
  %3731 = vmatprep.subr.mxu0 0.0
  %3732 = vmatpush1.msra.mxu0 0.0
  %3733 = vmatprep.subr.mxu0 0.0
  %3734 = vmatpush1.msra.mxu0 0.0
  %3735 = vmatprep.subr.mxu0 0.0
  %3736 = vmatpush1.msra.mxu0 0.0
  %3737 = vmatprep.subr.mxu0 0.0
  %3738 = vmatpush1.msra.mxu0 0.0
  %3739 = vmatprep.subr.mxu0 0.0
  %3740 = vmatpush1.msra.mxu0 0.0
  %3741 = vmatprep.subr.mxu0 0.0
  %3742 = vmatpush1.msra.mxu0 0.0
  %3743 = vmatprep.subr.mxu0 0.0
  %3744 = vmatpush1.msra.mxu0 0.0
  %3745 = vmatprep.subr.mxu0 0.0
  %3746 = vmatpush1.msra.mxu0 0.0
  %3747 = vmatprep.subr.mxu0 0.0
  %3748 = vmatpush1.msra.mxu0 0.0
  %3749 = vmatprep.subr.mxu0 0.0
  %3750 = vmatpush1.msra.mxu0 0.0
  %3751 = vmatprep.subr.mxu0 0.0
  %3752 = vmatpush1.msra.mxu0 0.0
  %3753 = vmatprep.subr.mxu0 0.0
  %3754 = vmatpush1.msra.mxu0 0.0
  %3755 = vmatprep.mubr.f32.mxu0 0.0
  %3756 = vmatmul.mubr.f32.gmra.mrb[0].mxu0 %v3689
  %v3757 = vpop.f32.mrb[0].mxu0
  %v3758 = vadd.f32 0.0, %v3757
  %v3759 = vpop.f32.mrb[0].mxu0
  %v3760 = vadd.f32 0.0, %v3759
  %3761 = vdwg.mxu0
  %3762 = vmatprep.subr.mxu0 0.0
  %3763 = vmatpush1.msra.mxu0 %v70
  %3764 = vmatprep.subr.mxu0 0.0
  %3765 = vmatpush1.msra.mxu0 %v73
  %3766 = vmatprep.subr.mxu0 0.0
  %3767 = vmatpush1.msra.mxu0 %v76
  %3768 = vmatprep.subr.mxu0 0.0
  %3769 = vmatpush1.msra.mxu0 %v79
  %3770 = vmatprep.subr.mxu0 0.0
  %3771 = vmatpush1.msra.mxu0 0.0
  %3772 = vmatprep.subr.mxu0 0.0
  %3773 = vmatpush1.msra.mxu0 0.0
  %3774 = vmatprep.subr.mxu0 0.0
  %3775 = vmatpush1.msra.mxu0 0.0
  %3776 = vmatprep.subr.mxu0 0.0
  %3777 = vmatpush1.msra.mxu0 0.0
  %3778 = vmatprep.subr.mxu0 0.0
  %3779 = vmatpush1.msra.mxu0 0.0
  %3780 = vmatprep.subr.mxu0 0.0
  %3781 = vmatpush1.msra.mxu0 0.0
  %3782 = vmatprep.subr.mxu0 0.0
  %3783 = vmatpush1.msra.mxu0 0.0
  %3784 = vmatprep.subr.mxu0 0.0
  %3785 = vmatpush1.msra.mxu0 0.0
  %3786 = vmatprep.subr.mxu0 0.0
  %3787 = vmatpush1.msra.mxu0 0.0
  %3788 = vmatprep.subr.mxu0 0.0
  %3789 = vmatpush1.msra.mxu0 0.0
  %3790 = vmatprep.subr.mxu0 0.0
  %3791 = vmatpush1.msra.mxu0 0.0
  %3792 = vmatprep.subr.mxu0 0.0
  %3793 = vmatpush1.msra.mxu0 0.0
  %3794 = vmatprep.subr.mxu0 0.0
  %3795 = vmatpush1.msra.mxu0 0.0
  %3796 = vmatprep.subr.mxu0 0.0
  %3797 = vmatpush1.msra.mxu0 0.0
  %3798 = vmatprep.subr.mxu0 0.0
  %3799 = vmatpush1.msra.mxu0 0.0
  %3800 = vmatprep.subr.mxu0 0.0
  %3801 = vmatpush1.msra.mxu0 0.0
  %3802 = vmatprep.subr.mxu0 0.0
  %3803 = vmatpush1.msra.mxu0 0.0
  %3804 = vmatprep.subr.mxu0 0.0
  %3805 = vmatpush1.msra.mxu0 0.0
  %3806 = vmatprep.subr.mxu0 0.0
  %3807 = vmatpush1.msra.mxu0 0.0
  %3808 = vmatprep.subr.mxu0 0.0
  %3809 = vmatpush1.msra.mxu0 0.0
  %3810 = vmatprep.subr.mxu0 0.0
  %3811 = vmatpush1.msra.mxu0 0.0
  %3812 = vmatprep.subr.mxu0 0.0
  %3813 = vmatpush1.msra.mxu0 0.0
  %3814 = vmatprep.subr.mxu0 0.0
  %3815 = vmatpush1.msra.mxu0 0.0
  %3816 = vmatprep.subr.mxu0 0.0
  %3817 = vmatpush1.msra.mxu0 0.0
  %3818 = vmatprep.subr.mxu0 0.0
  %3819 = vmatpush1.msra.mxu0 0.0
  %3820 = vmatprep.subr.mxu0 0.0
  %3821 = vmatpush1.msra.mxu0 0.0
  %3822 = vmatprep.subr.mxu0 0.0
  %3823 = vmatpush1.msra.mxu0 0.0
  %3824 = vmatprep.subr.mxu0 0.0
  %3825 = vmatpush1.msra.mxu0 0.0
  %3826 = vmatprep.mubr.f32.mxu0 0.0
  %3827 = vmatmul.mubr.f32.gmra.mrb[0].mxu0 %v3689
  %v3828 = vpop.f32.mrb[0].mxu0
  %v3829 = vadd.f32 0.0, %v3828
  %v3830 = vpop.f32.mrb[0].mxu0
  %3831 = vdwg.mxu0
  %v3832 = vadd.f32 %v3614, %v3758
  %v3833 = vxor.u32 %v3832, 2147483648
  %v3834 = vmul.f32 %v3833, 1.442695
  %v3835 = vpow.pop %v3834
  %v3836 = vadd.f32 %v3835, 1.0
  %v3837 = vrcp.pop %v3836
  %v3838 = vmul.f32 1.0, %v3837
  %v3839 = vadd.f32 %v3616, %v3760
  %v3840 = vxor.u32 %v3839, 2147483648
  %v3841 = vmul.f32 %v3840, 1.442695
  %v3842 = vpow.pop %v3841
  %v3843 = vadd.f32 %v3842, 1.0
  %v3844 = vrcp.pop %v3843
  %v3845 = vmul.f32 1.0, %v3844
  %v3846 = vadd.f32 %v3829, %v110
  %v3847 = vmul.f32 %v3838, %v3846
  %v3848 = vadd.f32 %v3685, %v3847
  %v3849 = vtanh.pop %v3848
  %v3850 = vsub.f32 1.0, %v3845
  %v3851 = vmul.f32 %v3850, %v3849
  %v3852 = vmul.f32 %v3845, %v3380
  %v3853 = vadd.f32 %v3851, %v3852
  %v3855 = vsel %vm379, %v3546, 0
  %3857 = vmatprep.subr.mxu0 %v45
  %3858 = vmatpush1.msra.mxu0 %v44
  %3859 = vmatprep.subr.mxu0 %v48
  %3860 = vmatpush1.msra.mxu0 %v47
  %3861 = vmatprep.subr.mxu0 %v51
  %3862 = vmatpush1.msra.mxu0 %v50
  %3863 = vmatprep.subr.mxu0 %v54
  %3864 = vmatpush1.msra.mxu0 %v53
  %3865 = vmatprep.subr.mxu0 0.0
  %3866 = vmatpush1.msra.mxu0 0.0
  %3867 = vmatprep.subr.mxu0 0.0
  %3868 = vmatpush1.msra.mxu0 0.0
  %3869 = vmatprep.subr.mxu0 0.0
  %3870 = vmatpush1.msra.mxu0 0.0
  %3871 = vmatprep.subr.mxu0 0.0
  %3872 = vmatpush1.msra.mxu0 0.0
  %3873 = vmatprep.subr.mxu0 0.0
  %3874 = vmatpush1.msra.mxu0 0.0
  %3875 = vmatprep.subr.mxu0 0.0
  %3876 = vmatpush1.msra.mxu0 0.0
  %3877 = vmatprep.subr.mxu0 0.0
  %3878 = vmatpush1.msra.mxu0 0.0
  %3879 = vmatprep.subr.mxu0 0.0
  %3880 = vmatpush1.msra.mxu0 0.0
  %3881 = vmatprep.subr.mxu0 0.0
  %3882 = vmatpush1.msra.mxu0 0.0
  %3883 = vmatprep.subr.mxu0 0.0
  %3884 = vmatpush1.msra.mxu0 0.0
  %3885 = vmatprep.subr.mxu0 0.0
  %3886 = vmatpush1.msra.mxu0 0.0
  %3887 = vmatprep.subr.mxu0 0.0
  %3888 = vmatpush1.msra.mxu0 0.0
  %3889 = vmatprep.subr.mxu0 0.0
  %3890 = vmatpush1.msra.mxu0 0.0
  %3891 = vmatprep.subr.mxu0 0.0
  %3892 = vmatpush1.msra.mxu0 0.0
  %3893 = vmatprep.subr.mxu0 0.0
  %3894 = vmatpush1.msra.mxu0 0.0
  %3895 = vmatprep.subr.mxu0 0.0
  %3896 = vmatpush1.msra.mxu0 0.0
  %3897 = vmatprep.subr.mxu0 0.0
  %3898 = vmatpush1.msra.mxu0 0.0
  %3899 = vmatprep.subr.mxu0 0.0
  %3900 = vmatpush1.msra.mxu0 0.0
  %3901 = vmatprep.subr.mxu0 0.0
  %3902 = vmatpush1.msra.mxu0 0.0
  %3903 = vmatprep.subr.mxu0 0.0
  %3904 = vmatpush1.msra.mxu0 0.0
  %3905 = vmatprep.subr.mxu0 0.0
  %3906 = vmatpush1.msra.mxu0 0.0
  %3907 = vmatprep.subr.mxu0 0.0
  %3908 = vmatpush1.msra.mxu0 0.0
  %3909 = vmatprep.subr.mxu0 0.0
  %3910 = vmatpush1.msra.mxu0 0.0
  %3911 = vmatprep.subr.mxu0 0.0
  %3912 = vmatpush1.msra.mxu0 0.0
  %3913 = vmatprep.subr.mxu0 0.0
  %3914 = vmatpush1.msra.mxu0 0.0
  %3915 = vmatprep.subr.mxu0 0.0
  %3916 = vmatpush1.msra.mxu0 0.0
  %3917 = vmatprep.subr.mxu0 0.0
  %3918 = vmatpush1.msra.mxu0 0.0
  %3919 = vmatprep.subr.mxu0 0.0
  %3920 = vmatpush1.msra.mxu0 0.0
  %3921 = vmatprep.mubr.f32.mxu0 0.0
  %3922 = vmatmul.mubr.f32.gmra.mrb[0].mxu0 %v3855
  %v3923 = vpop.f32.mrb[0].mxu0
  %v3924 = vadd.f32 %v86, %v3923
  %v3925 = vpop.f32.mrb[0].mxu0
  %v3926 = vadd.f32 %v90, %v3925
  %3927 = vdwg.mxu0
  %3928 = vmatprep.subr.mxu0 0.0
  %3929 = vmatpush1.msra.mxu0 %v46
  %3930 = vmatprep.subr.mxu0 0.0
  %3931 = vmatpush1.msra.mxu0 %v49
  %3932 = vmatprep.subr.mxu0 0.0
  %3933 = vmatpush1.msra.mxu0 %v52
  %3934 = vmatprep.subr.mxu0 0.0
  %3935 = vmatpush1.msra.mxu0 %v55
  %3936 = vmatprep.subr.mxu0 0.0
  %3937 = vmatpush1.msra.mxu0 0.0
  %3938 = vmatprep.subr.mxu0 0.0
  %3939 = vmatpush1.msra.mxu0 0.0
  %3940 = vmatprep.subr.mxu0 0.0
  %3941 = vmatpush1.msra.mxu0 0.0
  %3942 = vmatprep.subr.mxu0 0.0
  %3943 = vmatpush1.msra.mxu0 0.0
  %3944 = vmatprep.subr.mxu0 0.0
  %3945 = vmatpush1.msra.mxu0 0.0
  %3946 = vmatprep.subr.mxu0 0.0
  %3947 = vmatpush1.msra.mxu0 0.0
  %3948 = vmatprep.subr.mxu0 0.0
  %3949 = vmatpush1.msra.mxu0 0.0
  %3950 = vmatprep.subr.mxu0 0.0
  %3951 = vmatpush1.msra.mxu0 0.0
  %3952 = vmatprep.subr.mxu0 0.0
  %3953 = vmatpush1.msra.mxu0 0.0
  %3954 = vmatprep.subr.mxu0 0.0
  %3955 = vmatpush1.msra.mxu0 0.0
  %3956 = vmatprep.subr.mxu0 0.0
  %3957 = vmatpush1.msra.mxu0 0.0
  %3958 = vmatprep.subr.mxu0 0.0
  %3959 = vmatpush1.msra.mxu0 0.0
  %3960 = vmatprep.subr.mxu0 0.0
  %3961 = vmatpush1.msra.mxu0 0.0
  %3962 = vmatprep.subr.mxu0 0.0
  %3963 = vmatpush1.msra.mxu0 0.0
  %3964 = vmatprep.subr.mxu0 0.0
  %3965 = vmatpush1.msra.mxu0 0.0
  %3966 = vmatprep.subr.mxu0 0.0
  %3967 = vmatpush1.msra.mxu0 0.0
  %3968 = vmatprep.subr.mxu0 0.0
  %3969 = vmatpush1.msra.mxu0 0.0
  %3970 = vmatprep.subr.mxu0 0.0
  %3971 = vmatpush1.msra.mxu0 0.0
  %3972 = vmatprep.subr.mxu0 0.0
  %3973 = vmatpush1.msra.mxu0 0.0
  %3974 = vmatprep.subr.mxu0 0.0
  %3975 = vmatpush1.msra.mxu0 0.0
  %3976 = vmatprep.subr.mxu0 0.0
  %3977 = vmatpush1.msra.mxu0 0.0
  %3978 = vmatprep.subr.mxu0 0.0
  %3979 = vmatpush1.msra.mxu0 0.0
  %3980 = vmatprep.subr.mxu0 0.0
  %3981 = vmatpush1.msra.mxu0 0.0
  %3982 = vmatprep.subr.mxu0 0.0
  %3983 = vmatpush1.msra.mxu0 0.0
  %3984 = vmatprep.subr.mxu0 0.0
  %3985 = vmatpush1.msra.mxu0 0.0
  %3986 = vmatprep.subr.mxu0 0.0
  %3987 = vmatpush1.msra.mxu0 0.0
  %3988 = vmatprep.subr.mxu0 0.0
  %3989 = vmatpush1.msra.mxu0 0.0
  %3990 = vmatprep.subr.mxu0 0.0
  %3991 = vmatpush1.msra.mxu0 0.0
  %3992 = vmatprep.mubr.f32.mxu0 0.0
  %3993 = vmatmul.mubr.f32.gmra.mrb[0].mxu0 %v3855
  %v3994 = vpop.f32.mrb[0].mxu0
  %v3995 = vadd.f32 %v94, %v3994
  %v3996 = vpop.f32.mrb[0].mxu0
  %3997 = vdwg.mxu0
  %v3999 = vsel %vm379, %v3853, 0
  %4001 = vmatprep.subr.mxu0 %v69
  %4002 = vmatpush1.msra.mxu0 %v68
  %4003 = vmatprep.subr.mxu0 %v72
  %4004 = vmatpush1.msra.mxu0 %v71
  %4005 = vmatprep.subr.mxu0 %v75
  %4006 = vmatpush1.msra.mxu0 %v74
  %4007 = vmatprep.subr.mxu0 %v78
  %4008 = vmatpush1.msra.mxu0 %v77
  %4009 = vmatprep.subr.mxu0 0.0
  %4010 = vmatpush1.msra.mxu0 0.0
  %4011 = vmatprep.subr.mxu0 0.0
  %4012 = vmatpush1.msra.mxu0 0.0
  %4013 = vmatprep.subr.mxu0 0.0
  %4014 = vmatpush1.msra.mxu0 0.0
  %4015 = vmatprep.subr.mxu0 0.0
  %4016 = vmatpush1.msra.mxu0 0.0
  %4017 = vmatprep.subr.mxu0 0.0
  %4018 = vmatpush1.msra.mxu0 0.0
  %4019 = vmatprep.subr.mxu0 0.0
  %4020 = vmatpush1.msra.mxu0 0.0
  %4021 = vmatprep.subr.mxu0 0.0
  %4022 = vmatpush1.msra.mxu0 0.0
  %4023 = vmatprep.subr.mxu0 0.0
  %4024 = vmatpush1.msra.mxu0 0.0
  %4025 = vmatprep.subr.mxu0 0.0
  %4026 = vmatpush1.msra.mxu0 0.0
  %4027 = vmatprep.subr.mxu0 0.0
  %4028 = vmatpush1.msra.mxu0 0.0
  %4029 = vmatprep.subr.mxu0 0.0
  %4030 = vmatpush1.msra.mxu0 0.0
  %4031 = vmatprep.subr.mxu0 0.0
  %4032 = vmatpush1.msra.mxu0 0.0
  %4033 = vmatprep.subr.mxu0 0.0
  %4034 = vmatpush1.msra.mxu0 0.0
  %4035 = vmatprep.subr.mxu0 0.0
  %4036 = vmatpush1.msra.mxu0 0.0
  %4037 = vmatprep.subr.mxu0 0.0
  %4038 = vmatpush1.msra.mxu0 0.0
  %4039 = vmatprep.subr.mxu0 0.0
  %4040 = vmatpush1.msra.mxu0 0.0
  %4041 = vmatprep.subr.mxu0 0.0
  %4042 = vmatpush1.msra.mxu0 0.0
  %4043 = vmatprep.subr.mxu0 0.0
  %4044 = vmatpush1.msra.mxu0 0.0
  %4045 = vmatprep.subr.mxu0 0.0
  %4046 = vmatpush1.msra.mxu0 0.0
  %4047 = vmatprep.subr.mxu0 0.0
  %4048 = vmatpush1.msra.mxu0 0.0
  %4049 = vmatprep.subr.mxu0 0.0
  %4050 = vmatpush1.msra.mxu0 0.0
  %4051 = vmatprep.subr.mxu0 0.0
  %4052 = vmatpush1.msra.mxu0 0.0
  %4053 = vmatprep.subr.mxu0 0.0
  %4054 = vmatpush1.msra.mxu0 0.0
  %4055 = vmatprep.subr.mxu0 0.0
  %4056 = vmatpush1.msra.mxu0 0.0
  %4057 = vmatprep.subr.mxu0 0.0
  %4058 = vmatpush1.msra.mxu0 0.0
  %4059 = vmatprep.subr.mxu0 0.0
  %4060 = vmatpush1.msra.mxu0 0.0
  %4061 = vmatprep.subr.mxu0 0.0
  %4062 = vmatpush1.msra.mxu0 0.0
  %4063 = vmatprep.subr.mxu0 0.0
  %4064 = vmatpush1.msra.mxu0 0.0
  %4065 = vmatprep.mubr.f32.mxu0 0.0
  %4066 = vmatmul.mubr.f32.gmra.mrb[0].mxu0 %v3999
  %v4067 = vpop.f32.mrb[0].mxu0
  %v4068 = vadd.f32 0.0, %v4067
  %v4069 = vpop.f32.mrb[0].mxu0
  %v4070 = vadd.f32 0.0, %v4069
  %4071 = vdwg.mxu0
  %4072 = vmatprep.subr.mxu0 0.0
  %4073 = vmatpush1.msra.mxu0 %v70
  %4074 = vmatprep.subr.mxu0 0.0
  %4075 = vmatpush1.msra.mxu0 %v73
  %4076 = vmatprep.subr.mxu0 0.0
  %4077 = vmatpush1.msra.mxu0 %v76
  %4078 = vmatprep.subr.mxu0 0.0
  %4079 = vmatpush1.msra.mxu0 %v79
  %4080 = vmatprep.subr.mxu0 0.0
  %4081 = vmatpush1.msra.mxu0 0.0
  %4082 = vmatprep.subr.mxu0 0.0
  %4083 = vmatpush1.msra.mxu0 0.0
  %4084 = vmatprep.subr.mxu0 0.0
  %4085 = vmatpush1.msra.mxu0 0.0
  %4086 = vmatprep.subr.mxu0 0.0
  %4087 = vmatpush1.msra.mxu0 0.0
  %4088 = vmatprep.subr.mxu0 0.0
  %4089 = vmatpush1.msra.mxu0 0.0
  %4090 = vmatprep.subr.mxu0 0.0
  %4091 = vmatpush1.msra.mxu0 0.0
  %4092 = vmatprep.subr.mxu0 0.0
  %4093 = vmatpush1.msra.mxu0 0.0
  %4094 = vmatprep.subr.mxu0 0.0
  %4095 = vmatpush1.msra.mxu0 0.0
  %4096 = vmatprep.subr.mxu0 0.0
  %4097 = vmatpush1.msra.mxu0 0.0
  %4098 = vmatprep.subr.mxu0 0.0
  %4099 = vmatpush1.msra.mxu0 0.0
  %4100 = vmatprep.subr.mxu0 0.0
  %4101 = vmatpush1.msra.mxu0 0.0
  %4102 = vmatprep.subr.mxu0 0.0
  %4103 = vmatpush1.msra.mxu0 0.0
  %4104 = vmatprep.subr.mxu0 0.0
  %4105 = vmatpush1.msra.mxu0 0.0
  %4106 = vmatprep.subr.mxu0 0.0
  %4107 = vmatpush1.msra.mxu0 0.0
  %4108 = vmatprep.subr.mxu0 0.0
  %4109 = vmatpush1.msra.mxu0 0.0
  %4110 = vmatprep.subr.mxu0 0.0
  %4111 = vmatpush1.msra.mxu0 0.0
  %4112 = vmatprep.subr.mxu0 0.0
  %4113 = vmatpush1.msra.mxu0 0.0
  %4114 = vmatprep.subr.mxu0 0.0
  %4115 = vmatpush1.msra.mxu0 0.0
  %4116 = vmatprep.subr.mxu0 0.0
  %4117 = vmatpush1.msra.mxu0 0.0
  %4118 = vmatprep.subr.mxu0 0.0
  %4119 = vmatpush1.msra.mxu0 0.0
  %4120 = vmatprep.subr.mxu0 0.0
  %4121 = vmatpush1.msra.mxu0 0.0
  %4122 = vmatprep.subr.mxu0 0.0
  %4123 = vmatpush1.msra.mxu0 0.0
  %4124 = vmatprep.subr.mxu0 0.0
  %4125 = vmatpush1.msra.mxu0 0.0
  %4126 = vmatprep.subr.mxu0 0.0
  %4127 = vmatpush1.msra.mxu0 0.0
  %4128 = vmatprep.subr.mxu0 0.0
  %4129 = vmatpush1.msra.mxu0 0.0
  %4130 = vmatprep.subr.mxu0 0.0
  %4131 = vmatpush1.msra.mxu0 0.0
  %4132 = vmatprep.subr.mxu0 0.0
  %4133 = vmatpush1.msra.mxu0 0.0
  %4134 = vmatprep.subr.mxu0 0.0
  %4135 = vmatpush1.msra.mxu0 0.0
  %4136 = vmatprep.mubr.f32.mxu0 0.0
  %4137 = vmatmul.mubr.f32.gmra.mrb[0].mxu0 %v3999
  %v4138 = vpop.f32.mrb[0].mxu0
  %v4139 = vadd.f32 0.0, %v4138
  %v4140 = vpop.f32.mrb[0].mxu0
  %4141 = vdwg.mxu0
  %v4142 = vadd.f32 %v3924, %v4068
  %v4143 = vxor.u32 %v4142, 2147483648
  %v4144 = vmul.f32 %v4143, 1.442695
  %v4145 = vpow.pop %v4144
  %v4146 = vadd.f32 %v4145, 1.0
  %v4147 = vrcp.pop %v4146
  %v4148 = vmul.f32 1.0, %v4147
  %v4149 = vadd.f32 %v3926, %v4070
  %v4150 = vxor.u32 %v4149, 2147483648
  %v4151 = vmul.f32 %v4150, 1.442695
  %v4152 = vpow.pop %v4151
  %v4153 = vadd.f32 %v4152, 1.0
  %v4154 = vrcp.pop %v4153
  %v4155 = vmul.f32 1.0, %v4154
  %v4156 = vadd.f32 %v4139, %v110
  %v4157 = vmul.f32 %v4148, %v4156
  %v4158 = vadd.f32 %v3995, %v4157
  %v4159 = vtanh.pop %v4158
  %v4160 = vsub.f32 1.0, %v4155
  %v4161 = vmul.f32 %v4160, %v4159
  %v4162 = vmul.f32 %v4155, %v3853
  %v4163 = vadd.f32 %v4161, %v4162
  %v4164 = vld [vmem:[%s9] sm:$0xff]
  %v4165 = vld [vmem:[%s9 + $0x8] sm:$0xff]
  %v4166 = vld [vmem:[%s9 + $0x10] sm:$0xff]
  %v4167 = vld [vmem:[%s9 + $0x18] sm:$0xff]
  %v4168 = vld [vmem:[%s10] sm:$0x1]
  %v4170 = vlaneseq
  %v4171 = vshrl.u32 %v4170, 7
  %v4172 = vsub.s32 0, %v4171
  %v4173 = vrot.slane %v4168, %v4172
  %v4176 = vsel %vm379, %v4163, 0
  %4178 = vmatprep.subr.mxu0 0.0
  %4179 = vmatpush1.msra.mxu0 %v4164
  %4180 = vmatprep.subr.mxu0 0.0
  %4181 = vmatpush1.msra.mxu0 %v4165
  %4182 = vmatprep.subr.mxu0 0.0
  %4183 = vmatpush1.msra.mxu0 %v4166
  %4184 = vmatprep.subr.mxu0 0.0
  %4185 = vmatpush1.msra.mxu0 %v4167
  %4186 = vmatprep.subr.mxu0 0.0
  %4187 = vmatpush1.msra.mxu0 0.0
  %4188 = vmatprep.subr.mxu0 0.0
  %4189 = vmatpush1.msra.mxu0 0.0
  %4190 = vmatprep.subr.mxu0 0.0
  %4191 = vmatpush1.msra.mxu0 0.0
  %4192 = vmatprep.subr.mxu0 0.0
  %4193 = vmatpush1.msra.mxu0 0.0
  %4194 = vmatprep.subr.mxu0 0.0
  %4195 = vmatpush1.msra.mxu0 0.0
  %4196 = vmatprep.subr.mxu0 0.0
  %4197 = vmatpush1.msra.mxu0 0.0
  %4198 = vmatprep.subr.mxu0 0.0
  %4199 = vmatpush1.msra.mxu0 0.0
  %4200 = vmatprep.subr.mxu0 0.0
  %4201 = vmatpush1.msra.mxu0 0.0
  %4202 = vmatprep.subr.mxu0 0.0
  %4203 = vmatpush1.msra.mxu0 0.0
  %4204 = vmatprep.subr.mxu0 0.0
  %4205 = vmatpush1.msra.mxu0 0.0
  %4206 = vmatprep.subr.mxu0 0.0
  %4207 = vmatpush1.msra.mxu0 0.0
  %4208 = vmatprep.subr.mxu0 0.0
  %4209 = vmatpush1.msra.mxu0 0.0
  %4210 = vmatprep.subr.mxu0 0.0
  %4211 = vmatpush1.msra.mxu0 0.0
  %4212 = vmatprep.subr.mxu0 0.0
  %4213 = vmatpush1.msra.mxu0 0.0
  %4214 = vmatprep.subr.mxu0 0.0
  %4215 = vmatpush1.msra.mxu0 0.0
  %4216 = vmatprep.subr.mxu0 0.0
  %4217 = vmatpush1.msra.mxu0 0.0
  %4218 = vmatprep.subr.mxu0 0.0
  %4219 = vmatpush1.msra.mxu0 0.0
  %4220 = vmatprep.subr.mxu0 0.0
  %4221 = vmatpush1.msra.mxu0 0.0
  %4222 = vmatprep.subr.mxu0 0.0
  %4223 = vmatpush1.msra.mxu0 0.0
  %4224 = vmatprep.subr.mxu0 0.0
  %4225 = vmatpush1.msra.mxu0 0.0
  %4226 = vmatprep.subr.mxu0 0.0
  %4227 = vmatpush1.msra.mxu0 0.0
  %4228 = vmatprep.subr.mxu0 0.0
  %4229 = vmatpush1.msra.mxu0 0.0
  %4230 = vmatprep.subr.mxu0 0.0
  %4231 = vmatpush1.msra.mxu0 0.0
  %4232 = vmatprep.subr.mxu0 0.0
  %4233 = vmatpush1.msra.mxu0 0.0
  %4234 = vmatprep.subr.mxu0 0.0
  %4235 = vmatpush1.msra.mxu0 0.0
  %4236 = vmatprep.subr.mxu0 0.0
  %4237 = vmatpush1.msra.mxu0 0.0
  %4238 = vmatprep.subr.mxu0 0.0
  %4239 = vmatpush1.msra.mxu0 0.0
  %4240 = vmatprep.subr.mxu0 0.0
  %4241 = vmatpush1.msra.mxu0 0.0
  %4242 = vmatprep.mubr.f32.mxu0 0.0
  %4243 = vmatmul.mubr.f32.gmra.mrb[0].mxu0 %v4176
  %v4244 = vpop.f32.mrb[0].mxu0
  %v4245 = vadd.f32 %v4173, %v4244
  %v4246 = vpop.f32.mrb[0].mxu0
  %4247 = vdwg.mxu0
  %vm4248 = vcmask 80896
  %4249 = vst.msk [vmem:[%s11] sm:$0xff] %vm4248, %v4245
  // Predicated region
  $region46: #{gru_model_forward.1} parent=0 // pred_check
    _
  $region47: #{gru_model_forward.1} parent=0 // pred_check_branch
    %4251 = sbr.rel (0) target = $region49
  $region48: #{gru_model_forward.1} parent=0 // pred_region
    _
  $region49: #{gru_model_forward.1} parent=0 // pred_fallthru
    _
  // Predicated region
  $region50: #{gru_model_forward.1} parent=0 // pred_check
    _
  $region51: #{gru_model_forward.1} parent=0 // pred_check_branch
    %4253 = sbr.rel (0) target = $region53
  $region52: #{gru_model_forward.1} parent=0 // pred_region
    _
  $region53: #{gru_model_forward.1} parent=0 // pred_fallthru
    _

</llo_original>
